<compile_context>
chip_gen: v7x
topology: tpu7x:2x2x1
jax: 0.10.0
libtpu: 0.0.40
codegen_flags: <defaults>
</compile_context>

<pallas_src>
import math
from functools import partial

import jax
import jax.numpy as jnp
from jax import lax
from jax.experimental import pallas as pl
from jax.experimental.pallas import tpu as pltpu

DIM = 32      # embed_dim
HEADS = 4     # num_heads
SEQ = 8       # window_size == sequence length
BATCH = 2


# ------------------------- packed-parameter layout -------------------------
def _w_cols(dim):
    """Column offsets into the (dim, 10*dim) pre-transposed weight slab."""
    return {
        "q0": 0, "kv0": dim, "out0": 3 * dim,
        "q1": 4 * dim, "kv1": 5 * dim, "out1": 7 * dim,
        "f1": 8 * dim, "f2": 9 * dim,
    }


# Row indices into the (16, dim) vector slab (biases + LayerNorm params).
_V = {"bq0": 0, "bk0": 1, "bv0": 2, "bo0": 3,
      "bq1": 4, "bk1": 5, "bv1": 6, "bo1": 7,
      "bf1": 8, "bf2": 9,
      "ln0w": 10, "ln0b": 11, "ln1w": 12, "ln1b": 13, "ln2w": 14, "ln2b": 15}


def pack_params(params, dim):
    """Pre-transpose and concatenate all module parameters into two slabs."""
    w_in0, w_in1 = params["w_in0"], params["w_in1"]          # (3D, D)
    wmat = jnp.concatenate([
        w_in0[0:dim].T,              # q0   (D, D)
        w_in0[dim:3 * dim].T,        # kv0  (D, 2D)
        params["w_out0"].T,          # out0 (D, D)
        w_in1[0:dim].T,              # q1
        w_in1[dim:3 * dim].T,        # kv1
        params["w_out1"].T,          # out1
        params["ffn_w1"].T,          # f1
        params["ffn_w2"].T,          # f2
    ], axis=1).astype(jnp.float32)   # (D, 10*D)

    b_in0, b_in1 = params["b_in0"], params["b_in1"]          # (1, 3D)
    vec = jnp.concatenate([
        b_in0[:, 0:dim], b_in0[:, dim:2 * dim], b_in0[:, 2 * dim:3 * dim],
        params["b_out0"],
        b_in1[:, 0:dim], b_in1[:, dim:2 * dim], b_in1[:, 2 * dim:3 * dim],
        params["b_out1"],
        params["ffn_b1"], params["ffn_b2"],
        params["ln0_w"], params["ln0_b"],
        params["ln1_w"], params["ln1_b"],
        params["ln2_w"], params["ln2_b"],
    ], axis=0).astype(jnp.float32)   # (16, D)
    return wmat, vec


# ----------------------------- shared math -----------------------------
def _layer_norm(x, w, b, eps=1e-5):
    mu = jnp.mean(x, axis=-1, keepdims=True)
    xc = x - mu
    var = jnp.mean(xc * xc, axis=-1, keepdims=True)
    return xc * lax.rsqrt(var + eps) * w + b


# ------------------------------ Pallas kernel ------------------------------
def decoder_kernel(x_ref, enc_ref, w_ref, vec_ref, out_ref, *,
                   dim, heads, batch, seq):
    hd = dim // heads
    L = batch * seq
    scale = 1.0 / math.sqrt(hd)
    col = _w_cols(dim)

    x = x_ref[...]        # (L, D) -- batch folded into rows
    enc = enc_ref[...]    # (L, D)
    vec = vec_ref[...]    # (16, D)

    def vrow(name):       # (1, D) bias / LN row
        r = _V[name]
        return vec[r:r + 1, :]

    # Block-diagonal masks (built once; no integer division needed).
    ridx = lax.broadcasted_iota(jnp.int32, (L, L), 0)
    cidx = lax.broadcasted_iota(jnp.int32, (L, L), 1)
    diff_batch = jnp.zeros((L, L), jnp.bool_)
    for b in range(1, batch):
        t = b * seq
        diff_batch = jnp.logical_or(diff_batch, (ridx < t) != (cidx < t))
    self_mask = jnp.logical_or(diff_batch, cidx > ridx)   # causal + batch-block
    pen_self = jnp.where(self_mask, -1e30, 0.0)           # additive penalties
    pen_cross = jnp.where(diff_batch, -1e30, 0.0)

    def mha(q_src, kv_src, cq, ckv, cout, bq, bk, bv, bo, penalty):
        # In-projections (weights are pre-transposed: plain x @ W).
        q = jnp.dot(q_src, w_ref[:, cq:cq + dim],
                    preferred_element_type=jnp.float32) + vrow(bq)
        kv = jnp.dot(kv_src, w_ref[:, ckv:ckv + 2 * dim],
                     preferred_element_type=jnp.float32)
        k = kv[:, :dim] + vrow(bk)
        v = kv[:, dim:] + vrow(bv)

        # Head-batched attention: (H, L, hd).
        qh = jnp.stack([q[:, h * hd:(h + 1) * hd] for h in range(heads)], 0) * scale
        kh = jnp.stack([k[:, h * hd:(h + 1) * hd] for h in range(heads)], 0)
        vh = jnp.stack([v[:, h * hd:(h + 1) * hd] for h in range(heads)], 0)

        s = jnp.einsum("hqd,hkd->hqk", qh, kh,
                       preferred_element_type=jnp.float32)          # (H, L, L)
        s = s + penalty[None, :, :]
        m = jnp.max(s, axis=-1, keepdims=True)
        e = jnp.exp(s - m)
        p = e * pl.reciprocal(jnp.sum(e, axis=-1, keepdims=True), approx=True)
        oh = jnp.einsum("hqk,hkd->hqd", p, vh,
                        preferred_element_type=jnp.float32)          # (H, L, hd)

        # Merge heads and apply the single out-projection.
        o = jnp.concatenate([oh[h] for h in range(heads)], axis=-1)  # (L, D)
        return jnp.dot(o, w_ref[:, cout:cout + dim],
                       preferred_element_type=jnp.float32) + vrow(bo)

    # Masked self-attention + residual + LN[0]
    a0 = mha(x, x, col["q0"], col["kv0"], col["out0"],
             "bq0", "bk0", "bv0", "bo0", pen_self)
    y0 = _layer_norm(x + a0, vrow("ln0w"), vrow("ln0b"))

    # Cross-attention over encoder output + residual + LN[1]
    a1 = mha(y0, enc, col["q1"], col["kv1"], col["out1"],
             "bq1", "bk1", "bv1", "bo1", pen_cross)
    y1 = _layer_norm(a1 + y0, vrow("ln1w"), vrow("ln1b"))

    # FFN: Linear -> ReLU -> Linear (-> Dropout = identity), residual + LN[2]
    h = jnp.maximum(
        jnp.dot(y1, w_ref[:, col["f1"]:col["f1"] + dim],
                preferred_element_type=jnp.float32) + vrow("bf1"), 0.0)
    ff = jnp.dot(h, w_ref[:, col["f2"]:col["f2"] + dim],
                 preferred_element_type=jnp.float32) + vrow("bf2")
    y2 = _layer_norm(ff + y1, vrow("ln2w"), vrow("ln2b"))

    out_ref[...] = y2


# -------------------------------- wrapper --------------------------------
def decoder_forward(data_in, encoded, params, *, dim, heads):
    B, S, D = data_in.shape
    assert D == dim
    BS = B * S
    wmat, vec = pack_params(params, dim)

    x2 = data_in.reshape(BS, D).astype(jnp.float32)
    e2 = encoded.reshape(BS, D).astype(jnp.float32)

    kernel = partial(decoder_kernel, dim=dim, heads=heads, batch=B, seq=S)

    def full(shape):
        nd = len(shape)
        return pl.BlockSpec(shape, lambda i, _nd=nd: (0,) * _nd)

    out2 = pl.pallas_call(
        kernel,
        out_shape=jax.ShapeDtypeStruct((BS, D), jnp.float32),
        grid=(1,),
        in_specs=[full((BS, D)), full((BS, D)), full(wmat.shape), full(vec.shape)],
        out_specs=full((BS, D)),
        compiler_params=pltpu.CompilerParams(dimension_semantics=("arbitrary",)),
    )(x2, e2, wmat, vec)
    return out2.reshape(B, S, D)


# ------------------------- deterministic parameters -------------------------
def init_params(key, dim):
    keys = jax.random.split(key, 12)

    def w(k, shape, scale=0.1):
        return scale * jax.random.normal(k, shape, dtype=jnp.float32)

    return {
        "w_in0": w(keys[0], (3 * dim, dim)),
        "b_in0": w(keys[1], (1, 3 * dim), 0.02),
        "w_out0": w(keys[2], (dim, dim)),
        "b_out0": w(keys[3], (1, dim), 0.02),
        "w_in1": w(keys[4], (3 * dim, dim)),
        "b_in1": w(keys[5], (1, 3 * dim), 0.02),
        "w_out1": w(keys[6], (dim, dim)),
        "b_out1": w(keys[7], (1, dim), 0.02),
        "ffn_w1": w(keys[8], (dim, dim)),
        "ffn_b1": w(keys[9], (1, dim), 0.02),
        "ffn_w2": w(keys[10], (dim, dim)),
        "ffn_b2": w(keys[11], (1, dim), 0.02),
        "ln0_w": jnp.ones((1, dim), jnp.float32),
        "ln0_b": jnp.zeros((1, dim), jnp.float32),
        "ln1_w": jnp.ones((1, dim), jnp.float32),
        "ln1_b": jnp.zeros((1, dim), jnp.float32),
        "ln2_w": jnp.ones((1, dim), jnp.float32),
        "ln2_b": jnp.zeros((1, dim), jnp.float32),
    }


# ---------------------------- pure-JAX reference ----------------------------
def _ref_mha(q_in, kv_in, w_in, b_in, w_out, b_out, mask, dim, heads):
    hd = dim // heads
    wq, wk, wv = w_in[0:dim, :], w_in[dim:2 * dim, :], w_in[2 * dim:3 * dim, :]
    bq, bk, bv = b_in[:, 0:dim], b_in[:, dim:2 * dim], b_in[:, 2 * dim:3 * dim]
    q = q_in @ wq.T + bq
    k = kv_in @ wk.T + bk
    v = kv_in @ wv.T + bv
    scale = 1.0 / math.sqrt(hd)
    out = jnp.zeros((q_in.shape[0], dim), jnp.float32)
    for h in range(heads):
        qh = q[:, h * hd:(h + 1) * hd] * scale
        kh = k[:, h * hd:(h + 1) * hd]
        vh = v[:, h * hd:(h + 1) * hd]
        s = qh @ kh.T
        if mask is not None:
            s = jnp.where(mask, -1e30, s)
        p = jax.nn.softmax(s, axis=-1)
        out = out + (p @ vh) @ w_out[:, h * hd:(h + 1) * hd].T
    return out + b_out


def decoder_reference(data_in, encoded, params, *, dim, heads):
    S = data_in.shape[1]
    rows = lax.broadcasted_iota(jnp.int32, (S, S), 0)
    cols = lax.broadcasted_iota(jnp.int32, (S, S), 1)
    mask = cols > rows

    def one(x, enc):
        a0 = _ref_mha(x, x, params["w_in0"], params["b_in0"], params["w_out0"],
                      params["b_out0"], mask, dim, heads)
        y0 = _layer_norm(x + a0, params["ln0_w"], params["ln0_b"])
        a1 = _ref_mha(y0, enc, params["w_in1"], params["b_in1"], params["w_out1"],
                      params["b_out1"], None, dim, heads)
        y1 = _layer_norm(a1 + y0, params["ln1_w"], params["ln1_b"])
        h = jnp.maximum(y1 @ params["ffn_w1"].T + params["ffn_b1"], 0.0)
        ff = h @ params["ffn_w2"].T + params["ffn_b2"]
        return _layer_norm(ff + y1, params["ln2_w"], params["ln2_b"])

    return jax.vmap(one)(data_in, encoded)


if __name__ == "__main__":
    key = jax.random.PRNGKey(0)
    k1, k2, k3 = jax.random.split(key, 3)
    data_in = jax.random.normal(k1, (BATCH, SEQ, DIM), dtype=jnp.float32)
    encoded = jax.random.normal(k2, (BATCH, SEQ, DIM), dtype=jnp.float32)
    params = init_params(k3, DIM)

    out = decoder_forward(data_in, encoded, params, dim=DIM, heads=HEADS)
    out = jax.block_until_ready(out)

    ref = decoder_reference(data_in, encoded, params, dim=DIM, heads=HEADS)
    err = float(jnp.max(jnp.abs(out - ref)))
    assert err < 5e-2, f"kernel vs reference mismatch: max abs err = {err}"

    print("KERNEL_OK")
</pallas_src>

<mosaic_0001>
module attributes {stable_mosaic.version = 11 : i64} {
  func.func @decoder_kernel(%arg0: i32, %arg1: memref<16x32xf32, #tpu.memory_space<vmem>>, %arg2: memref<16x32xf32, #tpu.memory_space<vmem>>, %arg3: memref<32x320xf32, #tpu.memory_space<vmem>>, %arg4: memref<16x32xf32, #tpu.memory_space<vmem>>, %arg5: memref<16x32xf32, #tpu.memory_space<vmem>>) attributes {dimension_semantics = [#tpu.dimension_semantics<arbitrary>], iteration_bounds = array<i64: 1>, scalar_prefetch = 0 : i64, scratch_operands = 0 : i64, tpu.core_type = #tpu.core_type<tc>, window_params = [{pipeline_mode = #tpu.pipeline_mode<synchronous>, transform_indices = @transform_0, window_bounds = array<i64: 16, 32>}, {pipeline_mode = #tpu.pipeline_mode<synchronous>, transform_indices = @transform_1, window_bounds = array<i64: 16, 32>}, {pipeline_mode = #tpu.pipeline_mode<synchronous>, transform_indices = @transform_2, window_bounds = array<i64: 32, 320>}, {pipeline_mode = #tpu.pipeline_mode<synchronous>, transform_indices = @transform_3, window_bounds = array<i64: 16, 32>}, {pipeline_mode = #tpu.pipeline_mode<synchronous>, transform_indices = @transform_4, window_bounds = array<i64: 16, 32>}]} {
    %c0 = arith.constant 0 : index
    %c0_0 = arith.constant 0 : index
    %0 = vector.load %arg1[%c0, %c0_0] : memref<16x32xf32, #tpu.memory_space<vmem>>, vector<16x32xf32>
    %c0_1 = arith.constant 0 : index
    %c0_2 = arith.constant 0 : index
    %1 = vector.load %arg2[%c0_1, %c0_2] : memref<16x32xf32, #tpu.memory_space<vmem>>, vector<16x32xf32>
    %c0_3 = arith.constant 0 : index
    %c0_4 = arith.constant 0 : index
    %2 = vector.load %arg4[%c0_3, %c0_4] : memref<16x32xf32, #tpu.memory_space<vmem>>, vector<16x32xf32>
    %3 = tpu.iota {dimensions = array<i32: 0>} : vector<16x16xi32>
    %4 = tpu.iota {dimensions = array<i32: 1>} : vector<16x16xi32>
    %false = arith.constant false
    %5 = vector.broadcast %false : i1 to vector<16x16xi1>
    %c8_i32 = arith.constant 8 : i32
    %6 = vector.broadcast %c8_i32 : i32 to vector<16x16xi32>
    %7 = arith.cmpi slt, %3, %6 : vector<16x16xi32>
    %c8_i32_5 = arith.constant 8 : i32
    %8 = vector.broadcast %c8_i32_5 : i32 to vector<16x16xi32>
    %9 = arith.cmpi slt, %4, %8 : vector<16x16xi32>
    %10 = arith.xori %7, %9 : vector<16x16xi1>
    %11 = arith.ori %5, %10 : vector<16x16xi1>
    %12 = arith.cmpi sgt, %4, %3 : vector<16x16xi32>
    %13 = arith.ori %11, %12 : vector<16x16xi1>
    %cst = arith.constant -1.000000e+30 : f32
    %cst_6 = arith.constant 0.000000e+00 : f32
    %14 = vector.broadcast %cst : f32 to vector<16x16xf32>
    %15 = vector.broadcast %cst_6 : f32 to vector<16x16xf32>
    %16 = arith.select %13, %14, %15 : vector<16x16xi1>, vector<16x16xf32>
    %cst_7 = arith.constant -1.000000e+30 : f32
    %cst_8 = arith.constant 0.000000e+00 : f32
    %17 = vector.broadcast %cst_7 : f32 to vector<16x16xf32>
    %18 = vector.broadcast %cst_8 : f32 to vector<16x16xf32>
    %19 = arith.select %11, %17, %18 : vector<16x16xi1>, vector<16x16xf32>
    %c0_9 = arith.constant 0 : index
    %c0_10 = arith.constant 0 : index
    %20 = vector.load %arg3[%c0_9, %c0_10] : memref<32x320xf32, #tpu.memory_space<vmem>>, vector<32x32xf32>
    %cst_11 = arith.constant dense<0.000000e+00> : vector<16x32xf32>
    %21 = tpu.matmul %0, %20, %cst_11 {dimension_numbers = #tpu.dot_dimension_numbers<[1], [0], [0], [1], [0, 0, 1, 1], [], []>} : vector<16x32xf32>, vector<32x32xf32>, vector<16x32xf32> -> vector<16x32xf32>
    %22 = vector.extract_strided_slice %2 {offsets = [0, 0], sizes = [1, 32], strides = [1, 1]} : vector<16x32xf32> to vector<1x32xf32>
    %23 = vector.broadcast %22 : vector<1x32xf32> to vector<16x32xf32>
    %24 = arith.addf %21, %23 : vector<16x32xf32>
    %c0_12 = arith.constant 0 : index
    %c32 = arith.constant 32 : index
    %25 = vector.load %arg3[%c0_12, %c32] : memref<32x320xf32, #tpu.memory_space<vmem>>, vector<32x64xf32>
    %cst_13 = arith.constant dense<0.000000e+00> : vector<16x64xf32>
    %26 = tpu.matmul %0, %25, %cst_13 {dimension_numbers = #tpu.dot_dimension_numbers<[1], [0], [0], [1], [0, 0, 1, 1], [], []>} : vector<16x32xf32>, vector<32x64xf32>, vector<16x64xf32> -> vector<16x64xf32>
    %27 = vector.extract_strided_slice %26 {offsets = [0, 0], sizes = [16, 32], strides = [1, 1]} : vector<16x64xf32> to vector<16x32xf32>
    %28 = vector.extract_strided_slice %2 {offsets = [1, 0], sizes = [1, 32], strides = [1, 1]} : vector<16x32xf32> to vector<1x32xf32>
    %29 = vector.broadcast %28 : vector<1x32xf32> to vector<16x32xf32>
    %30 = arith.addf %27, %29 : vector<16x32xf32>
    %31 = vector.extract_strided_slice %26 {offsets = [0, 32], sizes = [16, 32], strides = [1, 1]} : vector<16x64xf32> to vector<16x32xf32>
    %32 = vector.extract_strided_slice %2 {offsets = [2, 0], sizes = [1, 32], strides = [1, 1]} : vector<16x32xf32> to vector<1x32xf32>
    %33 = vector.broadcast %32 : vector<1x32xf32> to vector<16x32xf32>
    %34 = arith.addf %31, %33 : vector<16x32xf32>
    %35 = vector.extract_strided_slice %24 {offsets = [0, 0], sizes = [16, 8], strides = [1, 1]} : vector<16x32xf32> to vector<16x8xf32>
    %36 = vector.extract_strided_slice %24 {offsets = [0, 8], sizes = [16, 8], strides = [1, 1]} : vector<16x32xf32> to vector<16x8xf32>
    %37 = vector.extract_strided_slice %24 {offsets = [0, 16], sizes = [16, 8], strides = [1, 1]} : vector<16x32xf32> to vector<16x8xf32>
    %38 = vector.extract_strided_slice %24 {offsets = [0, 24], sizes = [16, 8], strides = [1, 1]} : vector<16x32xf32> to vector<16x8xf32>
    %39 = vector.shape_cast %35 : vector<16x8xf32> to vector<1x16x8xf32>
    %40 = vector.shape_cast %36 : vector<16x8xf32> to vector<1x16x8xf32>
    %41 = vector.shape_cast %37 : vector<16x8xf32> to vector<1x16x8xf32>
    %42 = vector.shape_cast %38 : vector<16x8xf32> to vector<1x16x8xf32>
    %43 = tpu.concatenate %39, %40, %41, %42 in 0 : vector<1x16x8xf32>, vector<1x16x8xf32>, vector<1x16x8xf32>, vector<1x16x8xf32> -> vector<4x16x8xf32>
    %cst_14 = arith.constant 0.353553385 : f32
    %44 = vector.broadcast %cst_14 : f32 to vector<4x16x8xf32>
    %45 = arith.mulf %43, %44 : vector<4x16x8xf32>
    %46 = vector.extract_strided_slice %30 {offsets = [0, 0], sizes = [16, 8], strides = [1, 1]} : vector<16x32xf32> to vector<16x8xf32>
    %47 = vector.extract_strided_slice %30 {offsets = [0, 8], sizes = [16, 8], strides = [1, 1]} : vector<16x32xf32> to vector<16x8xf32>
    %48 = vector.extract_strided_slice %30 {offsets = [0, 16], sizes = [16, 8], strides = [1, 1]} : vector<16x32xf32> to vector<16x8xf32>
    %49 = vector.extract_strided_slice %30 {offsets = [0, 24], sizes = [16, 8], strides = [1, 1]} : vector<16x32xf32> to vector<16x8xf32>
    %50 = vector.shape_cast %46 : vector<16x8xf32> to vector<1x16x8xf32>
    %51 = vector.shape_cast %47 : vector<16x8xf32> to vector<1x16x8xf32>
    %52 = vector.shape_cast %48 : vector<16x8xf32> to vector<1x16x8xf32>
    %53 = vector.shape_cast %49 : vector<16x8xf32> to vector<1x16x8xf32>
    %54 = tpu.concatenate %50, %51, %52, %53 in 0 : vector<1x16x8xf32>, vector<1x16x8xf32>, vector<1x16x8xf32>, vector<1x16x8xf32> -> vector<4x16x8xf32>
    %55 = vector.extract_strided_slice %34 {offsets = [0, 0], sizes = [16, 8], strides = [1, 1]} : vector<16x32xf32> to vector<16x8xf32>
    %56 = vector.extract_strided_slice %34 {offsets = [0, 8], sizes = [16, 8], strides = [1, 1]} : vector<16x32xf32> to vector<16x8xf32>
    %57 = vector.extract_strided_slice %34 {offsets = [0, 16], sizes = [16, 8], strides = [1, 1]} : vector<16x32xf32> to vector<16x8xf32>
    %58 = vector.extract_strided_slice %34 {offsets = [0, 24], sizes = [16, 8], strides = [1, 1]} : vector<16x32xf32> to vector<16x8xf32>
    %59 = vector.shape_cast %55 : vector<16x8xf32> to vector<1x16x8xf32>
    %60 = vector.shape_cast %56 : vector<16x8xf32> to vector<1x16x8xf32>
    %61 = vector.shape_cast %57 : vector<16x8xf32> to vector<1x16x8xf32>
    %62 = vector.shape_cast %58 : vector<16x8xf32> to vector<1x16x8xf32>
    %63 = tpu.concatenate %59, %60, %61, %62 in 0 : vector<1x16x8xf32>, vector<1x16x8xf32>, vector<1x16x8xf32>, vector<1x16x8xf32> -> vector<4x16x8xf32>
    "tpu.trace_start"() <{level = 10 : i32, message = "hqd,hkd->hqk"}> : () -> ()
    %cst_15 = arith.constant dense<0.000000e+00> : vector<4x16x16xf32>
    %64 = tpu.matmul %45, %54, %cst_15 {dimension_numbers = #tpu.dot_dimension_numbers<[2], [2], [1], [1], [0, 0, 0, 1, 1, 1], [0], [0]>} : vector<4x16x8xf32>, vector<4x16x8xf32>, vector<4x16x16xf32> -> vector<4x16x16xf32>
    "tpu.trace_stop"() : () -> ()
    %65 = vector.shape_cast %16 : vector<16x16xf32> to vector<1x16x16xf32>
    %66 = vector.broadcast %65 : vector<1x16x16xf32> to vector<4x16x16xf32>
    %67 = arith.addf %64, %66 : vector<4x16x16xf32>
    %cst_16 = arith.constant dense<0xFF800000> : vector<4x16xf32>
    %68 = vector.multi_reduction <maximumf>, %67, %cst_16 [2] : vector<4x16x16xf32> to vector<4x16xf32>
    %69 = vector.shape_cast %68 : vector<4x16xf32> to vector<4x16x1xf32>
    %70 = vector.broadcast %69 : vector<4x16x1xf32> to vector<4x16x16xf32>
    %71 = arith.subf %67, %70 : vector<4x16x16xf32>
    %72 = math.exp %71 : vector<4x16x16xf32>
    %cst_17 = arith.constant dense<0.000000e+00> : vector<4x16xf32>
    %73 = vector.multi_reduction <add>, %72, %cst_17 [2] : vector<4x16x16xf32> to vector<4x16xf32>
    %74 = vector.shape_cast %73 : vector<4x16xf32> to vector<4x16x1xf32>
    %75 = tpu.reciprocal %74 {approx = true} : vector<4x16x1xf32> -> vector<4x16x1xf32>
    %76 = vector.broadcast %75 : vector<4x16x1xf32> to vector<4x16x16xf32>
    %77 = arith.mulf %72, %76 : vector<4x16x16xf32>
    "tpu.trace_start"() <{level = 10 : i32, message = "hqk,hkd->hqd"}> : () -> ()
    %cst_18 = arith.constant dense<0.000000e+00> : vector<4x16x8xf32>
    %78 = tpu.matmul %77, %63, %cst_18 {dimension_numbers = #tpu.dot_dimension_numbers<[2], [1], [1], [2], [0, 0, 0, 1, 1, 2], [0], [0]>} : vector<4x16x16xf32>, vector<4x16x8xf32>, vector<4x16x8xf32> -> vector<4x16x8xf32>
    "tpu.trace_stop"() : () -> ()
    %79 = vector.extract_strided_slice %78 {offsets = [0, 0, 0], sizes = [1, 16, 8], strides = [1, 1, 1]} : vector<4x16x8xf32> to vector<1x16x8xf32>
    %80 = vector.shape_cast %79 : vector<1x16x8xf32> to vector<16x8xf32>
    %81 = vector.extract_strided_slice %78 {offsets = [1, 0, 0], sizes = [1, 16, 8], strides = [1, 1, 1]} : vector<4x16x8xf32> to vector<1x16x8xf32>
    %82 = vector.shape_cast %81 : vector<1x16x8xf32> to vector<16x8xf32>
    %83 = vector.extract_strided_slice %78 {offsets = [2, 0, 0], sizes = [1, 16, 8], strides = [1, 1, 1]} : vector<4x16x8xf32> to vector<1x16x8xf32>
    %84 = vector.shape_cast %83 : vector<1x16x8xf32> to vector<16x8xf32>
    %85 = vector.extract_strided_slice %78 {offsets = [3, 0, 0], sizes = [1, 16, 8], strides = [1, 1, 1]} : vector<4x16x8xf32> to vector<1x16x8xf32>
    %86 = vector.shape_cast %85 : vector<1x16x8xf32> to vector<16x8xf32>
    %87 = tpu.concatenate %80, %82, %84, %86 in 1 : vector<16x8xf32>, vector<16x8xf32>, vector<16x8xf32>, vector<16x8xf32> -> vector<16x32xf32>
    %c0_19 = arith.constant 0 : index
    %c96 = arith.constant 96 : index
    %88 = vector.load %arg3[%c0_19, %c96] : memref<32x320xf32, #tpu.memory_space<vmem>>, vector<32x32xf32>
    %cst_20 = arith.constant dense<0.000000e+00> : vector<16x32xf32>
    %89 = tpu.matmul %87, %88, %cst_20 {dimension_numbers = #tpu.dot_dimension_numbers<[1], [0], [0], [1], [0, 0, 1, 1], [], []>} : vector<16x32xf32>, vector<32x32xf32>, vector<16x32xf32> -> vector<16x32xf32>
    %90 = vector.extract_strided_slice %2 {offsets = [3, 0], sizes = [1, 32], strides = [1, 1]} : vector<16x32xf32> to vector<1x32xf32>
    %91 = vector.broadcast %90 : vector<1x32xf32> to vector<16x32xf32>
    %92 = arith.addf %89, %91 : vector<16x32xf32>
    %93 = arith.addf %0, %92 : vector<16x32xf32>
    %94 = vector.extract_strided_slice %2 {offsets = [10, 0], sizes = [1, 32], strides = [1, 1]} : vector<16x32xf32> to vector<1x32xf32>
    %95 = vector.extract_strided_slice %2 {offsets = [11, 0], sizes = [1, 32], strides = [1, 1]} : vector<16x32xf32> to vector<1x32xf32>
    %cst_21 = arith.constant dense<0.000000e+00> : vector<16xf32>
    %96 = vector.multi_reduction <add>, %93, %cst_21 [1] : vector<16x32xf32> to vector<16xf32>
    %97 = vector.shape_cast %96 : vector<16xf32> to vector<16x1xf32>
    %cst_22 = arith.constant 3.200000e+01 : f32
    %98 = vector.broadcast %cst_22 : f32 to vector<16x1xf32>
    %99 = arith.divf %97, %98 : vector<16x1xf32>
    %100 = vector.broadcast %99 : vector<16x1xf32> to vector<16x32xf32>
    %101 = arith.subf %93, %100 : vector<16x32xf32>
    %102 = arith.mulf %101, %101 : vector<16x32xf32>
    %cst_23 = arith.constant dense<0.000000e+00> : vector<16xf32>
    %103 = vector.multi_reduction <add>, %102, %cst_23 [1] : vector<16x32xf32> to vector<16xf32>
    %104 = vector.shape_cast %103 : vector<16xf32> to vector<16x1xf32>
    %cst_24 = arith.constant 3.200000e+01 : f32
    %105 = vector.broadcast %cst_24 : f32 to vector<16x1xf32>
    %106 = arith.divf %104, %105 : vector<16x1xf32>
    %cst_25 = arith.constant 9.99999974E-6 : f32
    %107 = vector.broadcast %cst_25 : f32 to vector<16x1xf32>
    %108 = arith.addf %106, %107 : vector<16x1xf32>
    %109 = math.rsqrt %108 : vector<16x1xf32>
    %110 = vector.broadcast %109 : vector<16x1xf32> to vector<16x32xf32>
    %111 = arith.mulf %101, %110 : vector<16x32xf32>
    %112 = vector.broadcast %94 : vector<1x32xf32> to vector<16x32xf32>
    %113 = arith.mulf %111, %112 : vector<16x32xf32>
    %114 = vector.broadcast %95 : vector<1x32xf32> to vector<16x32xf32>
    %115 = arith.addf %113, %114 : vector<16x32xf32>
    %c0_26 = arith.constant 0 : index
    %c128 = arith.constant 128 : index
    %116 = vector.load %arg3[%c0_26, %c128] : memref<32x320xf32, #tpu.memory_space<vmem>>, vector<32x32xf32>
    %cst_27 = arith.constant dense<0.000000e+00> : vector<16x32xf32>
    %117 = tpu.matmul %115, %116, %cst_27 {dimension_numbers = #tpu.dot_dimension_numbers<[1], [0], [0], [1], [0, 0, 1, 1], [], []>} : vector<16x32xf32>, vector<32x32xf32>, vector<16x32xf32> -> vector<16x32xf32>
    %118 = vector.extract_strided_slice %2 {offsets = [4, 0], sizes = [1, 32], strides = [1, 1]} : vector<16x32xf32> to vector<1x32xf32>
    %119 = vector.broadcast %118 : vector<1x32xf32> to vector<16x32xf32>
    %120 = arith.addf %117, %119 : vector<16x32xf32>
    %c0_28 = arith.constant 0 : index
    %c160 = arith.constant 160 : index
    %121 = vector.load %arg3[%c0_28, %c160] : memref<32x320xf32, #tpu.memory_space<vmem>>, vector<32x64xf32>
    %cst_29 = arith.constant dense<0.000000e+00> : vector<16x64xf32>
    %122 = tpu.matmul %1, %121, %cst_29 {dimension_numbers = #tpu.dot_dimension_numbers<[1], [0], [0], [1], [0, 0, 1, 1], [], []>} : vector<16x32xf32>, vector<32x64xf32>, vector<16x64xf32> -> vector<16x64xf32>
    %123 = vector.extract_strided_slice %122 {offsets = [0, 0], sizes = [16, 32], strides = [1, 1]} : vector<16x64xf32> to vector<16x32xf32>
    %124 = vector.extract_strided_slice %2 {offsets = [5, 0], sizes = [1, 32], strides = [1, 1]} : vector<16x32xf32> to vector<1x32xf32>
    %125 = vector.broadcast %124 : vector<1x32xf32> to vector<16x32xf32>
    %126 = arith.addf %123, %125 : vector<16x32xf32>
    %127 = vector.extract_strided_slice %122 {offsets = [0, 32], sizes = [16, 32], strides = [1, 1]} : vector<16x64xf32> to vector<16x32xf32>
    %128 = vector.extract_strided_slice %2 {offsets = [6, 0], sizes = [1, 32], strides = [1, 1]} : vector<16x32xf32> to vector<1x32xf32>
    %129 = vector.broadcast %128 : vector<1x32xf32> to vector<16x32xf32>
    %130 = arith.addf %127, %129 : vector<16x32xf32>
    %131 = vector.extract_strided_slice %120 {offsets = [0, 0], sizes = [16, 8], strides = [1, 1]} : vector<16x32xf32> to vector<16x8xf32>
    %132 = vector.extract_strided_slice %120 {offsets = [0, 8], sizes = [16, 8], strides = [1, 1]} : vector<16x32xf32> to vector<16x8xf32>
    %133 = vector.extract_strided_slice %120 {offsets = [0, 16], sizes = [16, 8], strides = [1, 1]} : vector<16x32xf32> to vector<16x8xf32>
    %134 = vector.extract_strided_slice %120 {offsets = [0, 24], sizes = [16, 8], strides = [1, 1]} : vector<16x32xf32> to vector<16x8xf32>
    %135 = vector.shape_cast %131 : vector<16x8xf32> to vector<1x16x8xf32>
    %136 = vector.shape_cast %132 : vector<16x8xf32> to vector<1x16x8xf32>
    %137 = vector.shape_cast %133 : vector<16x8xf32> to vector<1x16x8xf32>
    %138 = vector.shape_cast %134 : vector<16x8xf32> to vector<1x16x8xf32>
    %139 = tpu.concatenate %135, %136, %137, %138 in 0 : vector<1x16x8xf32>, vector<1x16x8xf32>, vector<1x16x8xf32>, vector<1x16x8xf32> -> vector<4x16x8xf32>
    %cst_30 = arith.constant 0.353553385 : f32
    %140 = vector.broadcast %cst_30 : f32 to vector<4x16x8xf32>
    %141 = arith.mulf %139, %140 : vector<4x16x8xf32>
    %142 = vector.extract_strided_slice %126 {offsets = [0, 0], sizes = [16, 8], strides = [1, 1]} : vector<16x32xf32> to vector<16x8xf32>
    %143 = vector.extract_strided_slice %126 {offsets = [0, 8], sizes = [16, 8], strides = [1, 1]} : vector<16x32xf32> to vector<16x8xf32>
    %144 = vector.extract_strided_slice %126 {offsets = [0, 16], sizes = [16, 8], strides = [1, 1]} : vector<16x32xf32> to vector<16x8xf32>
    %145 = vector.extract_strided_slice %126 {offsets = [0, 24], sizes = [16, 8], strides = [1, 1]} : vector<16x32xf32> to vector<16x8xf32>
    %146 = vector.shape_cast %142 : vector<16x8xf32> to vector<1x16x8xf32>
    %147 = vector.shape_cast %143 : vector<16x8xf32> to vector<1x16x8xf32>
    %148 = vector.shape_cast %144 : vector<16x8xf32> to vector<1x16x8xf32>
    %149 = vector.shape_cast %145 : vector<16x8xf32> to vector<1x16x8xf32>
    %150 = tpu.concatenate %146, %147, %148, %149 in 0 : vector<1x16x8xf32>, vector<1x16x8xf32>, vector<1x16x8xf32>, vector<1x16x8xf32> -> vector<4x16x8xf32>
    %151 = vector.extract_strided_slice %130 {offsets = [0, 0], sizes = [16, 8], strides = [1, 1]} : vector<16x32xf32> to vector<16x8xf32>
    %152 = vector.extract_strided_slice %130 {offsets = [0, 8], sizes = [16, 8], strides = [1, 1]} : vector<16x32xf32> to vector<16x8xf32>
    %153 = vector.extract_strided_slice %130 {offsets = [0, 16], sizes = [16, 8], strides = [1, 1]} : vector<16x32xf32> to vector<16x8xf32>
    %154 = vector.extract_strided_slice %130 {offsets = [0, 24], sizes = [16, 8], strides = [1, 1]} : vector<16x32xf32> to vector<16x8xf32>
    %155 = vector.shape_cast %151 : vector<16x8xf32> to vector<1x16x8xf32>
    %156 = vector.shape_cast %152 : vector<16x8xf32> to vector<1x16x8xf32>
    %157 = vector.shape_cast %153 : vector<16x8xf32> to vector<1x16x8xf32>
    %158 = vector.shape_cast %154 : vector<16x8xf32> to vector<1x16x8xf32>
    %159 = tpu.concatenate %155, %156, %157, %158 in 0 : vector<1x16x8xf32>, vector<1x16x8xf32>, vector<1x16x8xf32>, vector<1x16x8xf32> -> vector<4x16x8xf32>
    "tpu.trace_start"() <{level = 10 : i32, message = "hqd,hkd->hqk"}> : () -> ()
    %cst_31 = arith.constant dense<0.000000e+00> : vector<4x16x16xf32>
    %160 = tpu.matmul %141, %150, %cst_31 {dimension_numbers = #tpu.dot_dimension_numbers<[2], [2], [1], [1], [0, 0, 0, 1, 1, 1], [0], [0]>} : vector<4x16x8xf32>, vector<4x16x8xf32>, vector<4x16x16xf32> -> vector<4x16x16xf32>
    "tpu.trace_stop"() : () -> ()
    %161 = vector.shape_cast %19 : vector<16x16xf32> to vector<1x16x16xf32>
    %162 = vector.broadcast %161 : vector<1x16x16xf32> to vector<4x16x16xf32>
    %163 = arith.addf %160, %162 : vector<4x16x16xf32>
    %cst_32 = arith.constant dense<0xFF800000> : vector<4x16xf32>
    %164 = vector.multi_reduction <maximumf>, %163, %cst_32 [2] : vector<4x16x16xf32> to vector<4x16xf32>
    %165 = vector.shape_cast %164 : vector<4x16xf32> to vector<4x16x1xf32>
    %166 = vector.broadcast %165 : vector<4x16x1xf32> to vector<4x16x16xf32>
    %167 = arith.subf %163, %166 : vector<4x16x16xf32>
    %168 = math.exp %167 : vector<4x16x16xf32>
    %cst_33 = arith.constant dense<0.000000e+00> : vector<4x16xf32>
    %169 = vector.multi_reduction <add>, %168, %cst_33 [2] : vector<4x16x16xf32> to vector<4x16xf32>
    %170 = vector.shape_cast %169 : vector<4x16xf32> to vector<4x16x1xf32>
    %171 = tpu.reciprocal %170 {approx = true} : vector<4x16x1xf32> -> vector<4x16x1xf32>
    %172 = vector.broadcast %171 : vector<4x16x1xf32> to vector<4x16x16xf32>
    %173 = arith.mulf %168, %172 : vector<4x16x16xf32>
    "tpu.trace_start"() <{level = 10 : i32, message = "hqk,hkd->hqd"}> : () -> ()
    %cst_34 = arith.constant dense<0.000000e+00> : vector<4x16x8xf32>
    %174 = tpu.matmul %173, %159, %cst_34 {dimension_numbers = #tpu.dot_dimension_numbers<[2], [1], [1], [2], [0, 0, 0, 1, 1, 2], [0], [0]>} : vector<4x16x16xf32>, vector<4x16x8xf32>, vector<4x16x8xf32> -> vector<4x16x8xf32>
    "tpu.trace_stop"() : () -> ()
    %175 = vector.extract_strided_slice %174 {offsets = [0, 0, 0], sizes = [1, 16, 8], strides = [1, 1, 1]} : vector<4x16x8xf32> to vector<1x16x8xf32>
    %176 = vector.shape_cast %175 : vector<1x16x8xf32> to vector<16x8xf32>
    %177 = vector.extract_strided_slice %174 {offsets = [1, 0, 0], sizes = [1, 16, 8], strides = [1, 1, 1]} : vector<4x16x8xf32> to vector<1x16x8xf32>
    %178 = vector.shape_cast %177 : vector<1x16x8xf32> to vector<16x8xf32>
    %179 = vector.extract_strided_slice %174 {offsets = [2, 0, 0], sizes = [1, 16, 8], strides = [1, 1, 1]} : vector<4x16x8xf32> to vector<1x16x8xf32>
    %180 = vector.shape_cast %179 : vector<1x16x8xf32> to vector<16x8xf32>
    %181 = vector.extract_strided_slice %174 {offsets = [3, 0, 0], sizes = [1, 16, 8], strides = [1, 1, 1]} : vector<4x16x8xf32> to vector<1x16x8xf32>
    %182 = vector.shape_cast %181 : vector<1x16x8xf32> to vector<16x8xf32>
    %183 = tpu.concatenate %176, %178, %180, %182 in 1 : vector<16x8xf32>, vector<16x8xf32>, vector<16x8xf32>, vector<16x8xf32> -> vector<16x32xf32>
    %c0_35 = arith.constant 0 : index
    %c224 = arith.constant 224 : index
    %184 = vector.load %arg3[%c0_35, %c224] : memref<32x320xf32, #tpu.memory_space<vmem>>, vector<32x32xf32>
    %cst_36 = arith.constant dense<0.000000e+00> : vector<16x32xf32>
    %185 = tpu.matmul %183, %184, %cst_36 {dimension_numbers = #tpu.dot_dimension_numbers<[1], [0], [0], [1], [0, 0, 1, 1], [], []>} : vector<16x32xf32>, vector<32x32xf32>, vector<16x32xf32> -> vector<16x32xf32>
    %186 = vector.extract_strided_slice %2 {offsets = [7, 0], sizes = [1, 32], strides = [1, 1]} : vector<16x32xf32> to vector<1x32xf32>
    %187 = vector.broadcast %186 : vector<1x32xf32> to vector<16x32xf32>
    %188 = arith.addf %185, %187 : vector<16x32xf32>
    %189 = arith.addf %188, %115 : vector<16x32xf32>
    %190 = vector.extract_strided_slice %2 {offsets = [12, 0], sizes = [1, 32], strides = [1, 1]} : vector<16x32xf32> to vector<1x32xf32>
    %191 = vector.extract_strided_slice %2 {offsets = [13, 0], sizes = [1, 32], strides = [1, 1]} : vector<16x32xf32> to vector<1x32xf32>
    %cst_37 = arith.constant dense<0.000000e+00> : vector<16xf32>
    %192 = vector.multi_reduction <add>, %189, %cst_37 [1] : vector<16x32xf32> to vector<16xf32>
    %193 = vector.shape_cast %192 : vector<16xf32> to vector<16x1xf32>
    %cst_38 = arith.constant 3.200000e+01 : f32
    %194 = vector.broadcast %cst_38 : f32 to vector<16x1xf32>
    %195 = arith.divf %193, %194 : vector<16x1xf32>
    %196 = vector.broadcast %195 : vector<16x1xf32> to vector<16x32xf32>
    %197 = arith.subf %189, %196 : vector<16x32xf32>
    %198 = arith.mulf %197, %197 : vector<16x32xf32>
    %cst_39 = arith.constant dense<0.000000e+00> : vector<16xf32>
    %199 = vector.multi_reduction <add>, %198, %cst_39 [1] : vector<16x32xf32> to vector<16xf32>
    %200 = vector.shape_cast %199 : vector<16xf32> to vector<16x1xf32>
    %cst_40 = arith.constant 3.200000e+01 : f32
    %201 = vector.broadcast %cst_40 : f32 to vector<16x1xf32>
    %202 = arith.divf %200, %201 : vector<16x1xf32>
    %cst_41 = arith.constant 9.99999974E-6 : f32
    %203 = vector.broadcast %cst_41 : f32 to vector<16x1xf32>
    %204 = arith.addf %202, %203 : vector<16x1xf32>
    %205 = math.rsqrt %204 : vector<16x1xf32>
    %206 = vector.broadcast %205 : vector<16x1xf32> to vector<16x32xf32>
    %207 = arith.mulf %197, %206 : vector<16x32xf32>
    %208 = vector.broadcast %190 : vector<1x32xf32> to vector<16x32xf32>
    %209 = arith.mulf %207, %208 : vector<16x32xf32>
    %210 = vector.broadcast %191 : vector<1x32xf32> to vector<16x32xf32>
    %211 = arith.addf %209, %210 : vector<16x32xf32>
    %c0_42 = arith.constant 0 : index
    %c256 = arith.constant 256 : index
    %212 = vector.load %arg3[%c0_42, %c256] : memref<32x320xf32, #tpu.memory_space<vmem>>, vector<32x32xf32>
    %cst_43 = arith.constant dense<0.000000e+00> : vector<16x32xf32>
    %213 = tpu.matmul %211, %212, %cst_43 {dimension_numbers = #tpu.dot_dimension_numbers<[1], [0], [0], [1], [0, 0, 1, 1], [], []>} : vector<16x32xf32>, vector<32x32xf32>, vector<16x32xf32> -> vector<16x32xf32>
    %214 = vector.extract_strided_slice %2 {offsets = [8, 0], sizes = [1, 32], strides = [1, 1]} : vector<16x32xf32> to vector<1x32xf32>
    %215 = vector.broadcast %214 : vector<1x32xf32> to vector<16x32xf32>
    %216 = arith.addf %213, %215 : vector<16x32xf32>
    %cst_44 = arith.constant 0.000000e+00 : f32
    %217 = vector.broadcast %cst_44 : f32 to vector<16x32xf32>
    %218 = arith.maximumf %216, %217 : vector<16x32xf32>
    %c0_45 = arith.constant 0 : index
    %c288 = arith.constant 288 : index
    %219 = vector.load %arg3[%c0_45, %c288] : memref<32x320xf32, #tpu.memory_space<vmem>>, vector<32x32xf32>
    %cst_46 = arith.constant dense<0.000000e+00> : vector<16x32xf32>
    %220 = tpu.matmul %218, %219, %cst_46 {dimension_numbers = #tpu.dot_dimension_numbers<[1], [0], [0], [1], [0, 0, 1, 1], [], []>} : vector<16x32xf32>, vector<32x32xf32>, vector<16x32xf32> -> vector<16x32xf32>
    %221 = vector.extract_strided_slice %2 {offsets = [9, 0], sizes = [1, 32], strides = [1, 1]} : vector<16x32xf32> to vector<1x32xf32>
    %222 = vector.broadcast %221 : vector<1x32xf32> to vector<16x32xf32>
    %223 = arith.addf %220, %222 : vector<16x32xf32>
    %224 = arith.addf %223, %211 : vector<16x32xf32>
    %225 = vector.extract_strided_slice %2 {offsets = [14, 0], sizes = [1, 32], strides = [1, 1]} : vector<16x32xf32> to vector<1x32xf32>
    %226 = vector.extract_strided_slice %2 {offsets = [15, 0], sizes = [1, 32], strides = [1, 1]} : vector<16x32xf32> to vector<1x32xf32>
    %cst_47 = arith.constant dense<0.000000e+00> : vector<16xf32>
    %227 = vector.multi_reduction <add>, %224, %cst_47 [1] : vector<16x32xf32> to vector<16xf32>
    %228 = vector.shape_cast %227 : vector<16xf32> to vector<16x1xf32>
    %cst_48 = arith.constant 3.200000e+01 : f32
    %229 = vector.broadcast %cst_48 : f32 to vector<16x1xf32>
    %230 = arith.divf %228, %229 : vector<16x1xf32>
    %231 = vector.broadcast %230 : vector<16x1xf32> to vector<16x32xf32>
    %232 = arith.subf %224, %231 : vector<16x32xf32>
    %233 = arith.mulf %232, %232 : vector<16x32xf32>
    %cst_49 = arith.constant dense<0.000000e+00> : vector<16xf32>
    %234 = vector.multi_reduction <add>, %233, %cst_49 [1] : vector<16x32xf32> to vector<16xf32>
    %235 = vector.shape_cast %234 : vector<16xf32> to vector<16x1xf32>
    %cst_50 = arith.constant 3.200000e+01 : f32
    %236 = vector.broadcast %cst_50 : f32 to vector<16x1xf32>
    %237 = arith.divf %235, %236 : vector<16x1xf32>
    %cst_51 = arith.constant 9.99999974E-6 : f32
    %238 = vector.broadcast %cst_51 : f32 to vector<16x1xf32>
    %239 = arith.addf %237, %238 : vector<16x1xf32>
    %240 = math.rsqrt %239 : vector<16x1xf32>
    %241 = vector.broadcast %240 : vector<16x1xf32> to vector<16x32xf32>
    %242 = arith.mulf %232, %241 : vector<16x32xf32>
    %243 = vector.broadcast %225 : vector<1x32xf32> to vector<16x32xf32>
    %244 = arith.mulf %242, %243 : vector<16x32xf32>
    %245 = vector.broadcast %226 : vector<1x32xf32> to vector<16x32xf32>
    %246 = arith.addf %244, %245 : vector<16x32xf32>
    %c0_52 = arith.constant 0 : index
    %c0_53 = arith.constant 0 : index
    %247 = vector.load %arg5[%c0_52, %c0_53] : memref<16x32xf32, #tpu.memory_space<vmem>>, vector<16x32xf32>
    tpu.vector_store %arg5[%c0_52, %c0_53], %246 {strides = array<i32>} : memref<16x32xf32, #tpu.memory_space<vmem>>, vector<16x32xf32>,
    return
  }
  func.func @transform_0(%arg0: i32) -> (i32, i32) {
    %c0_i32 = arith.constant 0 : i32
    %c0_i32_0 = arith.constant 0 : i32
    %c0_i32_1 = arith.constant 0 : i32
    return %c0_i32, %c0_i32_0 : i32, i32
  }
  func.func @transform_1(%arg0: i32) -> (i32, i32) {
    %c0_i32 = arith.constant 0 : i32
    %c0_i32_0 = arith.constant 0 : i32
    %c0_i32_1 = arith.constant 0 : i32
    return %c0_i32, %c0_i32_0 : i32, i32
  }
  func.func @transform_2(%arg0: i32) -> (i32, i32) {
    %c0_i32 = arith.constant 0 : i32
    %c0_i32_0 = arith.constant 0 : i32
    %c0_i32_1 = arith.constant 0 : i32
    return %c0_i32, %c0_i32_0 : i32, i32
  }
  func.func @transform_3(%arg0: i32) -> (i32, i32) {
    %c0_i32 = arith.constant 0 : i32
    %c0_i32_0 = arith.constant 0 : i32
    %c0_i32_1 = arith.constant 0 : i32
    return %c0_i32, %c0_i32_0 : i32, i32
  }
  func.func @transform_4(%arg0: i32) -> (i32, i32) {
    %c0_i32 = arith.constant 0 : i32
    %c0_i32_0 = arith.constant 0 : i32
    %c0_i32_1 = arith.constant 0 : i32
    return %c0_i32, %c0_i32_0 : i32, i32
  }
}

</mosaic_0001>

<llo_original>
// kernel: tpu_custom_call.1
$region0: #{tpu_custom_call.1}
  #allocation0 [shape = 'u32[]', space=smem, size = 0x4, offset = 0x4, fixed_abs, tag = 'smem constant byte address 0x4 - core index']
  #allocation1 [shape = 'u32[144,128]{1,0:T(1,128)}', space=vmem, size = 0x12000, scoped, tag = 'internal scratch']
  %s0 = inlined_call_operand.hbm [shape: f32[16,32], index: 0, kind: input, shape index: {}]
  %s1 = inlined_call_operand.hbm [shape: f32[16,32], index: 1, kind: input, shape index: {}]
  %s2 = inlined_call_operand.hbm [shape: f32[32,320], index: 2, kind: input, shape index: {}]
  %s3 = inlined_call_operand.hbm [shape: f32[16,32], index: 3, kind: input, shape index: {}]
  %s4 = inlined_call_operand.hbm [shape: f32[16,32], index: 4, kind: output, shape index: {}]
  %s5 = sld [smem:[#allocation0]]
  $region42: #{tpu_custom_call.1} parent=0
    _
  %s7 = ssub.s32 1, %s5
  %s8 = scalar_select 0, %s7, %s5
  $region1: #{tpu_custom_call.1} parent=0
    #allocation2 [shape = 'u8[8192]{0}', space=vmem, size = 0x2000, scoped, tag = 'input window, operand 0, single buffered']
    #allocation3 [shape = 's32[1]{0}', space=sflag, size = 0x4, scoped, tag = 'scoped memory for tpu_custom_call.1']
    #allocation4 [shape = 's32[1]{0}', space=sflag, size = 0x4, scoped, tag = 'scoped memory for tpu_custom_call.1']
    #allocation5 [shape = 'u8[8192]{0}', space=vmem, size = 0x2000, scoped, tag = 'input window, operand 1, single buffered']
    #allocation6 [shape = 's32[1]{0}', space=sflag, size = 0x4, scoped, tag = 'scoped memory for tpu_custom_call.1']
    #allocation7 [shape = 'u8[49152]{0}', space=vmem, size = 0xc000, scoped, tag = 'input window, operand 2, single buffered']
    #allocation8 [shape = 'u8[8192]{0}', space=vmem, size = 0x2000, scoped, tag = 'input window, operand 3, single buffered']
    #allocation9 [shape = 's32[1]{0}', space=sflag, size = 0x4, scoped, tag = 'scoped memory for tpu_custom_call.1']
    #allocation10 [shape = 'u8[8192]{0}', space=vmem, size = 0x2000, scoped, tag = 'output window, operand 0, single buffered']
    %9 = vsyncpa [#allocation3], 0
    %10 = vsyncpa [#allocation6], 0
    %11 = vsyncpa [#allocation9], 0
    %12 = vsyncpa [#allocation4], 0
    // Predicated region
    $region2: #{tpu_custom_call.1} parent=1 // pred_check
      _
    $region3: #{tpu_custom_call.1} parent=1 // pred_check_branch
      %14 = sbr.rel (0) target = $region5
    $region4: #{tpu_custom_call.1} parent=1 // pred_region
      %s16 = ssub.s32 256, 256
      %17 = vsyncadd [#allocation3], %s16
      %s18 = sshll.u32 [#allocation2], 4
      %s19 = int_to_ptr.vmem [resolvable:$true] %s18
      %24 = dma.hbm_to_vmem [thread:$0]  %s0, 256, %s19, [#allocation3], 128, 128, 8
    $region5: #{tpu_custom_call.1} parent=1 // pred_fallthru
      _
    // Predicated region
    $region6: #{tpu_custom_call.1} parent=1 // pred_check
      _
    $region7: #{tpu_custom_call.1} parent=1 // pred_check_branch
      %26 = sbr.rel (0) target = $region9
    $region8: #{tpu_custom_call.1} parent=1 // pred_region
      %s28 = ssub.s32 256, 256
      %29 = vsyncadd [#allocation6], %s28
      %s30 = sshll.u32 [#allocation5], 4
      %s31 = int_to_ptr.vmem [resolvable:$true] %s30
      %36 = dma.hbm_to_vmem [thread:$0]  %s1, 256, %s31, [#allocation6], 128, 128, 8
    $region9: #{tpu_custom_call.1} parent=1 // pred_fallthru
      _
    // Predicated region
    $region10: #{tpu_custom_call.1} parent=1 // pred_check
      _
    $region11: #{tpu_custom_call.1} parent=1 // pred_check_branch
      %38 = sbr.rel (0) target = $region13
    $region12: #{tpu_custom_call.1} parent=1 // pred_region
      %s40 = ssub.s32 1536, 1536
      %41 = vsyncadd [#allocation6], %s40
      %s42 = sshll.u32 [#allocation7], 4
      %s43 = int_to_ptr.vmem [resolvable:$true] %s42
      %48 = dma.hbm_to_vmem [thread:$0]  %s2, 1536, %s43, [#allocation6], 384, 384, 24
    $region13: #{tpu_custom_call.1} parent=1 // pred_fallthru
      _
    // Predicated region
    $region14: #{tpu_custom_call.1} parent=1 // pred_check
      _
    $region15: #{tpu_custom_call.1} parent=1 // pred_check_branch
      %50 = sbr.rel (0) target = $region17
    $region16: #{tpu_custom_call.1} parent=1 // pred_region
      %s52 = ssub.s32 256, 256
      %53 = vsyncadd [#allocation9], %s52
      %s54 = sshll.u32 [#allocation8], 4
      %s55 = int_to_ptr.vmem [resolvable:$true] %s54
      %60 = dma.hbm_to_vmem [thread:$0]  %s3, 256, %s55, [#allocation9], 128, 128, 8
    $region17: #{tpu_custom_call.1} parent=1 // pred_fallthru
      _
    // Predicated region
    $region18: #{tpu_custom_call.1} parent=1 // pred_check
      _
    $region19: #{tpu_custom_call.1} parent=1 // pred_check_branch
      %62 = sbr.rel (0) target = $region21
    $region20: #{tpu_custom_call.1} parent=1 // pred_region
      %63 = dma.done [#allocation3], 256
    $region21: #{tpu_custom_call.1} parent=1 // pred_fallthru
      _
    // Predicated region
    $region22: #{tpu_custom_call.1} parent=1 // pred_check
      _
    $region23: #{tpu_custom_call.1} parent=1 // pred_check_branch
      %65 = sbr.rel (0) target = $region25
    $region24: #{tpu_custom_call.1} parent=1 // pred_region
      %66 = dma.done [#allocation6], 256
    $region25: #{tpu_custom_call.1} parent=1 // pred_fallthru
      _
    // Predicated region
    $region26: #{tpu_custom_call.1} parent=1 // pred_check
      _
    $region27: #{tpu_custom_call.1} parent=1 // pred_check_branch
      %68 = sbr.rel (0) target = $region29
    $region28: #{tpu_custom_call.1} parent=1 // pred_region
      %69 = dma.done [#allocation6], 1536
    $region29: #{tpu_custom_call.1} parent=1 // pred_fallthru
      _
    // Predicated region
    $region30: #{tpu_custom_call.1} parent=1 // pred_check
      _
    $region31: #{tpu_custom_call.1} parent=1 // pred_check_branch
      %71 = sbr.rel (0) target = $region33
    $region32: #{tpu_custom_call.1} parent=1 // pred_region
      %72 = dma.done [#allocation9], 256
    $region33: #{tpu_custom_call.1} parent=1 // pred_fallthru
      _
    %v73 = vld [vmem:[#allocation2] sm:$0xff]
    %v74 = vld [vmem:[#allocation2 + $0x8] sm:$0xff]
    %v75 = vld [vmem:[#allocation5] sm:$0xff]
    %v76 = vld [vmem:[#allocation5 + $0x8] sm:$0xff]
    %v77 = vld [vmem:[#allocation8] sm:$0xff]
    %v78 = vld [vmem:[#allocation8 + $0x8] sm:$0xff]
    %v79 = vlaneseq
    %v80 = vshrl.u32 %v79, 7
    %v81 = vadd.s32 %v80, 8
    %v82 = vlaneseq
    %v83 = vand.u32 %v82, 127
    %vm84 = vcmp.lt.s32.totalorder %v80, 8
    %vm85 = vcmp.lt.s32.totalorder %v81, 8
    %vm86 = vcmp.lt.s32.totalorder %v83, 8
    %vm87 = vmxor %vm84, %vm86
    %vm88 = vmxor %vm85, %vm86
    %vm89 = vcmp.gt.s32.totalorder %v83, %v80
    %vm90 = vcmp.gt.s32.totalorder %v83, %v81
    %vm91 = vmor %vm87, %vm89
    %vm92 = vmor %vm88, %vm90
    %v93 = vsel %vm91, -1e+30, 0.0
    %v94 = vsel %vm92, -1e+30, 0.0
    %v95 = vsel %vm87, -1e+30, 0.0
    %v96 = vsel %vm88, -1e+30, 0.0
    %v97 = vld [vmem:[#allocation7] sm:$0xff]
    %v98 = vld [vmem:[#allocation7 + $0x18] sm:$0xff]
    %v99 = vld [vmem:[#allocation7 + $0x30] sm:$0xff]
    %v100 = vld [vmem:[#allocation7 + $0x48] sm:$0xff]
    %v101 = vlaneseq
    %v102 = vshrl.u32 %v101, 7
    %v103 = vsub.s32 0, %v102
    %v104 = vrot.slane %v77, %v103
    %vm105 = vcmask 261120
    %v107 = vsel %vm105, %v73, 0
    %v110 = vsel %vm105, %v74, 0
    %112 = vmatprep.subr.mxu0 0.0
    %113 = vmatpush1.msra.mxu0 %v97
    %114 = vmatprep.subr.mxu0 0.0
    %115 = vmatpush1.msra.mxu0 %v98
    %116 = vmatprep.subr.mxu0 0.0
    %117 = vmatpush1.msra.mxu0 %v99
    %118 = vmatprep.subr.mxu0 0.0
    %119 = vmatpush1.msra.mxu0 %v100
    %120 = vmatprep.subr.mxu0 0.0
    %121 = vmatpush1.msra.mxu0 0.0
    %122 = vmatprep.subr.mxu0 0.0
    %123 = vmatpush1.msra.mxu0 0.0
    %124 = vmatprep.subr.mxu0 0.0
    %125 = vmatpush1.msra.mxu0 0.0
    %126 = vmatprep.subr.mxu0 0.0
    %127 = vmatpush1.msra.mxu0 0.0
    %128 = vmatprep.subr.mxu0 0.0
    %129 = vmatpush1.msra.mxu0 0.0
    %130 = vmatprep.subr.mxu0 0.0
    %131 = vmatpush1.msra.mxu0 0.0
    %132 = vmatprep.subr.mxu0 0.0
    %133 = vmatpush1.msra.mxu0 0.0
    %134 = vmatprep.subr.mxu0 0.0
    %135 = vmatpush1.msra.mxu0 0.0
    %136 = vmatprep.subr.mxu0 0.0
    %137 = vmatpush1.msra.mxu0 0.0
    %138 = vmatprep.subr.mxu0 0.0
    %139 = vmatpush1.msra.mxu0 0.0
    %140 = vmatprep.subr.mxu0 0.0
    %141 = vmatpush1.msra.mxu0 0.0
    %142 = vmatprep.subr.mxu0 0.0
    %143 = vmatpush1.msra.mxu0 0.0
    %144 = vmatprep.subr.mxu0 0.0
    %145 = vmatpush1.msra.mxu0 0.0
    %146 = vmatprep.subr.mxu0 0.0
    %147 = vmatpush1.msra.mxu0 0.0
    %148 = vmatprep.subr.mxu0 0.0
    %149 = vmatpush1.msra.mxu0 0.0
    %150 = vmatprep.subr.mxu0 0.0
    %151 = vmatpush1.msra.mxu0 0.0
    %152 = vmatprep.subr.mxu0 0.0
    %153 = vmatpush1.msra.mxu0 0.0
    %154 = vmatprep.subr.mxu0 0.0
    %155 = vmatpush1.msra.mxu0 0.0
    %156 = vmatprep.subr.mxu0 0.0
    %157 = vmatpush1.msra.mxu0 0.0
    %158 = vmatprep.subr.mxu0 0.0
    %159 = vmatpush1.msra.mxu0 0.0
    %160 = vmatprep.subr.mxu0 0.0
    %161 = vmatpush1.msra.mxu0 0.0
    %162 = vmatprep.subr.mxu0 0.0
    %163 = vmatpush1.msra.mxu0 0.0
    %164 = vmatprep.subr.mxu0 0.0
    %165 = vmatpush1.msra.mxu0 0.0
    %166 = vmatprep.subr.mxu0 0.0
    %167 = vmatpush1.msra.mxu0 0.0
    %168 = vmatprep.subr.mxu0 0.0
    %169 = vmatpush1.msra.mxu0 0.0
    %170 = vmatprep.subr.mxu0 0.0
    %171 = vmatpush1.msra.mxu0 0.0
    %172 = vmatprep.subr.mxu0 0.0
    %173 = vmatpush1.msra.mxu0 0.0
    %174 = vmatprep.subr.mxu0 0.0
    %175 = vmatpush1.msra.mxu0 0.0
    %176 = vmatprep.mubr.f32.mxu0 0.0
    %177 = vmatmul.mubr.f32.gmra.mrb[0].mxu0 %v107
    %v178 = vpop.f32.mrb[0].mxu0
    %v179 = vadd.f32 %v104, %v178
    %v180 = vpop.f32.mrb[0].mxu0
    %181 = vmatprep.mubr.f32.mxu0 0.0
    %182 = vmatmul.mubr.f32.gmra.mrb[0].mxu0 %v110
    %v183 = vpop.f32.mrb[0].mxu0
    %v184 = vadd.f32 %v104, %v183
    %v185 = vpop.f32.mrb[0].mxu0
    %186 = vdwg.mxu0
    %191 = vrot.lane.b32.xlu0 %v97, 96
    %v192 = vpop.permute.xlu0 %191
    %193 = vrot.lane.b32.xlu0 %v98, 96
    %v194 = vpop.permute.xlu0 %193
    %195 = vrot.lane.b32.xlu0 %v99, 96
    %v196 = vpop.permute.xlu0 %195
    %197 = vrot.lane.b32.xlu0 %v100, 96
    %v198 = vpop.permute.xlu0 %197
    %203 = vmatprep.subr.mxu0 0.0
    %204 = vmatpush1.msra.mxu0 %v192
    %205 = vmatprep.subr.mxu0 0.0
    %206 = vmatpush1.msra.mxu0 %v194
    %207 = vmatprep.subr.mxu0 0.0
    %208 = vmatpush1.msra.mxu0 %v196
    %209 = vmatprep.subr.mxu0 0.0
    %210 = vmatpush1.msra.mxu0 %v198
    %211 = vmatprep.subr.mxu0 0.0
    %212 = vmatpush1.msra.mxu0 0.0
    %213 = vmatprep.subr.mxu0 0.0
    %214 = vmatpush1.msra.mxu0 0.0
    %215 = vmatprep.subr.mxu0 0.0
    %216 = vmatpush1.msra.mxu0 0.0
    %217 = vmatprep.subr.mxu0 0.0
    %218 = vmatpush1.msra.mxu0 0.0
    %219 = vmatprep.subr.mxu0 0.0
    %220 = vmatpush1.msra.mxu0 0.0
    %221 = vmatprep.subr.mxu0 0.0
    %222 = vmatpush1.msra.mxu0 0.0
    %223 = vmatprep.subr.mxu0 0.0
    %224 = vmatpush1.msra.mxu0 0.0
    %225 = vmatprep.subr.mxu0 0.0
    %226 = vmatpush1.msra.mxu0 0.0
    %227 = vmatprep.subr.mxu0 0.0
    %228 = vmatpush1.msra.mxu0 0.0
    %229 = vmatprep.subr.mxu0 0.0
    %230 = vmatpush1.msra.mxu0 0.0
    %231 = vmatprep.subr.mxu0 0.0
    %232 = vmatpush1.msra.mxu0 0.0
    %233 = vmatprep.subr.mxu0 0.0
    %234 = vmatpush1.msra.mxu0 0.0
    %235 = vmatprep.subr.mxu0 0.0
    %236 = vmatpush1.msra.mxu0 0.0
    %237 = vmatprep.subr.mxu0 0.0
    %238 = vmatpush1.msra.mxu0 0.0
    %239 = vmatprep.subr.mxu0 0.0
    %240 = vmatpush1.msra.mxu0 0.0
    %241 = vmatprep.subr.mxu0 0.0
    %242 = vmatpush1.msra.mxu0 0.0
    %243 = vmatprep.subr.mxu0 0.0
    %244 = vmatpush1.msra.mxu0 0.0
    %245 = vmatprep.subr.mxu0 0.0
    %246 = vmatpush1.msra.mxu0 0.0
    %247 = vmatprep.subr.mxu0 0.0
    %248 = vmatpush1.msra.mxu0 0.0
    %249 = vmatprep.subr.mxu0 0.0
    %250 = vmatpush1.msra.mxu0 0.0
    %251 = vmatprep.subr.mxu0 0.0
    %252 = vmatpush1.msra.mxu0 0.0
    %253 = vmatprep.subr.mxu0 0.0
    %254 = vmatpush1.msra.mxu0 0.0
    %255 = vmatprep.subr.mxu0 0.0
    %256 = vmatpush1.msra.mxu0 0.0
    %257 = vmatprep.subr.mxu0 0.0
    %258 = vmatpush1.msra.mxu0 0.0
    %259 = vmatprep.subr.mxu0 0.0
    %260 = vmatpush1.msra.mxu0 0.0
    %261 = vmatprep.subr.mxu0 0.0
    %262 = vmatpush1.msra.mxu0 0.0
    %263 = vmatprep.subr.mxu0 0.0
    %264 = vmatpush1.msra.mxu0 0.0
    %265 = vmatprep.subr.mxu0 0.0
    %266 = vmatpush1.msra.mxu0 0.0
    %267 = vmatprep.mubr.f32.mxu0 0.0
    %268 = vmatmul.mubr.f32.gmra.mrb[0].mxu0 %v107
    %v269 = vpop.f32.mrb[0].mxu0
    %v270 = vadd.f32 0.0, %v269
    %v271 = vpop.f32.mrb[0].mxu0
    %272 = vmatprep.mubr.f32.mxu0 0.0
    %273 = vmatmul.mubr.f32.gmra.mrb[0].mxu0 %v110
    %v274 = vpop.f32.mrb[0].mxu0
    %v275 = vadd.f32 0.0, %v274
    %v276 = vpop.f32.mrb[0].mxu0
    %277 = vdwg.mxu0
    %v278 = vlaneseq
    %v279 = vshrl.u32 %v278, 7
    %v280 = vsub.s32 1, %v279
    %v281 = vrot.slane %v77, %v280
    %v282 = vadd.f32 %v270, %v281
    %v283 = vadd.f32 %v275, %v281
    %v284 = vlaneseq
    %v285 = vshrl.u32 %v284, 7
    %v286 = vsub.s32 2, %v285
    %v287 = vrot.slane %v77, %v286
    %289 = vrot.lane.b32.xlu0 %v287, 32
    %v290 = vpop.permute.xlu0 %289
    %v292 = vadd.f32 %v270, %v290
    %v293 = vadd.f32 %v275, %v290
    %296 = vrot.lane.b32.xlu0 %v179, 120
    %v297 = vpop.permute.xlu0 %296
    %298 = vrot.lane.b32.xlu0 %v184, 120
    %v299 = vpop.permute.xlu0 %298
    %302 = vrot.lane.b32.xlu0 %v179, 112
    %v303 = vpop.permute.xlu0 %302
    %304 = vrot.lane.b32.xlu0 %v184, 112
    %v305 = vpop.permute.xlu0 %304
    %308 = vrot.lane.b32.xlu0 %v179, 104
    %v309 = vpop.permute.xlu0 %308
    %310 = vrot.lane.b32.xlu0 %v184, 104
    %v311 = vpop.permute.xlu0 %310
    %v314 = vmul.f32 %v179, 0.35355338
    %v315 = vmul.f32 %v184, 0.35355338
    %v316 = vmul.f32 %v297, 0.35355338
    %v317 = vmul.f32 %v299, 0.35355338
    %v318 = vmul.f32 %v303, 0.35355338
    %v319 = vmul.f32 %v305, 0.35355338
    %v320 = vmul.f32 %v309, 0.35355338
    %v321 = vmul.f32 %v311, 0.35355338
    %324 = vrot.lane.b32.xlu0 %v282, 120
    %v325 = vpop.permute.xlu0 %324
    %326 = vrot.lane.b32.xlu0 %v283, 120
    %v327 = vpop.permute.xlu0 %326
    %328 = vrot.lane.b32.xlu0 %v282, 112
    %v329 = vpop.permute.xlu0 %328
    %330 = vrot.lane.b32.xlu0 %v283, 112
    %v331 = vpop.permute.xlu0 %330
    %332 = vrot.lane.b32.xlu0 %v282, 104
    %v333 = vpop.permute.xlu0 %332
    %334 = vrot.lane.b32.xlu0 %v283, 104
    %v335 = vpop.permute.xlu0 %334
    %338 = vrot.lane.b32.xlu0 %v292, 120
    %v339 = vpop.permute.xlu0 %338
    %340 = vrot.lane.b32.xlu0 %v293, 120
    %v341 = vpop.permute.xlu0 %340
    %342 = vrot.lane.b32.xlu0 %v292, 112
    %v343 = vpop.permute.xlu0 %342
    %344 = vrot.lane.b32.xlu0 %v293, 112
    %v345 = vpop.permute.xlu0 %344
    %346 = vrot.lane.b32.xlu0 %v292, 104
    %v347 = vpop.permute.xlu0 %346
    %348 = vrot.lane.b32.xlu0 %v293, 104
    %v349 = vpop.permute.xlu0 %348
    %vm350 = vcmask 64512
    %v352 = vsel %vm350, %v314, 0
    %v355 = vsel %vm350, %v315, 0
    %v357 = vsel %vm350, %v282, 0
    %v359 = vsel %vm350, %v283, 0
    %361 = vmatprep.subr.mxu0 0.0
    %362 = vmatpush1.xpose.msra.mxu0 %v357
    %363 = vmatprep.subr.mxu0 0.0
    %364 = vmatpush1.xpose.msra.mxu0 %v359
    %365 = vmatprep.subr.mxu0 0.0
    %366 = vmatpush1.xpose.msra.mxu0 0.0
    %367 = vmatprep.subr.mxu0 0.0
    %368 = vmatpush1.xpose.msra.mxu0 0.0
    %369 = vmatprep.subr.mxu0 0.0
    %370 = vmatpush1.xpose.msra.mxu0 0.0
    %371 = vmatprep.subr.mxu0 0.0
    %372 = vmatpush1.xpose.msra.mxu0 0.0
    %373 = vmatprep.subr.mxu0 0.0
    %374 = vmatpush1.xpose.msra.mxu0 0.0
    %375 = vmatprep.subr.mxu0 0.0
    %376 = vmatpush1.xpose.msra.mxu0 0.0
    %377 = vmatprep.subr.mxu0 0.0
    %378 = vmatpush1.xpose.msra.mxu0 0.0
    %379 = vmatprep.subr.mxu0 0.0
    %380 = vmatpush1.xpose.msra.mxu0 0.0
    %381 = vmatprep.subr.mxu0 0.0
    %382 = vmatpush1.xpose.msra.mxu0 0.0
    %383 = vmatprep.subr.mxu0 0.0
    %384 = vmatpush1.xpose.msra.mxu0 0.0
    %385 = vmatprep.subr.mxu0 0.0
    %386 = vmatpush1.xpose.msra.mxu0 0.0
    %387 = vmatprep.subr.mxu0 0.0
    %388 = vmatpush1.xpose.msra.mxu0 0.0
    %389 = vmatprep.subr.mxu0 0.0
    %390 = vmatpush1.xpose.msra.mxu0 0.0
    %391 = vmatprep.subr.mxu0 0.0
    %392 = vmatpush1.xpose.msra.mxu0 0.0
    %393 = vmatprep.subr.mxu0 0.0
    %394 = vmatpush1.xpose.msra.mxu0 0.0
    %395 = vmatprep.subr.mxu0 0.0
    %396 = vmatpush1.xpose.msra.mxu0 0.0
    %397 = vmatprep.subr.mxu0 0.0
    %398 = vmatpush1.xpose.msra.mxu0 0.0
    %399 = vmatprep.subr.mxu0 0.0
    %400 = vmatpush1.xpose.msra.mxu0 0.0
    %401 = vmatprep.subr.mxu0 0.0
    %402 = vmatpush1.xpose.msra.mxu0 0.0
    %403 = vmatprep.subr.mxu0 0.0
    %404 = vmatpush1.xpose.msra.mxu0 0.0
    %405 = vmatprep.subr.mxu0 0.0
    %406 = vmatpush1.xpose.msra.mxu0 0.0
    %407 = vmatprep.subr.mxu0 0.0
    %408 = vmatpush1.xpose.msra.mxu0 0.0
    %409 = vmatprep.subr.mxu0 0.0
    %410 = vmatpush1.xpose.msra.mxu0 0.0
    %411 = vmatprep.subr.mxu0 0.0
    %412 = vmatpush1.xpose.msra.mxu0 0.0
    %413 = vmatprep.subr.mxu0 0.0
    %414 = vmatpush1.xpose.msra.mxu0 0.0
    %415 = vmatprep.subr.mxu0 0.0
    %416 = vmatpush1.xpose.msra.mxu0 0.0
    %417 = vmatprep.subr.mxu0 0.0
    %418 = vmatpush1.xpose.msra.mxu0 0.0
    %419 = vmatprep.subr.mxu0 0.0
    %420 = vmatpush1.xpose.msra.mxu0 0.0
    %421 = vmatprep.subr.mxu0 0.0
    %422 = vmatpush1.xpose.msra.mxu0 0.0
    %423 = vmatprep.subr.mxu0 0.0
    %424 = vmatpush1.xpose.msra.mxu0 0.0
    %425 = vmatprep.mubr.f32.mxu0 0.0
    %426 = vmatmul.mubr.f32.gmra.mrb[0].mxu0 %v352
    %v427 = vpop.f32.mrb[0].mxu0
    %v428 = vadd.f32 %v93, %v427
    %v429 = vpop.f32.mrb[0].mxu0
    %430 = vmatprep.mubr.f32.mxu0 0.0
    %431 = vmatmul.mubr.f32.gmra.mrb[0].mxu0 %v355
    %v432 = vpop.f32.mrb[0].mxu0
    %v433 = vadd.f32 %v94, %v432
    %v434 = vpop.f32.mrb[0].mxu0
    %435 = vdwg.mxu0
    %v437 = vsel %vm350, %v316, 0
    %v440 = vsel %vm350, %v317, 0
    %v442 = vsel %vm350, %v325, 0
    %v444 = vsel %vm350, %v327, 0
    %446 = vmatprep.subr.mxu0 0.0
    %447 = vmatpush1.xpose.msra.mxu0 %v442
    %448 = vmatprep.subr.mxu0 0.0
    %449 = vmatpush1.xpose.msra.mxu0 %v444
    %450 = vmatprep.subr.mxu0 0.0
    %451 = vmatpush1.xpose.msra.mxu0 0.0
    %452 = vmatprep.subr.mxu0 0.0
    %453 = vmatpush1.xpose.msra.mxu0 0.0
    %454 = vmatprep.subr.mxu0 0.0
    %455 = vmatpush1.xpose.msra.mxu0 0.0
    %456 = vmatprep.subr.mxu0 0.0
    %457 = vmatpush1.xpose.msra.mxu0 0.0
    %458 = vmatprep.subr.mxu0 0.0
    %459 = vmatpush1.xpose.msra.mxu0 0.0
    %460 = vmatprep.subr.mxu0 0.0
    %461 = vmatpush1.xpose.msra.mxu0 0.0
    %462 = vmatprep.subr.mxu0 0.0
    %463 = vmatpush1.xpose.msra.mxu0 0.0
    %464 = vmatprep.subr.mxu0 0.0
    %465 = vmatpush1.xpose.msra.mxu0 0.0
    %466 = vmatprep.subr.mxu0 0.0
    %467 = vmatpush1.xpose.msra.mxu0 0.0
    %468 = vmatprep.subr.mxu0 0.0
    %469 = vmatpush1.xpose.msra.mxu0 0.0
    %470 = vmatprep.subr.mxu0 0.0
    %471 = vmatpush1.xpose.msra.mxu0 0.0
    %472 = vmatprep.subr.mxu0 0.0
    %473 = vmatpush1.xpose.msra.mxu0 0.0
    %474 = vmatprep.subr.mxu0 0.0
    %475 = vmatpush1.xpose.msra.mxu0 0.0
    %476 = vmatprep.subr.mxu0 0.0
    %477 = vmatpush1.xpose.msra.mxu0 0.0
    %478 = vmatprep.subr.mxu0 0.0
    %479 = vmatpush1.xpose.msra.mxu0 0.0
    %480 = vmatprep.subr.mxu0 0.0
    %481 = vmatpush1.xpose.msra.mxu0 0.0
    %482 = vmatprep.subr.mxu0 0.0
    %483 = vmatpush1.xpose.msra.mxu0 0.0
    %484 = vmatprep.subr.mxu0 0.0
    %485 = vmatpush1.xpose.msra.mxu0 0.0
    %486 = vmatprep.subr.mxu0 0.0
    %487 = vmatpush1.xpose.msra.mxu0 0.0
    %488 = vmatprep.subr.mxu0 0.0
    %489 = vmatpush1.xpose.msra.mxu0 0.0
    %490 = vmatprep.subr.mxu0 0.0
    %491 = vmatpush1.xpose.msra.mxu0 0.0
    %492 = vmatprep.subr.mxu0 0.0
    %493 = vmatpush1.xpose.msra.mxu0 0.0
    %494 = vmatprep.subr.mxu0 0.0
    %495 = vmatpush1.xpose.msra.mxu0 0.0
    %496 = vmatprep.subr.mxu0 0.0
    %497 = vmatpush1.xpose.msra.mxu0 0.0
    %498 = vmatprep.subr.mxu0 0.0
    %499 = vmatpush1.xpose.msra.mxu0 0.0
    %500 = vmatprep.subr.mxu0 0.0
    %501 = vmatpush1.xpose.msra.mxu0 0.0
    %502 = vmatprep.subr.mxu0 0.0
    %503 = vmatpush1.xpose.msra.mxu0 0.0
    %504 = vmatprep.subr.mxu0 0.0
    %505 = vmatpush1.xpose.msra.mxu0 0.0
    %506 = vmatprep.subr.mxu0 0.0
    %507 = vmatpush1.xpose.msra.mxu0 0.0
    %508 = vmatprep.subr.mxu0 0.0
    %509 = vmatpush1.xpose.msra.mxu0 0.0
    %510 = vmatprep.mubr.f32.mxu0 0.0
    %511 = vmatmul.mubr.f32.gmra.mrb[0].mxu0 %v437
    %v512 = vpop.f32.mrb[0].mxu0
    %v513 = vadd.f32 %v93, %v512
    %v514 = vpop.f32.mrb[0].mxu0
    %515 = vmatprep.mubr.f32.mxu0 0.0
    %516 = vmatmul.mubr.f32.gmra.mrb[0].mxu0 %v440
    %v517 = vpop.f32.mrb[0].mxu0
    %v518 = vadd.f32 %v94, %v517
    %v519 = vpop.f32.mrb[0].mxu0
    %520 = vdwg.mxu0
    %v522 = vsel %vm350, %v318, 0
    %v525 = vsel %vm350, %v319, 0
    %v527 = vsel %vm350, %v329, 0
    %v529 = vsel %vm350, %v331, 0
    %531 = vmatprep.subr.mxu0 0.0
    %532 = vmatpush1.xpose.msra.mxu0 %v527
    %533 = vmatprep.subr.mxu0 0.0
    %534 = vmatpush1.xpose.msra.mxu0 %v529
    %535 = vmatprep.subr.mxu0 0.0
    %536 = vmatpush1.xpose.msra.mxu0 0.0
    %537 = vmatprep.subr.mxu0 0.0
    %538 = vmatpush1.xpose.msra.mxu0 0.0
    %539 = vmatprep.subr.mxu0 0.0
    %540 = vmatpush1.xpose.msra.mxu0 0.0
    %541 = vmatprep.subr.mxu0 0.0
    %542 = vmatpush1.xpose.msra.mxu0 0.0
    %543 = vmatprep.subr.mxu0 0.0
    %544 = vmatpush1.xpose.msra.mxu0 0.0
    %545 = vmatprep.subr.mxu0 0.0
    %546 = vmatpush1.xpose.msra.mxu0 0.0
    %547 = vmatprep.subr.mxu0 0.0
    %548 = vmatpush1.xpose.msra.mxu0 0.0
    %549 = vmatprep.subr.mxu0 0.0
    %550 = vmatpush1.xpose.msra.mxu0 0.0
    %551 = vmatprep.subr.mxu0 0.0
    %552 = vmatpush1.xpose.msra.mxu0 0.0
    %553 = vmatprep.subr.mxu0 0.0
    %554 = vmatpush1.xpose.msra.mxu0 0.0
    %555 = vmatprep.subr.mxu0 0.0
    %556 = vmatpush1.xpose.msra.mxu0 0.0
    %557 = vmatprep.subr.mxu0 0.0
    %558 = vmatpush1.xpose.msra.mxu0 0.0
    %559 = vmatprep.subr.mxu0 0.0
    %560 = vmatpush1.xpose.msra.mxu0 0.0
    %561 = vmatprep.subr.mxu0 0.0
    %562 = vmatpush1.xpose.msra.mxu0 0.0
    %563 = vmatprep.subr.mxu0 0.0
    %564 = vmatpush1.xpose.msra.mxu0 0.0
    %565 = vmatprep.subr.mxu0 0.0
    %566 = vmatpush1.xpose.msra.mxu0 0.0
    %567 = vmatprep.subr.mxu0 0.0
    %568 = vmatpush1.xpose.msra.mxu0 0.0
    %569 = vmatprep.subr.mxu0 0.0
    %570 = vmatpush1.xpose.msra.mxu0 0.0
    %571 = vmatprep.subr.mxu0 0.0
    %572 = vmatpush1.xpose.msra.mxu0 0.0
    %573 = vmatprep.subr.mxu0 0.0
    %574 = vmatpush1.xpose.msra.mxu0 0.0
    %575 = vmatprep.subr.mxu0 0.0
    %576 = vmatpush1.xpose.msra.mxu0 0.0
    %577 = vmatprep.subr.mxu0 0.0
    %578 = vmatpush1.xpose.msra.mxu0 0.0
    %579 = vmatprep.subr.mxu0 0.0
    %580 = vmatpush1.xpose.msra.mxu0 0.0
    %581 = vmatprep.subr.mxu0 0.0
    %582 = vmatpush1.xpose.msra.mxu0 0.0
    %583 = vmatprep.subr.mxu0 0.0
    %584 = vmatpush1.xpose.msra.mxu0 0.0
    %585 = vmatprep.subr.mxu0 0.0
    %586 = vmatpush1.xpose.msra.mxu0 0.0
    %587 = vmatprep.subr.mxu0 0.0
    %588 = vmatpush1.xpose.msra.mxu0 0.0
    %589 = vmatprep.subr.mxu0 0.0
    %590 = vmatpush1.xpose.msra.mxu0 0.0
    %591 = vmatprep.subr.mxu0 0.0
    %592 = vmatpush1.xpose.msra.mxu0 0.0
    %593 = vmatprep.subr.mxu0 0.0
    %594 = vmatpush1.xpose.msra.mxu0 0.0
    %595 = vmatprep.mubr.f32.mxu0 0.0
    %596 = vmatmul.mubr.f32.gmra.mrb[0].mxu0 %v522
    %v597 = vpop.f32.mrb[0].mxu0
    %v598 = vadd.f32 %v93, %v597
    %v599 = vpop.f32.mrb[0].mxu0
    %600 = vmatprep.mubr.f32.mxu0 0.0
    %601 = vmatmul.mubr.f32.gmra.mrb[0].mxu0 %v525
    %v602 = vpop.f32.mrb[0].mxu0
    %v603 = vadd.f32 %v94, %v602
    %v604 = vpop.f32.mrb[0].mxu0
    %605 = vdwg.mxu0
    %v607 = vsel %vm350, %v320, 0
    %v610 = vsel %vm350, %v321, 0
    %v612 = vsel %vm350, %v333, 0
    %v614 = vsel %vm350, %v335, 0
    %616 = vmatprep.subr.mxu0 0.0
    %617 = vmatpush1.xpose.msra.mxu0 %v612
    %618 = vmatprep.subr.mxu0 0.0
    %619 = vmatpush1.xpose.msra.mxu0 %v614
    %620 = vmatprep.subr.mxu0 0.0
    %621 = vmatpush1.xpose.msra.mxu0 0.0
    %622 = vmatprep.subr.mxu0 0.0
    %623 = vmatpush1.xpose.msra.mxu0 0.0
    %624 = vmatprep.subr.mxu0 0.0
    %625 = vmatpush1.xpose.msra.mxu0 0.0
    %626 = vmatprep.subr.mxu0 0.0
    %627 = vmatpush1.xpose.msra.mxu0 0.0
    %628 = vmatprep.subr.mxu0 0.0
    %629 = vmatpush1.xpose.msra.mxu0 0.0
    %630 = vmatprep.subr.mxu0 0.0
    %631 = vmatpush1.xpose.msra.mxu0 0.0
    %632 = vmatprep.subr.mxu0 0.0
    %633 = vmatpush1.xpose.msra.mxu0 0.0
    %634 = vmatprep.subr.mxu0 0.0
    %635 = vmatpush1.xpose.msra.mxu0 0.0
    %636 = vmatprep.subr.mxu0 0.0
    %637 = vmatpush1.xpose.msra.mxu0 0.0
    %638 = vmatprep.subr.mxu0 0.0
    %639 = vmatpush1.xpose.msra.mxu0 0.0
    %640 = vmatprep.subr.mxu0 0.0
    %641 = vmatpush1.xpose.msra.mxu0 0.0
    %642 = vmatprep.subr.mxu0 0.0
    %643 = vmatpush1.xpose.msra.mxu0 0.0
    %644 = vmatprep.subr.mxu0 0.0
    %645 = vmatpush1.xpose.msra.mxu0 0.0
    %646 = vmatprep.subr.mxu0 0.0
    %647 = vmatpush1.xpose.msra.mxu0 0.0
    %648 = vmatprep.subr.mxu0 0.0
    %649 = vmatpush1.xpose.msra.mxu0 0.0
    %650 = vmatprep.subr.mxu0 0.0
    %651 = vmatpush1.xpose.msra.mxu0 0.0
    %652 = vmatprep.subr.mxu0 0.0
    %653 = vmatpush1.xpose.msra.mxu0 0.0
    %654 = vmatprep.subr.mxu0 0.0
    %655 = vmatpush1.xpose.msra.mxu0 0.0
    %656 = vmatprep.subr.mxu0 0.0
    %657 = vmatpush1.xpose.msra.mxu0 0.0
    %658 = vmatprep.subr.mxu0 0.0
    %659 = vmatpush1.xpose.msra.mxu0 0.0
    %660 = vmatprep.subr.mxu0 0.0
    %661 = vmatpush1.xpose.msra.mxu0 0.0
    %662 = vmatprep.subr.mxu0 0.0
    %663 = vmatpush1.xpose.msra.mxu0 0.0
    %664 = vmatprep.subr.mxu0 0.0
    %665 = vmatpush1.xpose.msra.mxu0 0.0
    %666 = vmatprep.subr.mxu0 0.0
    %667 = vmatpush1.xpose.msra.mxu0 0.0
    %668 = vmatprep.subr.mxu0 0.0
    %669 = vmatpush1.xpose.msra.mxu0 0.0
    %670 = vmatprep.subr.mxu0 0.0
    %671 = vmatpush1.xpose.msra.mxu0 0.0
    %672 = vmatprep.subr.mxu0 0.0
    %673 = vmatpush1.xpose.msra.mxu0 0.0
    %674 = vmatprep.subr.mxu0 0.0
    %675 = vmatpush1.xpose.msra.mxu0 0.0
    %676 = vmatprep.subr.mxu0 0.0
    %677 = vmatpush1.xpose.msra.mxu0 0.0
    %678 = vmatprep.subr.mxu0 0.0
    %679 = vmatpush1.xpose.msra.mxu0 0.0
    %680 = vmatprep.mubr.f32.mxu0 0.0
    %681 = vmatmul.mubr.f32.gmra.mrb[0].mxu0 %v607
    %v682 = vpop.f32.mrb[0].mxu0
    %v683 = vadd.f32 %v93, %v682
    %v684 = vpop.f32.mrb[0].mxu0
    %685 = vmatprep.mubr.f32.mxu0 0.0
    %686 = vmatmul.mubr.f32.gmra.mrb[0].mxu0 %v610
    %v687 = vpop.f32.mrb[0].mxu0
    %v688 = vadd.f32 %v94, %v687
    %v689 = vpop.f32.mrb[0].mxu0
    %690 = vdwg.mxu0
    %vm691 = vcmask 130048
    %v692 = vsel %vm691, %v428, -inf
    %693 = vmax.xlane.f32.xlu0 %v692
    %v694 = vpop.xlane.xlu0 %693
    %v695 = vsel %vm691, %v433, -inf
    %696 = vmax.xlane.f32.xlu0 %v695
    %v697 = vpop.xlane.xlu0 %696
    %v698 = vsel %vm691, %v513, -inf
    %699 = vmax.xlane.f32.xlu0 %v698
    %v700 = vpop.xlane.xlu0 %699
    %v701 = vsel %vm691, %v518, -inf
    %702 = vmax.xlane.f32.xlu0 %v701
    %v703 = vpop.xlane.xlu0 %702
    %v704 = vsel %vm691, %v598, -inf
    %705 = vmax.xlane.f32.xlu0 %v704
    %v706 = vpop.xlane.xlu0 %705
    %v707 = vsel %vm691, %v603, -inf
    %708 = vmax.xlane.f32.xlu0 %v707
    %v709 = vpop.xlane.xlu0 %708
    %v710 = vsel %vm691, %v683, -inf
    %711 = vmax.xlane.f32.xlu0 %v710
    %v712 = vpop.xlane.xlu0 %711
    %v713 = vsel %vm691, %v688, -inf
    %714 = vmax.xlane.f32.xlu0 %v713
    %v715 = vpop.xlane.xlu0 %714
    %v716 = vsub.f32 %v428, %v694
    %v717 = vsub.f32 %v433, %v697
    %v718 = vsub.f32 %v513, %v700
    %v719 = vsub.f32 %v518, %v703
    %v720 = vsub.f32 %v598, %v706
    %v721 = vsub.f32 %v603, %v709
    %v722 = vsub.f32 %v683, %v712
    %v723 = vsub.f32 %v688, %v715
    %v724 = vmul.f32 %v716, 1.442695
    %v725 = vpow.pop %v724
    %v726 = vmul.f32 %v717, 1.442695
    %v727 = vpow.pop %v726
    %v728 = vmul.f32 %v718, 1.442695
    %v729 = vpow.pop %v728
    %v730 = vmul.f32 %v719, 1.442695
    %v731 = vpow.pop %v730
    %v732 = vmul.f32 %v720, 1.442695
    %v733 = vpow.pop %v732
    %v734 = vmul.f32 %v721, 1.442695
    %v735 = vpow.pop %v734
    %v736 = vmul.f32 %v722, 1.442695
    %v737 = vpow.pop %v736
    %v738 = vmul.f32 %v723, 1.442695
    %v739 = vpow.pop %v738
    %v740 = vsel %vm691, %v725, 0.0
    %741 = vadd.xlane.f32.xlu0 %v740
    %v742 = vpop.xlane.xlu0 %741
    %v743 = vsel %vm691, %v727, 0.0
    %744 = vadd.xlane.f32.xlu0 %v743
    %v745 = vpop.xlane.xlu0 %744
    %v746 = vsel %vm691, %v729, 0.0
    %747 = vadd.xlane.f32.xlu0 %v746
    %v748 = vpop.xlane.xlu0 %747
    %v749 = vsel %vm691, %v731, 0.0
    %750 = vadd.xlane.f32.xlu0 %v749
    %v751 = vpop.xlane.xlu0 %750
    %v752 = vsel %vm691, %v733, 0.0
    %753 = vadd.xlane.f32.xlu0 %v752
    %v754 = vpop.xlane.xlu0 %753
    %v755 = vsel %vm691, %v735, 0.0
    %756 = vadd.xlane.f32.xlu0 %v755
    %v757 = vpop.xlane.xlu0 %756
    %v758 = vsel %vm691, %v737, 0.0
    %759 = vadd.xlane.f32.xlu0 %v758
    %v760 = vpop.xlane.xlu0 %759
    %v761 = vsel %vm691, %v739, 0.0
    %762 = vadd.xlane.f32.xlu0 %v761
    %v763 = vpop.xlane.xlu0 %762
    %v764 = vrcp.pop %v742
    %v765 = vrcp.pop %v745
    %v766 = vrcp.pop %v748
    %v767 = vrcp.pop %v751
    %v768 = vrcp.pop %v754
    %v769 = vrcp.pop %v757
    %v770 = vrcp.pop %v760
    %v771 = vrcp.pop %v763
    %v772 = vmul.f32 %v725, %v764
    %v773 = vmul.f32 %v727, %v765
    %v774 = vmul.f32 %v729, %v766
    %v775 = vmul.f32 %v731, %v767
    %v776 = vmul.f32 %v733, %v768
    %v777 = vmul.f32 %v735, %v769
    %v778 = vmul.f32 %v737, %v770
    %v779 = vmul.f32 %v739, %v771
    %780 = vrot.lane.b32.xlu0 %v292, 96
    %v781 = vpop.permute.xlu0 %780
    %782 = vrot.lane.b32.xlu0 %v293, 96
    %v783 = vpop.permute.xlu0 %782
    %v787 = vsel %vm691, %v772, 0
    %v790 = vsel %vm691, %v773, 0
    %792 = vmatprep.subr.mxu0 0.0
    %793 = vmatpush1.msra.mxu0 %v781
    %794 = vmatprep.subr.mxu0 0.0
    %795 = vmatpush1.msra.mxu0 %v783
    %796 = vmatprep.subr.mxu0 0.0
    %797 = vmatpush1.msra.mxu0 0.0
    %798 = vmatprep.subr.mxu0 0.0
    %799 = vmatpush1.msra.mxu0 0.0
    %800 = vmatprep.subr.mxu0 0.0
    %801 = vmatpush1.msra.mxu0 0.0
    %802 = vmatprep.subr.mxu0 0.0
    %803 = vmatpush1.msra.mxu0 0.0
    %804 = vmatprep.subr.mxu0 0.0
    %805 = vmatpush1.msra.mxu0 0.0
    %806 = vmatprep.subr.mxu0 0.0
    %807 = vmatpush1.msra.mxu0 0.0
    %808 = vmatprep.subr.mxu0 0.0
    %809 = vmatpush1.msra.mxu0 0.0
    %810 = vmatprep.subr.mxu0 0.0
    %811 = vmatpush1.msra.mxu0 0.0
    %812 = vmatprep.subr.mxu0 0.0
    %813 = vmatpush1.msra.mxu0 0.0
    %814 = vmatprep.subr.mxu0 0.0
    %815 = vmatpush1.msra.mxu0 0.0
    %816 = vmatprep.subr.mxu0 0.0
    %817 = vmatpush1.msra.mxu0 0.0
    %818 = vmatprep.subr.mxu0 0.0
    %819 = vmatpush1.msra.mxu0 0.0
    %820 = vmatprep.subr.mxu0 0.0
    %821 = vmatpush1.msra.mxu0 0.0
    %822 = vmatprep.subr.mxu0 0.0
    %823 = vmatpush1.msra.mxu0 0.0
    %824 = vmatprep.subr.mxu0 0.0
    %825 = vmatpush1.msra.mxu0 0.0
    %826 = vmatprep.subr.mxu0 0.0
    %827 = vmatpush1.msra.mxu0 0.0
    %828 = vmatprep.subr.mxu0 0.0
    %829 = vmatpush1.msra.mxu0 0.0
    %830 = vmatprep.subr.mxu0 0.0
    %831 = vmatpush1.msra.mxu0 0.0
    %832 = vmatprep.subr.mxu0 0.0
    %833 = vmatpush1.msra.mxu0 0.0
    %834 = vmatprep.subr.mxu0 0.0
    %835 = vmatpush1.msra.mxu0 0.0
    %836 = vmatprep.subr.mxu0 0.0
    %837 = vmatpush1.msra.mxu0 0.0
    %838 = vmatprep.subr.mxu0 0.0
    %839 = vmatpush1.msra.mxu0 0.0
    %840 = vmatprep.subr.mxu0 0.0
    %841 = vmatpush1.msra.mxu0 0.0
    %842 = vmatprep.subr.mxu0 0.0
    %843 = vmatpush1.msra.mxu0 0.0
    %844 = vmatprep.subr.mxu0 0.0
    %845 = vmatpush1.msra.mxu0 0.0
    %846 = vmatprep.subr.mxu0 0.0
    %847 = vmatpush1.msra.mxu0 0.0
    %848 = vmatprep.subr.mxu0 0.0
    %849 = vmatpush1.msra.mxu0 0.0
    %850 = vmatprep.subr.mxu0 0.0
    %851 = vmatpush1.msra.mxu0 0.0
    %852 = vmatprep.subr.mxu0 0.0
    %853 = vmatpush1.msra.mxu0 0.0
    %854 = vmatprep.subr.mxu0 0.0
    %855 = vmatpush1.msra.mxu0 0.0
    %856 = vmatprep.mubr.f32.mxu0 0.0
    %857 = vmatmul.mubr.f32.gmra.mrb[0].mxu0 %v787
    %v858 = vpop.f32.mrb[0].mxu0
    %v859 = vadd.f32 0.0, %v858
    %v860 = vpop.f32.mrb[0].mxu0
    %861 = vmatprep.mubr.f32.mxu0 0.0
    %862 = vmatmul.mubr.f32.gmra.mrb[0].mxu0 %v790
    %v863 = vpop.f32.mrb[0].mxu0
    %v864 = vadd.f32 0.0, %v863
    %v865 = vpop.f32.mrb[0].mxu0
    %866 = vdwg.mxu0
    %867 = vrot.lane.b32.xlu0 %v339, 96
    %v868 = vpop.permute.xlu0 %867
    %869 = vrot.lane.b32.xlu0 %v341, 96
    %v870 = vpop.permute.xlu0 %869
    %v874 = vsel %vm691, %v774, 0
    %v877 = vsel %vm691, %v775, 0
    %879 = vmatprep.subr.mxu0 0.0
    %880 = vmatpush1.msra.mxu0 %v868
    %881 = vmatprep.subr.mxu0 0.0
    %882 = vmatpush1.msra.mxu0 %v870
    %883 = vmatprep.subr.mxu0 0.0
    %884 = vmatpush1.msra.mxu0 0.0
    %885 = vmatprep.subr.mxu0 0.0
    %886 = vmatpush1.msra.mxu0 0.0
    %887 = vmatprep.subr.mxu0 0.0
    %888 = vmatpush1.msra.mxu0 0.0
    %889 = vmatprep.subr.mxu0 0.0
    %890 = vmatpush1.msra.mxu0 0.0
    %891 = vmatprep.subr.mxu0 0.0
    %892 = vmatpush1.msra.mxu0 0.0
    %893 = vmatprep.subr.mxu0 0.0
    %894 = vmatpush1.msra.mxu0 0.0
    %895 = vmatprep.subr.mxu0 0.0
    %896 = vmatpush1.msra.mxu0 0.0
    %897 = vmatprep.subr.mxu0 0.0
    %898 = vmatpush1.msra.mxu0 0.0
    %899 = vmatprep.subr.mxu0 0.0
    %900 = vmatpush1.msra.mxu0 0.0
    %901 = vmatprep.subr.mxu0 0.0
    %902 = vmatpush1.msra.mxu0 0.0
    %903 = vmatprep.subr.mxu0 0.0
    %904 = vmatpush1.msra.mxu0 0.0
    %905 = vmatprep.subr.mxu0 0.0
    %906 = vmatpush1.msra.mxu0 0.0
    %907 = vmatprep.subr.mxu0 0.0
    %908 = vmatpush1.msra.mxu0 0.0
    %909 = vmatprep.subr.mxu0 0.0
    %910 = vmatpush1.msra.mxu0 0.0
    %911 = vmatprep.subr.mxu0 0.0
    %912 = vmatpush1.msra.mxu0 0.0
    %913 = vmatprep.subr.mxu0 0.0
    %914 = vmatpush1.msra.mxu0 0.0
    %915 = vmatprep.subr.mxu0 0.0
    %916 = vmatpush1.msra.mxu0 0.0
    %917 = vmatprep.subr.mxu0 0.0
    %918 = vmatpush1.msra.mxu0 0.0
    %919 = vmatprep.subr.mxu0 0.0
    %920 = vmatpush1.msra.mxu0 0.0
    %921 = vmatprep.subr.mxu0 0.0
    %922 = vmatpush1.msra.mxu0 0.0
    %923 = vmatprep.subr.mxu0 0.0
    %924 = vmatpush1.msra.mxu0 0.0
    %925 = vmatprep.subr.mxu0 0.0
    %926 = vmatpush1.msra.mxu0 0.0
    %927 = vmatprep.subr.mxu0 0.0
    %928 = vmatpush1.msra.mxu0 0.0
    %929 = vmatprep.subr.mxu0 0.0
    %930 = vmatpush1.msra.mxu0 0.0
    %931 = vmatprep.subr.mxu0 0.0
    %932 = vmatpush1.msra.mxu0 0.0
    %933 = vmatprep.subr.mxu0 0.0
    %934 = vmatpush1.msra.mxu0 0.0
    %935 = vmatprep.subr.mxu0 0.0
    %936 = vmatpush1.msra.mxu0 0.0
    %937 = vmatprep.subr.mxu0 0.0
    %938 = vmatpush1.msra.mxu0 0.0
    %939 = vmatprep.subr.mxu0 0.0
    %940 = vmatpush1.msra.mxu0 0.0
    %941 = vmatprep.subr.mxu0 0.0
    %942 = vmatpush1.msra.mxu0 0.0
    %943 = vmatprep.mubr.f32.mxu0 0.0
    %944 = vmatmul.mubr.f32.gmra.mrb[0].mxu0 %v874
    %v945 = vpop.f32.mrb[0].mxu0
    %v946 = vadd.f32 0.0, %v945
    %v947 = vpop.f32.mrb[0].mxu0
    %948 = vmatprep.mubr.f32.mxu0 0.0
    %949 = vmatmul.mubr.f32.gmra.mrb[0].mxu0 %v877
    %v950 = vpop.f32.mrb[0].mxu0
    %v951 = vadd.f32 0.0, %v950
    %v952 = vpop.f32.mrb[0].mxu0
    %953 = vdwg.mxu0
    %954 = vrot.lane.b32.xlu0 %v343, 96
    %v955 = vpop.permute.xlu0 %954
    %956 = vrot.lane.b32.xlu0 %v345, 96
    %v957 = vpop.permute.xlu0 %956
    %v961 = vsel %vm691, %v776, 0
    %v964 = vsel %vm691, %v777, 0
    %966 = vmatprep.subr.mxu0 0.0
    %967 = vmatpush1.msra.mxu0 %v955
    %968 = vmatprep.subr.mxu0 0.0
    %969 = vmatpush1.msra.mxu0 %v957
    %970 = vmatprep.subr.mxu0 0.0
    %971 = vmatpush1.msra.mxu0 0.0
    %972 = vmatprep.subr.mxu0 0.0
    %973 = vmatpush1.msra.mxu0 0.0
    %974 = vmatprep.subr.mxu0 0.0
    %975 = vmatpush1.msra.mxu0 0.0
    %976 = vmatprep.subr.mxu0 0.0
    %977 = vmatpush1.msra.mxu0 0.0
    %978 = vmatprep.subr.mxu0 0.0
    %979 = vmatpush1.msra.mxu0 0.0
    %980 = vmatprep.subr.mxu0 0.0
    %981 = vmatpush1.msra.mxu0 0.0
    %982 = vmatprep.subr.mxu0 0.0
    %983 = vmatpush1.msra.mxu0 0.0
    %984 = vmatprep.subr.mxu0 0.0
    %985 = vmatpush1.msra.mxu0 0.0
    %986 = vmatprep.subr.mxu0 0.0
    %987 = vmatpush1.msra.mxu0 0.0
    %988 = vmatprep.subr.mxu0 0.0
    %989 = vmatpush1.msra.mxu0 0.0
    %990 = vmatprep.subr.mxu0 0.0
    %991 = vmatpush1.msra.mxu0 0.0
    %992 = vmatprep.subr.mxu0 0.0
    %993 = vmatpush1.msra.mxu0 0.0
    %994 = vmatprep.subr.mxu0 0.0
    %995 = vmatpush1.msra.mxu0 0.0
    %996 = vmatprep.subr.mxu0 0.0
    %997 = vmatpush1.msra.mxu0 0.0
    %998 = vmatprep.subr.mxu0 0.0
    %999 = vmatpush1.msra.mxu0 0.0
    %1000 = vmatprep.subr.mxu0 0.0
    %1001 = vmatpush1.msra.mxu0 0.0
    %1002 = vmatprep.subr.mxu0 0.0
    %1003 = vmatpush1.msra.mxu0 0.0
    %1004 = vmatprep.subr.mxu0 0.0
    %1005 = vmatpush1.msra.mxu0 0.0
    %1006 = vmatprep.subr.mxu0 0.0
    %1007 = vmatpush1.msra.mxu0 0.0
    %1008 = vmatprep.subr.mxu0 0.0
    %1009 = vmatpush1.msra.mxu0 0.0
    %1010 = vmatprep.subr.mxu0 0.0
    %1011 = vmatpush1.msra.mxu0 0.0
    %1012 = vmatprep.subr.mxu0 0.0
    %1013 = vmatpush1.msra.mxu0 0.0
    %1014 = vmatprep.subr.mxu0 0.0
    %1015 = vmatpush1.msra.mxu0 0.0
    %1016 = vmatprep.subr.mxu0 0.0
    %1017 = vmatpush1.msra.mxu0 0.0
    %1018 = vmatprep.subr.mxu0 0.0
    %1019 = vmatpush1.msra.mxu0 0.0
    %1020 = vmatprep.subr.mxu0 0.0
    %1021 = vmatpush1.msra.mxu0 0.0
    %1022 = vmatprep.subr.mxu0 0.0
    %1023 = vmatpush1.msra.mxu0 0.0
    %1024 = vmatprep.subr.mxu0 0.0
    %1025 = vmatpush1.msra.mxu0 0.0
    %1026 = vmatprep.subr.mxu0 0.0
    %1027 = vmatpush1.msra.mxu0 0.0
    %1028 = vmatprep.subr.mxu0 0.0
    %1029 = vmatpush1.msra.mxu0 0.0
    %1030 = vmatprep.mubr.f32.mxu0 0.0
    %1031 = vmatmul.mubr.f32.gmra.mrb[0].mxu0 %v961
    %v1032 = vpop.f32.mrb[0].mxu0
    %v1033 = vadd.f32 0.0, %v1032
    %v1034 = vpop.f32.mrb[0].mxu0
    %1035 = vmatprep.mubr.f32.mxu0 0.0
    %1036 = vmatmul.mubr.f32.gmra.mrb[0].mxu0 %v964
    %v1037 = vpop.f32.mrb[0].mxu0
    %v1038 = vadd.f32 0.0, %v1037
    %v1039 = vpop.f32.mrb[0].mxu0
    %1040 = vdwg.mxu0
    %1041 = vrot.lane.b32.xlu0 %v347, 96
    %v1042 = vpop.permute.xlu0 %1041
    %1043 = vrot.lane.b32.xlu0 %v349, 96
    %v1044 = vpop.permute.xlu0 %1043
    %v1048 = vsel %vm691, %v778, 0
    %v1051 = vsel %vm691, %v779, 0
    %1053 = vmatprep.subr.mxu0 0.0
    %1054 = vmatpush1.msra.mxu0 %v1042
    %1055 = vmatprep.subr.mxu0 0.0
    %1056 = vmatpush1.msra.mxu0 %v1044
    %1057 = vmatprep.subr.mxu0 0.0
    %1058 = vmatpush1.msra.mxu0 0.0
    %1059 = vmatprep.subr.mxu0 0.0
    %1060 = vmatpush1.msra.mxu0 0.0
    %1061 = vmatprep.subr.mxu0 0.0
    %1062 = vmatpush1.msra.mxu0 0.0
    %1063 = vmatprep.subr.mxu0 0.0
    %1064 = vmatpush1.msra.mxu0 0.0
    %1065 = vmatprep.subr.mxu0 0.0
    %1066 = vmatpush1.msra.mxu0 0.0
    %1067 = vmatprep.subr.mxu0 0.0
    %1068 = vmatpush1.msra.mxu0 0.0
    %1069 = vmatprep.subr.mxu0 0.0
    %1070 = vmatpush1.msra.mxu0 0.0
    %1071 = vmatprep.subr.mxu0 0.0
    %1072 = vmatpush1.msra.mxu0 0.0
    %1073 = vmatprep.subr.mxu0 0.0
    %1074 = vmatpush1.msra.mxu0 0.0
    %1075 = vmatprep.subr.mxu0 0.0
    %1076 = vmatpush1.msra.mxu0 0.0
    %1077 = vmatprep.subr.mxu0 0.0
    %1078 = vmatpush1.msra.mxu0 0.0
    %1079 = vmatprep.subr.mxu0 0.0
    %1080 = vmatpush1.msra.mxu0 0.0
    %1081 = vmatprep.subr.mxu0 0.0
    %1082 = vmatpush1.msra.mxu0 0.0
    %1083 = vmatprep.subr.mxu0 0.0
    %1084 = vmatpush1.msra.mxu0 0.0
    %1085 = vmatprep.subr.mxu0 0.0
    %1086 = vmatpush1.msra.mxu0 0.0
    %1087 = vmatprep.subr.mxu0 0.0
    %1088 = vmatpush1.msra.mxu0 0.0
    %1089 = vmatprep.subr.mxu0 0.0
    %1090 = vmatpush1.msra.mxu0 0.0
    %1091 = vmatprep.subr.mxu0 0.0
    %1092 = vmatpush1.msra.mxu0 0.0
    %1093 = vmatprep.subr.mxu0 0.0
    %1094 = vmatpush1.msra.mxu0 0.0
    %1095 = vmatprep.subr.mxu0 0.0
    %1096 = vmatpush1.msra.mxu0 0.0
    %1097 = vmatprep.subr.mxu0 0.0
    %1098 = vmatpush1.msra.mxu0 0.0
    %1099 = vmatprep.subr.mxu0 0.0
    %1100 = vmatpush1.msra.mxu0 0.0
    %1101 = vmatprep.subr.mxu0 0.0
    %1102 = vmatpush1.msra.mxu0 0.0
    %1103 = vmatprep.subr.mxu0 0.0
    %1104 = vmatpush1.msra.mxu0 0.0
    %1105 = vmatprep.subr.mxu0 0.0
    %1106 = vmatpush1.msra.mxu0 0.0
    %1107 = vmatprep.subr.mxu0 0.0
    %1108 = vmatpush1.msra.mxu0 0.0
    %1109 = vmatprep.subr.mxu0 0.0
    %1110 = vmatpush1.msra.mxu0 0.0
    %1111 = vmatprep.subr.mxu0 0.0
    %1112 = vmatpush1.msra.mxu0 0.0
    %1113 = vmatprep.subr.mxu0 0.0
    %1114 = vmatpush1.msra.mxu0 0.0
    %1115 = vmatprep.subr.mxu0 0.0
    %1116 = vmatpush1.msra.mxu0 0.0
    %1117 = vmatprep.mubr.f32.mxu0 0.0
    %1118 = vmatmul.mubr.f32.gmra.mrb[0].mxu0 %v1048
    %v1119 = vpop.f32.mrb[0].mxu0
    %v1120 = vadd.f32 0.0, %v1119
    %v1121 = vpop.f32.mrb[0].mxu0
    %1122 = vmatprep.mubr.f32.mxu0 0.0
    %1123 = vmatmul.mubr.f32.gmra.mrb[0].mxu0 %v1051
    %v1124 = vpop.f32.mrb[0].mxu0
    %v1125 = vadd.f32 0.0, %v1124
    %v1126 = vpop.f32.mrb[0].mxu0
    %1127 = vdwg.mxu0
    %1130 = vrot.lane.b32.xlu0 %v946, 8
    %v1131 = vpop.permute.xlu0 %1130
    %1132 = vrot.lane.b32.xlu0 %v951, 8
    %v1133 = vpop.permute.xlu0 %1132
    %1138 = vrot.lane.b32.xlu0 %v1033, 16
    %v1139 = vpop.permute.xlu0 %1138
    %1140 = vrot.lane.b32.xlu0 %v1038, 16
    %v1141 = vpop.permute.xlu0 %1140
    %1146 = vrot.lane.b32.xlu0 %v1120, 24
    %v1147 = vpop.permute.xlu0 %1146
    %1148 = vrot.lane.b32.xlu0 %v1125, 24
    %v1149 = vpop.permute.xlu0 %1148
    %v1152 = vsel %vm350, %v859, %v1131
    %v1153 = vsel %vm350, %v864, %v1133
    %v1154 = vsel %vm691, %v1152, %v1139
    %v1155 = vsel %vm691, %v1153, %v1141
    %vm1156 = vcmask 195584
    %v1157 = vsel %vm1156, %v1154, %v1147
    %v1158 = vsel %vm1156, %v1155, %v1149
    %v1159 = vld [vmem:[#allocation7] sm:$0xff]
    %v1160 = vld [vmem:[#allocation7 + $0x18] sm:$0xff]
    %v1161 = vld [vmem:[#allocation7 + $0x30] sm:$0xff]
    %v1162 = vld [vmem:[#allocation7 + $0x48] sm:$0xff]
    %v1163 = vlaneseq
    %v1164 = vshrl.u32 %v1163, 7
    %v1165 = vsub.s32 3, %v1164
    %v1166 = vrot.slane %v77, %v1165
    %1171 = vrot.lane.b32.xlu0 %v1159, 32
    %v1172 = vpop.permute.xlu0 %1171
    %1173 = vrot.lane.b32.xlu0 %v1160, 32
    %v1174 = vpop.permute.xlu0 %1173
    %1175 = vrot.lane.b32.xlu0 %v1161, 32
    %v1176 = vpop.permute.xlu0 %1175
    %1177 = vrot.lane.b32.xlu0 %v1162, 32
    %v1178 = vpop.permute.xlu0 %1177
    %v1184 = vsel %vm105, %v1157, 0
    %v1187 = vsel %vm105, %v1158, 0
    %1189 = vmatprep.subr.mxu0 0.0
    %1190 = vmatpush1.msra.mxu0 %v1172
    %1191 = vmatprep.subr.mxu0 0.0
    %1192 = vmatpush1.msra.mxu0 %v1174
    %1193 = vmatprep.subr.mxu0 0.0
    %1194 = vmatpush1.msra.mxu0 %v1176
    %1195 = vmatprep.subr.mxu0 0.0
    %1196 = vmatpush1.msra.mxu0 %v1178
    %1197 = vmatprep.subr.mxu0 0.0
    %1198 = vmatpush1.msra.mxu0 0.0
    %1199 = vmatprep.subr.mxu0 0.0
    %1200 = vmatpush1.msra.mxu0 0.0
    %1201 = vmatprep.subr.mxu0 0.0
    %1202 = vmatpush1.msra.mxu0 0.0
    %1203 = vmatprep.subr.mxu0 0.0
    %1204 = vmatpush1.msra.mxu0 0.0
    %1205 = vmatprep.subr.mxu0 0.0
    %1206 = vmatpush1.msra.mxu0 0.0
    %1207 = vmatprep.subr.mxu0 0.0
    %1208 = vmatpush1.msra.mxu0 0.0
    %1209 = vmatprep.subr.mxu0 0.0
    %1210 = vmatpush1.msra.mxu0 0.0
    %1211 = vmatprep.subr.mxu0 0.0
    %1212 = vmatpush1.msra.mxu0 0.0
    %1213 = vmatprep.subr.mxu0 0.0
    %1214 = vmatpush1.msra.mxu0 0.0
    %1215 = vmatprep.subr.mxu0 0.0
    %1216 = vmatpush1.msra.mxu0 0.0
    %1217 = vmatprep.subr.mxu0 0.0
    %1218 = vmatpush1.msra.mxu0 0.0
    %1219 = vmatprep.subr.mxu0 0.0
    %1220 = vmatpush1.msra.mxu0 0.0
    %1221 = vmatprep.subr.mxu0 0.0
    %1222 = vmatpush1.msra.mxu0 0.0
    %1223 = vmatprep.subr.mxu0 0.0
    %1224 = vmatpush1.msra.mxu0 0.0
    %1225 = vmatprep.subr.mxu0 0.0
    %1226 = vmatpush1.msra.mxu0 0.0
    %1227 = vmatprep.subr.mxu0 0.0
    %1228 = vmatpush1.msra.mxu0 0.0
    %1229 = vmatprep.subr.mxu0 0.0
    %1230 = vmatpush1.msra.mxu0 0.0
    %1231 = vmatprep.subr.mxu0 0.0
    %1232 = vmatpush1.msra.mxu0 0.0
    %1233 = vmatprep.subr.mxu0 0.0
    %1234 = vmatpush1.msra.mxu0 0.0
    %1235 = vmatprep.subr.mxu0 0.0
    %1236 = vmatpush1.msra.mxu0 0.0
    %1237 = vmatprep.subr.mxu0 0.0
    %1238 = vmatpush1.msra.mxu0 0.0
    %1239 = vmatprep.subr.mxu0 0.0
    %1240 = vmatpush1.msra.mxu0 0.0
    %1241 = vmatprep.subr.mxu0 0.0
    %1242 = vmatpush1.msra.mxu0 0.0
    %1243 = vmatprep.subr.mxu0 0.0
    %1244 = vmatpush1.msra.mxu0 0.0
    %1245 = vmatprep.subr.mxu0 0.0
    %1246 = vmatpush1.msra.mxu0 0.0
    %1247 = vmatprep.subr.mxu0 0.0
    %1248 = vmatpush1.msra.mxu0 0.0
    %1249 = vmatprep.subr.mxu0 0.0
    %1250 = vmatpush1.msra.mxu0 0.0
    %1251 = vmatprep.subr.mxu0 0.0
    %1252 = vmatpush1.msra.mxu0 0.0
    %1253 = vmatprep.mubr.f32.mxu0 0.0
    %1254 = vmatmul.mubr.f32.gmra.mrb[0].mxu0 %v1184
    %v1255 = vpop.f32.mrb[0].mxu0
    %v1256 = vadd.f32 %v1166, %v1255
    %v1257 = vpop.f32.mrb[0].mxu0
    %1258 = vmatprep.mubr.f32.mxu0 0.0
    %1259 = vmatmul.mubr.f32.gmra.mrb[0].mxu0 %v1187
    %v1260 = vpop.f32.mrb[0].mxu0
    %v1261 = vadd.f32 %v1166, %v1260
    %v1262 = vpop.f32.mrb[0].mxu0
    %1263 = vdwg.mxu0
    %v1264 = vadd.f32 %v73, %v1256
    %v1265 = vadd.f32 %v74, %v1261
    %v1266 = vsel %vm105, %v1264, 0.0
    %1267 = vadd.xlane.f32.xlu0 %v1266
    %v1268 = vpop.xlane.xlu0 %1267
    %v1269 = vsel %vm105, %v1265, 0.0
    %1270 = vadd.xlane.f32.xlu0 %v1269
    %v1271 = vpop.xlane.xlu0 %1270
    %v1272 = vrcp.pop 32.0
    %v1273 = vmul.f32 %v1268, %v1272
    %v1274 = vmul.f32 %v1271, %v1272
    %v1275 = vsub.f32 %v1264, %v1273
    %v1276 = vsub.f32 %v1265, %v1274
    %v1277 = vmul.f32 %v1275, %v1275
    %v1278 = vmul.f32 %v1276, %v1276
    %v1279 = vsel %vm105, %v1277, 0.0
    %1280 = vadd.xlane.f32.xlu0 %v1279
    %v1281 = vpop.xlane.xlu0 %1280
    %v1282 = vsel %vm105, %v1278, 0.0
    %1283 = vadd.xlane.f32.xlu0 %v1282
    %v1284 = vpop.xlane.xlu0 %1283
    %v1285 = vmul.f32 %v1281, %v1272
    %v1286 = vmul.f32 %v1284, %v1272
    %v1287 = vadd.f32 %v1285, 1e-05
    %v1288 = vadd.f32 %v1286, 1e-05
    %v1289 = vrsqrt.pop %v1287
    %v1290 = vrsqrt.pop %v1288
    %v1291 = vmul.f32 %v1275, %v1289
    %v1292 = vmul.f32 %v1276, %v1290
    %v1293 = vlaneseq
    %v1294 = vshrl.u32 %v1293, 7
    %v1295 = vsub.s32 2, %v1294
    %v1296 = vrot.slane %v78, %v1295
    %v1297 = vmul.f32 %v1291, %v1296
    %v1298 = vmul.f32 %v1292, %v1296
    %v1299 = vlaneseq
    %v1300 = vshrl.u32 %v1299, 7
    %v1301 = vsub.s32 3, %v1300
    %v1302 = vrot.slane %v78, %v1301
    %v1303 = vadd.f32 %v1297, %v1302
    %v1304 = vadd.f32 %v1298, %v1302
    %v1305 = vld [vmem:[#allocation7 + $0x8] sm:$0xff]
    %v1306 = vld [vmem:[#allocation7 + $0x20] sm:$0xff]
    %v1307 = vld [vmem:[#allocation7 + $0x38] sm:$0xff]
    %v1308 = vld [vmem:[#allocation7 + $0x50] sm:$0xff]
    %v1309 = vlaneseq
    %v1310 = vshrl.u32 %v1309, 7
    %v1311 = vsub.s32 4, %v1310
    %v1312 = vrot.slane %v77, %v1311
    %v1314 = vsel %vm105, %v1303, 0
    %v1317 = vsel %vm105, %v1304, 0
    %1319 = vmatprep.subr.mxu0 0.0
    %1320 = vmatpush1.msra.mxu0 %v1305
    %1321 = vmatprep.subr.mxu0 0.0
    %1322 = vmatpush1.msra.mxu0 %v1306
    %1323 = vmatprep.subr.mxu0 0.0
    %1324 = vmatpush1.msra.mxu0 %v1307
    %1325 = vmatprep.subr.mxu0 0.0
    %1326 = vmatpush1.msra.mxu0 %v1308
    %1327 = vmatprep.subr.mxu0 0.0
    %1328 = vmatpush1.msra.mxu0 0.0
    %1329 = vmatprep.subr.mxu0 0.0
    %1330 = vmatpush1.msra.mxu0 0.0
    %1331 = vmatprep.subr.mxu0 0.0
    %1332 = vmatpush1.msra.mxu0 0.0
    %1333 = vmatprep.subr.mxu0 0.0
    %1334 = vmatpush1.msra.mxu0 0.0
    %1335 = vmatprep.subr.mxu0 0.0
    %1336 = vmatpush1.msra.mxu0 0.0
    %1337 = vmatprep.subr.mxu0 0.0
    %1338 = vmatpush1.msra.mxu0 0.0
    %1339 = vmatprep.subr.mxu0 0.0
    %1340 = vmatpush1.msra.mxu0 0.0
    %1341 = vmatprep.subr.mxu0 0.0
    %1342 = vmatpush1.msra.mxu0 0.0
    %1343 = vmatprep.subr.mxu0 0.0
    %1344 = vmatpush1.msra.mxu0 0.0
    %1345 = vmatprep.subr.mxu0 0.0
    %1346 = vmatpush1.msra.mxu0 0.0
    %1347 = vmatprep.subr.mxu0 0.0
    %1348 = vmatpush1.msra.mxu0 0.0
    %1349 = vmatprep.subr.mxu0 0.0
    %1350 = vmatpush1.msra.mxu0 0.0
    %1351 = vmatprep.subr.mxu0 0.0
    %1352 = vmatpush1.msra.mxu0 0.0
    %1353 = vmatprep.subr.mxu0 0.0
    %1354 = vmatpush1.msra.mxu0 0.0
    %1355 = vmatprep.subr.mxu0 0.0
    %1356 = vmatpush1.msra.mxu0 0.0
    %1357 = vmatprep.subr.mxu0 0.0
    %1358 = vmatpush1.msra.mxu0 0.0
    %1359 = vmatprep.subr.mxu0 0.0
    %1360 = vmatpush1.msra.mxu0 0.0
    %1361 = vmatprep.subr.mxu0 0.0
    %1362 = vmatpush1.msra.mxu0 0.0
    %1363 = vmatprep.subr.mxu0 0.0
    %1364 = vmatpush1.msra.mxu0 0.0
    %1365 = vmatprep.subr.mxu0 0.0
    %1366 = vmatpush1.msra.mxu0 0.0
    %1367 = vmatprep.subr.mxu0 0.0
    %1368 = vmatpush1.msra.mxu0 0.0
    %1369 = vmatprep.subr.mxu0 0.0
    %1370 = vmatpush1.msra.mxu0 0.0
    %1371 = vmatprep.subr.mxu0 0.0
    %1372 = vmatpush1.msra.mxu0 0.0
    %1373 = vmatprep.subr.mxu0 0.0
    %1374 = vmatpush1.msra.mxu0 0.0
    %1375 = vmatprep.subr.mxu0 0.0
    %1376 = vmatpush1.msra.mxu0 0.0
    %1377 = vmatprep.subr.mxu0 0.0
    %1378 = vmatpush1.msra.mxu0 0.0
    %1379 = vmatprep.subr.mxu0 0.0
    %1380 = vmatpush1.msra.mxu0 0.0
    %1381 = vmatprep.subr.mxu0 0.0
    %1382 = vmatpush1.msra.mxu0 0.0
    %1383 = vmatprep.mubr.f32.mxu0 0.0
    %1384 = vmatmul.mubr.f32.gmra.mrb[0].mxu0 %v1314
    %v1385 = vpop.f32.mrb[0].mxu0
    %v1386 = vadd.f32 %v1312, %v1385
    %v1387 = vpop.f32.mrb[0].mxu0
    %1388 = vmatprep.mubr.f32.mxu0 0.0
    %1389 = vmatmul.mubr.f32.gmra.mrb[0].mxu0 %v1317
    %v1390 = vpop.f32.mrb[0].mxu0
    %v1391 = vadd.f32 %v1312, %v1390
    %v1392 = vpop.f32.mrb[0].mxu0
    %1393 = vdwg.mxu0
    %1398 = vrot.lane.b32.xlu0 %v1305, 96
    %v1399 = vpop.permute.xlu0 %1398
    %1400 = vrot.lane.b32.xlu0 %v1306, 96
    %v1401 = vpop.permute.xlu0 %1400
    %1402 = vrot.lane.b32.xlu0 %v1307, 96
    %v1403 = vpop.permute.xlu0 %1402
    %1404 = vrot.lane.b32.xlu0 %v1308, 96
    %v1405 = vpop.permute.xlu0 %1404
    %v1411 = vsel %vm105, %v75, 0
    %v1414 = vsel %vm105, %v76, 0
    %1416 = vmatprep.subr.mxu0 0.0
    %1417 = vmatpush1.msra.mxu0 %v1399
    %1418 = vmatprep.subr.mxu0 0.0
    %1419 = vmatpush1.msra.mxu0 %v1401
    %1420 = vmatprep.subr.mxu0 0.0
    %1421 = vmatpush1.msra.mxu0 %v1403
    %1422 = vmatprep.subr.mxu0 0.0
    %1423 = vmatpush1.msra.mxu0 %v1405
    %1424 = vmatprep.subr.mxu0 0.0
    %1425 = vmatpush1.msra.mxu0 0.0
    %1426 = vmatprep.subr.mxu0 0.0
    %1427 = vmatpush1.msra.mxu0 0.0
    %1428 = vmatprep.subr.mxu0 0.0
    %1429 = vmatpush1.msra.mxu0 0.0
    %1430 = vmatprep.subr.mxu0 0.0
    %1431 = vmatpush1.msra.mxu0 0.0
    %1432 = vmatprep.subr.mxu0 0.0
    %1433 = vmatpush1.msra.mxu0 0.0
    %1434 = vmatprep.subr.mxu0 0.0
    %1435 = vmatpush1.msra.mxu0 0.0
    %1436 = vmatprep.subr.mxu0 0.0
    %1437 = vmatpush1.msra.mxu0 0.0
    %1438 = vmatprep.subr.mxu0 0.0
    %1439 = vmatpush1.msra.mxu0 0.0
    %1440 = vmatprep.subr.mxu0 0.0
    %1441 = vmatpush1.msra.mxu0 0.0
    %1442 = vmatprep.subr.mxu0 0.0
    %1443 = vmatpush1.msra.mxu0 0.0
    %1444 = vmatprep.subr.mxu0 0.0
    %1445 = vmatpush1.msra.mxu0 0.0
    %1446 = vmatprep.subr.mxu0 0.0
    %1447 = vmatpush1.msra.mxu0 0.0
    %1448 = vmatprep.subr.mxu0 0.0
    %1449 = vmatpush1.msra.mxu0 0.0
    %1450 = vmatprep.subr.mxu0 0.0
    %1451 = vmatpush1.msra.mxu0 0.0
    %1452 = vmatprep.subr.mxu0 0.0
    %1453 = vmatpush1.msra.mxu0 0.0
    %1454 = vmatprep.subr.mxu0 0.0
    %1455 = vmatpush1.msra.mxu0 0.0
    %1456 = vmatprep.subr.mxu0 0.0
    %1457 = vmatpush1.msra.mxu0 0.0
    %1458 = vmatprep.subr.mxu0 0.0
    %1459 = vmatpush1.msra.mxu0 0.0
    %1460 = vmatprep.subr.mxu0 0.0
    %1461 = vmatpush1.msra.mxu0 0.0
    %1462 = vmatprep.subr.mxu0 0.0
    %1463 = vmatpush1.msra.mxu0 0.0
    %1464 = vmatprep.subr.mxu0 0.0
    %1465 = vmatpush1.msra.mxu0 0.0
    %1466 = vmatprep.subr.mxu0 0.0
    %1467 = vmatpush1.msra.mxu0 0.0
    %1468 = vmatprep.subr.mxu0 0.0
    %1469 = vmatpush1.msra.mxu0 0.0
    %1470 = vmatprep.subr.mxu0 0.0
    %1471 = vmatpush1.msra.mxu0 0.0
    %1472 = vmatprep.subr.mxu0 0.0
    %1473 = vmatpush1.msra.mxu0 0.0
    %1474 = vmatprep.subr.mxu0 0.0
    %1475 = vmatpush1.msra.mxu0 0.0
    %1476 = vmatprep.subr.mxu0 0.0
    %1477 = vmatpush1.msra.mxu0 0.0
    %1478 = vmatprep.subr.mxu0 0.0
    %1479 = vmatpush1.msra.mxu0 0.0
    %1480 = vmatprep.mubr.f32.mxu0 0.0
    %1481 = vmatmul.mubr.f32.gmra.mrb[0].mxu0 %v1411
    %v1482 = vpop.f32.mrb[0].mxu0
    %v1483 = vadd.f32 0.0, %v1482
    %v1484 = vpop.f32.mrb[0].mxu0
    %1485 = vmatprep.mubr.f32.mxu0 0.0
    %1486 = vmatmul.mubr.f32.gmra.mrb[0].mxu0 %v1414
    %v1487 = vpop.f32.mrb[0].mxu0
    %v1488 = vadd.f32 0.0, %v1487
    %v1489 = vpop.f32.mrb[0].mxu0
    %1490 = vdwg.mxu0
    %v1491 = vlaneseq
    %v1492 = vshrl.u32 %v1491, 7
    %v1493 = vsub.s32 5, %v1492
    %v1494 = vrot.slane %v77, %v1493
    %v1495 = vadd.f32 %v1483, %v1494
    %v1496 = vadd.f32 %v1488, %v1494
    %v1497 = vlaneseq
    %v1498 = vshrl.u32 %v1497, 7
    %v1499 = vsub.s32 6, %v1498
    %v1500 = vrot.slane %v77, %v1499
    %1502 = vrot.lane.b32.xlu0 %v1500, 32
    %v1503 = vpop.permute.xlu0 %1502
    %v1505 = vadd.f32 %v1483, %v1503
    %v1506 = vadd.f32 %v1488, %v1503
    %1509 = vrot.lane.b32.xlu0 %v1386, 120
    %v1510 = vpop.permute.xlu0 %1509
    %1511 = vrot.lane.b32.xlu0 %v1391, 120
    %v1512 = vpop.permute.xlu0 %1511
    %1515 = vrot.lane.b32.xlu0 %v1386, 112
    %v1516 = vpop.permute.xlu0 %1515
    %1517 = vrot.lane.b32.xlu0 %v1391, 112
    %v1518 = vpop.permute.xlu0 %1517
    %1521 = vrot.lane.b32.xlu0 %v1386, 104
    %v1522 = vpop.permute.xlu0 %1521
    %1523 = vrot.lane.b32.xlu0 %v1391, 104
    %v1524 = vpop.permute.xlu0 %1523
    %v1527 = vmul.f32 %v1386, 0.35355338
    %v1528 = vmul.f32 %v1391, 0.35355338
    %v1529 = vmul.f32 %v1510, 0.35355338
    %v1530 = vmul.f32 %v1512, 0.35355338
    %v1531 = vmul.f32 %v1516, 0.35355338
    %v1532 = vmul.f32 %v1518, 0.35355338
    %v1533 = vmul.f32 %v1522, 0.35355338
    %v1534 = vmul.f32 %v1524, 0.35355338
    %1537 = vrot.lane.b32.xlu0 %v1495, 120
    %v1538 = vpop.permute.xlu0 %1537
    %1539 = vrot.lane.b32.xlu0 %v1496, 120
    %v1540 = vpop.permute.xlu0 %1539
    %1541 = vrot.lane.b32.xlu0 %v1495, 112
    %v1542 = vpop.permute.xlu0 %1541
    %1543 = vrot.lane.b32.xlu0 %v1496, 112
    %v1544 = vpop.permute.xlu0 %1543
    %1545 = vrot.lane.b32.xlu0 %v1495, 104
    %v1546 = vpop.permute.xlu0 %1545
    %1547 = vrot.lane.b32.xlu0 %v1496, 104
    %v1548 = vpop.permute.xlu0 %1547
    %1551 = vrot.lane.b32.xlu0 %v1505, 120
    %v1552 = vpop.permute.xlu0 %1551
    %1553 = vrot.lane.b32.xlu0 %v1506, 120
    %v1554 = vpop.permute.xlu0 %1553
    %1555 = vrot.lane.b32.xlu0 %v1505, 112
    %v1556 = vpop.permute.xlu0 %1555
    %1557 = vrot.lane.b32.xlu0 %v1506, 112
    %v1558 = vpop.permute.xlu0 %1557
    %1559 = vrot.lane.b32.xlu0 %v1505, 104
    %v1560 = vpop.permute.xlu0 %1559
    %1561 = vrot.lane.b32.xlu0 %v1506, 104
    %v1562 = vpop.permute.xlu0 %1561
    %v1564 = vsel %vm350, %v1527, 0
    %v1567 = vsel %vm350, %v1528, 0
    %v1569 = vsel %vm350, %v1495, 0
    %v1571 = vsel %vm350, %v1496, 0
    %1573 = vmatprep.subr.mxu0 0.0
    %1574 = vmatpush1.xpose.msra.mxu0 %v1569
    %1575 = vmatprep.subr.mxu0 0.0
    %1576 = vmatpush1.xpose.msra.mxu0 %v1571
    %1577 = vmatprep.subr.mxu0 0.0
    %1578 = vmatpush1.xpose.msra.mxu0 0.0
    %1579 = vmatprep.subr.mxu0 0.0
    %1580 = vmatpush1.xpose.msra.mxu0 0.0
    %1581 = vmatprep.subr.mxu0 0.0
    %1582 = vmatpush1.xpose.msra.mxu0 0.0
    %1583 = vmatprep.subr.mxu0 0.0
    %1584 = vmatpush1.xpose.msra.mxu0 0.0
    %1585 = vmatprep.subr.mxu0 0.0
    %1586 = vmatpush1.xpose.msra.mxu0 0.0
    %1587 = vmatprep.subr.mxu0 0.0
    %1588 = vmatpush1.xpose.msra.mxu0 0.0
    %1589 = vmatprep.subr.mxu0 0.0
    %1590 = vmatpush1.xpose.msra.mxu0 0.0
    %1591 = vmatprep.subr.mxu0 0.0
    %1592 = vmatpush1.xpose.msra.mxu0 0.0
    %1593 = vmatprep.subr.mxu0 0.0
    %1594 = vmatpush1.xpose.msra.mxu0 0.0
    %1595 = vmatprep.subr.mxu0 0.0
    %1596 = vmatpush1.xpose.msra.mxu0 0.0
    %1597 = vmatprep.subr.mxu0 0.0
    %1598 = vmatpush1.xpose.msra.mxu0 0.0
    %1599 = vmatprep.subr.mxu0 0.0
    %1600 = vmatpush1.xpose.msra.mxu0 0.0
    %1601 = vmatprep.subr.mxu0 0.0
    %1602 = vmatpush1.xpose.msra.mxu0 0.0
    %1603 = vmatprep.subr.mxu0 0.0
    %1604 = vmatpush1.xpose.msra.mxu0 0.0
    %1605 = vmatprep.subr.mxu0 0.0
    %1606 = vmatpush1.xpose.msra.mxu0 0.0
    %1607 = vmatprep.subr.mxu0 0.0
    %1608 = vmatpush1.xpose.msra.mxu0 0.0
    %1609 = vmatprep.subr.mxu0 0.0
    %1610 = vmatpush1.xpose.msra.mxu0 0.0
    %1611 = vmatprep.subr.mxu0 0.0
    %1612 = vmatpush1.xpose.msra.mxu0 0.0
    %1613 = vmatprep.subr.mxu0 0.0
    %1614 = vmatpush1.xpose.msra.mxu0 0.0
    %1615 = vmatprep.subr.mxu0 0.0
    %1616 = vmatpush1.xpose.msra.mxu0 0.0
    %1617 = vmatprep.subr.mxu0 0.0
    %1618 = vmatpush1.xpose.msra.mxu0 0.0
    %1619 = vmatprep.subr.mxu0 0.0
    %1620 = vmatpush1.xpose.msra.mxu0 0.0
    %1621 = vmatprep.subr.mxu0 0.0
    %1622 = vmatpush1.xpose.msra.mxu0 0.0
    %1623 = vmatprep.subr.mxu0 0.0
    %1624 = vmatpush1.xpose.msra.mxu0 0.0
    %1625 = vmatprep.subr.mxu0 0.0
    %1626 = vmatpush1.xpose.msra.mxu0 0.0
    %1627 = vmatprep.subr.mxu0 0.0
    %1628 = vmatpush1.xpose.msra.mxu0 0.0
    %1629 = vmatprep.subr.mxu0 0.0
    %1630 = vmatpush1.xpose.msra.mxu0 0.0
    %1631 = vmatprep.subr.mxu0 0.0
    %1632 = vmatpush1.xpose.msra.mxu0 0.0
    %1633 = vmatprep.subr.mxu0 0.0
    %1634 = vmatpush1.xpose.msra.mxu0 0.0
    %1635 = vmatprep.subr.mxu0 0.0
    %1636 = vmatpush1.xpose.msra.mxu0 0.0
    %1637 = vmatprep.mubr.f32.mxu0 0.0
    %1638 = vmatmul.mubr.f32.gmra.mrb[0].mxu0 %v1564
    %v1639 = vpop.f32.mrb[0].mxu0
    %v1640 = vadd.f32 %v95, %v1639
    %v1641 = vpop.f32.mrb[0].mxu0
    %1642 = vmatprep.mubr.f32.mxu0 0.0
    %1643 = vmatmul.mubr.f32.gmra.mrb[0].mxu0 %v1567
    %v1644 = vpop.f32.mrb[0].mxu0
    %v1645 = vadd.f32 %v96, %v1644
    %v1646 = vpop.f32.mrb[0].mxu0
    %1647 = vdwg.mxu0
    %v1649 = vsel %vm350, %v1529, 0
    %v1652 = vsel %vm350, %v1530, 0
    %v1654 = vsel %vm350, %v1538, 0
    %v1656 = vsel %vm350, %v1540, 0
    %1658 = vmatprep.subr.mxu0 0.0
    %1659 = vmatpush1.xpose.msra.mxu0 %v1654
    %1660 = vmatprep.subr.mxu0 0.0
    %1661 = vmatpush1.xpose.msra.mxu0 %v1656
    %1662 = vmatprep.subr.mxu0 0.0
    %1663 = vmatpush1.xpose.msra.mxu0 0.0
    %1664 = vmatprep.subr.mxu0 0.0
    %1665 = vmatpush1.xpose.msra.mxu0 0.0
    %1666 = vmatprep.subr.mxu0 0.0
    %1667 = vmatpush1.xpose.msra.mxu0 0.0
    %1668 = vmatprep.subr.mxu0 0.0
    %1669 = vmatpush1.xpose.msra.mxu0 0.0
    %1670 = vmatprep.subr.mxu0 0.0
    %1671 = vmatpush1.xpose.msra.mxu0 0.0
    %1672 = vmatprep.subr.mxu0 0.0
    %1673 = vmatpush1.xpose.msra.mxu0 0.0
    %1674 = vmatprep.subr.mxu0 0.0
    %1675 = vmatpush1.xpose.msra.mxu0 0.0
    %1676 = vmatprep.subr.mxu0 0.0
    %1677 = vmatpush1.xpose.msra.mxu0 0.0
    %1678 = vmatprep.subr.mxu0 0.0
    %1679 = vmatpush1.xpose.msra.mxu0 0.0
    %1680 = vmatprep.subr.mxu0 0.0
    %1681 = vmatpush1.xpose.msra.mxu0 0.0
    %1682 = vmatprep.subr.mxu0 0.0
    %1683 = vmatpush1.xpose.msra.mxu0 0.0
    %1684 = vmatprep.subr.mxu0 0.0
    %1685 = vmatpush1.xpose.msra.mxu0 0.0
    %1686 = vmatprep.subr.mxu0 0.0
    %1687 = vmatpush1.xpose.msra.mxu0 0.0
    %1688 = vmatprep.subr.mxu0 0.0
    %1689 = vmatpush1.xpose.msra.mxu0 0.0
    %1690 = vmatprep.subr.mxu0 0.0
    %1691 = vmatpush1.xpose.msra.mxu0 0.0
    %1692 = vmatprep.subr.mxu0 0.0
    %1693 = vmatpush1.xpose.msra.mxu0 0.0
    %1694 = vmatprep.subr.mxu0 0.0
    %1695 = vmatpush1.xpose.msra.mxu0 0.0
    %1696 = vmatprep.subr.mxu0 0.0
    %1697 = vmatpush1.xpose.msra.mxu0 0.0
    %1698 = vmatprep.subr.mxu0 0.0
    %1699 = vmatpush1.xpose.msra.mxu0 0.0
    %1700 = vmatprep.subr.mxu0 0.0
    %1701 = vmatpush1.xpose.msra.mxu0 0.0
    %1702 = vmatprep.subr.mxu0 0.0
    %1703 = vmatpush1.xpose.msra.mxu0 0.0
    %1704 = vmatprep.subr.mxu0 0.0
    %1705 = vmatpush1.xpose.msra.mxu0 0.0
    %1706 = vmatprep.subr.mxu0 0.0
    %1707 = vmatpush1.xpose.msra.mxu0 0.0
    %1708 = vmatprep.subr.mxu0 0.0
    %1709 = vmatpush1.xpose.msra.mxu0 0.0
    %1710 = vmatprep.subr.mxu0 0.0
    %1711 = vmatpush1.xpose.msra.mxu0 0.0
    %1712 = vmatprep.subr.mxu0 0.0
    %1713 = vmatpush1.xpose.msra.mxu0 0.0
    %1714 = vmatprep.subr.mxu0 0.0
    %1715 = vmatpush1.xpose.msra.mxu0 0.0
    %1716 = vmatprep.subr.mxu0 0.0
    %1717 = vmatpush1.xpose.msra.mxu0 0.0
    %1718 = vmatprep.subr.mxu0 0.0
    %1719 = vmatpush1.xpose.msra.mxu0 0.0
    %1720 = vmatprep.subr.mxu0 0.0
    %1721 = vmatpush1.xpose.msra.mxu0 0.0
    %1722 = vmatprep.mubr.f32.mxu0 0.0
    %1723 = vmatmul.mubr.f32.gmra.mrb[0].mxu0 %v1649
    %v1724 = vpop.f32.mrb[0].mxu0
    %v1725 = vadd.f32 %v95, %v1724
    %v1726 = vpop.f32.mrb[0].mxu0
    %1727 = vmatprep.mubr.f32.mxu0 0.0
    %1728 = vmatmul.mubr.f32.gmra.mrb[0].mxu0 %v1652
    %v1729 = vpop.f32.mrb[0].mxu0
    %v1730 = vadd.f32 %v96, %v1729
    %v1731 = vpop.f32.mrb[0].mxu0
    %1732 = vdwg.mxu0
    %v1734 = vsel %vm350, %v1531, 0
    %v1737 = vsel %vm350, %v1532, 0
    %v1739 = vsel %vm350, %v1542, 0
    %v1741 = vsel %vm350, %v1544, 0
    %1743 = vmatprep.subr.mxu0 0.0
    %1744 = vmatpush1.xpose.msra.mxu0 %v1739
    %1745 = vmatprep.subr.mxu0 0.0
    %1746 = vmatpush1.xpose.msra.mxu0 %v1741
    %1747 = vmatprep.subr.mxu0 0.0
    %1748 = vmatpush1.xpose.msra.mxu0 0.0
    %1749 = vmatprep.subr.mxu0 0.0
    %1750 = vmatpush1.xpose.msra.mxu0 0.0
    %1751 = vmatprep.subr.mxu0 0.0
    %1752 = vmatpush1.xpose.msra.mxu0 0.0
    %1753 = vmatprep.subr.mxu0 0.0
    %1754 = vmatpush1.xpose.msra.mxu0 0.0
    %1755 = vmatprep.subr.mxu0 0.0
    %1756 = vmatpush1.xpose.msra.mxu0 0.0
    %1757 = vmatprep.subr.mxu0 0.0
    %1758 = vmatpush1.xpose.msra.mxu0 0.0
    %1759 = vmatprep.subr.mxu0 0.0
    %1760 = vmatpush1.xpose.msra.mxu0 0.0
    %1761 = vmatprep.subr.mxu0 0.0
    %1762 = vmatpush1.xpose.msra.mxu0 0.0
    %1763 = vmatprep.subr.mxu0 0.0
    %1764 = vmatpush1.xpose.msra.mxu0 0.0
    %1765 = vmatprep.subr.mxu0 0.0
    %1766 = vmatpush1.xpose.msra.mxu0 0.0
    %1767 = vmatprep.subr.mxu0 0.0
    %1768 = vmatpush1.xpose.msra.mxu0 0.0
    %1769 = vmatprep.subr.mxu0 0.0
    %1770 = vmatpush1.xpose.msra.mxu0 0.0
    %1771 = vmatprep.subr.mxu0 0.0
    %1772 = vmatpush1.xpose.msra.mxu0 0.0
    %1773 = vmatprep.subr.mxu0 0.0
    %1774 = vmatpush1.xpose.msra.mxu0 0.0
    %1775 = vmatprep.subr.mxu0 0.0
    %1776 = vmatpush1.xpose.msra.mxu0 0.0
    %1777 = vmatprep.subr.mxu0 0.0
    %1778 = vmatpush1.xpose.msra.mxu0 0.0
    %1779 = vmatprep.subr.mxu0 0.0
    %1780 = vmatpush1.xpose.msra.mxu0 0.0
    %1781 = vmatprep.subr.mxu0 0.0
    %1782 = vmatpush1.xpose.msra.mxu0 0.0
    %1783 = vmatprep.subr.mxu0 0.0
    %1784 = vmatpush1.xpose.msra.mxu0 0.0
    %1785 = vmatprep.subr.mxu0 0.0
    %1786 = vmatpush1.xpose.msra.mxu0 0.0
    %1787 = vmatprep.subr.mxu0 0.0
    %1788 = vmatpush1.xpose.msra.mxu0 0.0
    %1789 = vmatprep.subr.mxu0 0.0
    %1790 = vmatpush1.xpose.msra.mxu0 0.0
    %1791 = vmatprep.subr.mxu0 0.0
    %1792 = vmatpush1.xpose.msra.mxu0 0.0
    %1793 = vmatprep.subr.mxu0 0.0
    %1794 = vmatpush1.xpose.msra.mxu0 0.0
    %1795 = vmatprep.subr.mxu0 0.0
    %1796 = vmatpush1.xpose.msra.mxu0 0.0
    %1797 = vmatprep.subr.mxu0 0.0
    %1798 = vmatpush1.xpose.msra.mxu0 0.0
    %1799 = vmatprep.subr.mxu0 0.0
    %1800 = vmatpush1.xpose.msra.mxu0 0.0
    %1801 = vmatprep.subr.mxu0 0.0
    %1802 = vmatpush1.xpose.msra.mxu0 0.0
    %1803 = vmatprep.subr.mxu0 0.0
    %1804 = vmatpush1.xpose.msra.mxu0 0.0
    %1805 = vmatprep.subr.mxu0 0.0
    %1806 = vmatpush1.xpose.msra.mxu0 0.0
    %1807 = vmatprep.mubr.f32.mxu0 0.0
    %1808 = vmatmul.mubr.f32.gmra.mrb[0].mxu0 %v1734
    %v1809 = vpop.f32.mrb[0].mxu0
    %v1810 = vadd.f32 %v95, %v1809
    %v1811 = vpop.f32.mrb[0].mxu0
    %1812 = vmatprep.mubr.f32.mxu0 0.0
    %1813 = vmatmul.mubr.f32.gmra.mrb[0].mxu0 %v1737
    %v1814 = vpop.f32.mrb[0].mxu0
    %v1815 = vadd.f32 %v96, %v1814
    %v1816 = vpop.f32.mrb[0].mxu0
    %1817 = vdwg.mxu0
    %v1819 = vsel %vm350, %v1533, 0
    %v1822 = vsel %vm350, %v1534, 0
    %v1824 = vsel %vm350, %v1546, 0
    %v1826 = vsel %vm350, %v1548, 0
    %1828 = vmatprep.subr.mxu0 0.0
    %1829 = vmatpush1.xpose.msra.mxu0 %v1824
    %1830 = vmatprep.subr.mxu0 0.0
    %1831 = vmatpush1.xpose.msra.mxu0 %v1826
    %1832 = vmatprep.subr.mxu0 0.0
    %1833 = vmatpush1.xpose.msra.mxu0 0.0
    %1834 = vmatprep.subr.mxu0 0.0
    %1835 = vmatpush1.xpose.msra.mxu0 0.0
    %1836 = vmatprep.subr.mxu0 0.0
    %1837 = vmatpush1.xpose.msra.mxu0 0.0
    %1838 = vmatprep.subr.mxu0 0.0
    %1839 = vmatpush1.xpose.msra.mxu0 0.0
    %1840 = vmatprep.subr.mxu0 0.0
    %1841 = vmatpush1.xpose.msra.mxu0 0.0
    %1842 = vmatprep.subr.mxu0 0.0
    %1843 = vmatpush1.xpose.msra.mxu0 0.0
    %1844 = vmatprep.subr.mxu0 0.0
    %1845 = vmatpush1.xpose.msra.mxu0 0.0
    %1846 = vmatprep.subr.mxu0 0.0
    %1847 = vmatpush1.xpose.msra.mxu0 0.0
    %1848 = vmatprep.subr.mxu0 0.0
    %1849 = vmatpush1.xpose.msra.mxu0 0.0
    %1850 = vmatprep.subr.mxu0 0.0
    %1851 = vmatpush1.xpose.msra.mxu0 0.0
    %1852 = vmatprep.subr.mxu0 0.0
    %1853 = vmatpush1.xpose.msra.mxu0 0.0
    %1854 = vmatprep.subr.mxu0 0.0
    %1855 = vmatpush1.xpose.msra.mxu0 0.0
    %1856 = vmatprep.subr.mxu0 0.0
    %1857 = vmatpush1.xpose.msra.mxu0 0.0
    %1858 = vmatprep.subr.mxu0 0.0
    %1859 = vmatpush1.xpose.msra.mxu0 0.0
    %1860 = vmatprep.subr.mxu0 0.0
    %1861 = vmatpush1.xpose.msra.mxu0 0.0
    %1862 = vmatprep.subr.mxu0 0.0
    %1863 = vmatpush1.xpose.msra.mxu0 0.0
    %1864 = vmatprep.subr.mxu0 0.0
    %1865 = vmatpush1.xpose.msra.mxu0 0.0
    %1866 = vmatprep.subr.mxu0 0.0
    %1867 = vmatpush1.xpose.msra.mxu0 0.0
    %1868 = vmatprep.subr.mxu0 0.0
    %1869 = vmatpush1.xpose.msra.mxu0 0.0
    %1870 = vmatprep.subr.mxu0 0.0
    %1871 = vmatpush1.xpose.msra.mxu0 0.0
    %1872 = vmatprep.subr.mxu0 0.0
    %1873 = vmatpush1.xpose.msra.mxu0 0.0
    %1874 = vmatprep.subr.mxu0 0.0
    %1875 = vmatpush1.xpose.msra.mxu0 0.0
    %1876 = vmatprep.subr.mxu0 0.0
    %1877 = vmatpush1.xpose.msra.mxu0 0.0
    %1878 = vmatprep.subr.mxu0 0.0
    %1879 = vmatpush1.xpose.msra.mxu0 0.0
    %1880 = vmatprep.subr.mxu0 0.0
    %1881 = vmatpush1.xpose.msra.mxu0 0.0
    %1882 = vmatprep.subr.mxu0 0.0
    %1883 = vmatpush1.xpose.msra.mxu0 0.0
    %1884 = vmatprep.subr.mxu0 0.0
    %1885 = vmatpush1.xpose.msra.mxu0 0.0
    %1886 = vmatprep.subr.mxu0 0.0
    %1887 = vmatpush1.xpose.msra.mxu0 0.0
    %1888 = vmatprep.subr.mxu0 0.0
    %1889 = vmatpush1.xpose.msra.mxu0 0.0
    %1890 = vmatprep.subr.mxu0 0.0
    %1891 = vmatpush1.xpose.msra.mxu0 0.0
    %1892 = vmatprep.mubr.f32.mxu0 0.0
    %1893 = vmatmul.mubr.f32.gmra.mrb[0].mxu0 %v1819
    %v1894 = vpop.f32.mrb[0].mxu0
    %v1895 = vadd.f32 %v95, %v1894
    %v1896 = vpop.f32.mrb[0].mxu0
    %1897 = vmatprep.mubr.f32.mxu0 0.0
    %1898 = vmatmul.mubr.f32.gmra.mrb[0].mxu0 %v1822
    %v1899 = vpop.f32.mrb[0].mxu0
    %v1900 = vadd.f32 %v96, %v1899
    %v1901 = vpop.f32.mrb[0].mxu0
    %1902 = vdwg.mxu0
    %v1903 = vsel %vm691, %v1640, -inf
    %1904 = vmax.xlane.f32.xlu0 %v1903
    %v1905 = vpop.xlane.xlu0 %1904
    %v1906 = vsel %vm691, %v1645, -inf
    %1907 = vmax.xlane.f32.xlu0 %v1906
    %v1908 = vpop.xlane.xlu0 %1907
    %v1909 = vsel %vm691, %v1725, -inf
    %1910 = vmax.xlane.f32.xlu0 %v1909
    %v1911 = vpop.xlane.xlu0 %1910
    %v1912 = vsel %vm691, %v1730, -inf
    %1913 = vmax.xlane.f32.xlu0 %v1912
    %v1914 = vpop.xlane.xlu0 %1913
    %v1915 = vsel %vm691, %v1810, -inf
    %1916 = vmax.xlane.f32.xlu0 %v1915
    %v1917 = vpop.xlane.xlu0 %1916
    %v1918 = vsel %vm691, %v1815, -inf
    %1919 = vmax.xlane.f32.xlu0 %v1918
    %v1920 = vpop.xlane.xlu0 %1919
    %v1921 = vsel %vm691, %v1895, -inf
    %1922 = vmax.xlane.f32.xlu0 %v1921
    %v1923 = vpop.xlane.xlu0 %1922
    %v1924 = vsel %vm691, %v1900, -inf
    %1925 = vmax.xlane.f32.xlu0 %v1924
    %v1926 = vpop.xlane.xlu0 %1925
    %v1927 = vsub.f32 %v1640, %v1905
    %v1928 = vsub.f32 %v1645, %v1908
    %v1929 = vsub.f32 %v1725, %v1911
    %v1930 = vsub.f32 %v1730, %v1914
    %v1931 = vsub.f32 %v1810, %v1917
    %v1932 = vsub.f32 %v1815, %v1920
    %v1933 = vsub.f32 %v1895, %v1923
    %v1934 = vsub.f32 %v1900, %v1926
    %v1935 = vmul.f32 %v1927, 1.442695
    %v1936 = vpow.pop %v1935
    %v1937 = vmul.f32 %v1928, 1.442695
    %v1938 = vpow.pop %v1937
    %v1939 = vmul.f32 %v1929, 1.442695
    %v1940 = vpow.pop %v1939
    %v1941 = vmul.f32 %v1930, 1.442695
    %v1942 = vpow.pop %v1941
    %v1943 = vmul.f32 %v1931, 1.442695
    %v1944 = vpow.pop %v1943
    %v1945 = vmul.f32 %v1932, 1.442695
    %v1946 = vpow.pop %v1945
    %v1947 = vmul.f32 %v1933, 1.442695
    %v1948 = vpow.pop %v1947
    %v1949 = vmul.f32 %v1934, 1.442695
    %v1950 = vpow.pop %v1949
    %v1951 = vsel %vm691, %v1936, 0.0
    %1952 = vadd.xlane.f32.xlu0 %v1951
    %v1953 = vpop.xlane.xlu0 %1952
    %v1954 = vsel %vm691, %v1938, 0.0
    %1955 = vadd.xlane.f32.xlu0 %v1954
    %v1956 = vpop.xlane.xlu0 %1955
    %v1957 = vsel %vm691, %v1940, 0.0
    %1958 = vadd.xlane.f32.xlu0 %v1957
    %v1959 = vpop.xlane.xlu0 %1958
    %v1960 = vsel %vm691, %v1942, 0.0
    %1961 = vadd.xlane.f32.xlu0 %v1960
    %v1962 = vpop.xlane.xlu0 %1961
    %v1963 = vsel %vm691, %v1944, 0.0
    %1964 = vadd.xlane.f32.xlu0 %v1963
    %v1965 = vpop.xlane.xlu0 %1964
    %v1966 = vsel %vm691, %v1946, 0.0
    %1967 = vadd.xlane.f32.xlu0 %v1966
    %v1968 = vpop.xlane.xlu0 %1967
    %v1969 = vsel %vm691, %v1948, 0.0
    %1970 = vadd.xlane.f32.xlu0 %v1969
    %v1971 = vpop.xlane.xlu0 %1970
    %v1972 = vsel %vm691, %v1950, 0.0
    %1973 = vadd.xlane.f32.xlu0 %v1972
    %v1974 = vpop.xlane.xlu0 %1973
    %v1975 = vrcp.pop %v1953
    %v1976 = vrcp.pop %v1956
    %v1977 = vrcp.pop %v1959
    %v1978 = vrcp.pop %v1962
    %v1979 = vrcp.pop %v1965
    %v1980 = vrcp.pop %v1968
    %v1981 = vrcp.pop %v1971
    %v1982 = vrcp.pop %v1974
    %v1983 = vmul.f32 %v1936, %v1975
    %v1984 = vmul.f32 %v1938, %v1976
    %v1985 = vmul.f32 %v1940, %v1977
    %v1986 = vmul.f32 %v1942, %v1978
    %v1987 = vmul.f32 %v1944, %v1979
    %v1988 = vmul.f32 %v1946, %v1980
    %v1989 = vmul.f32 %v1948, %v1981
    %v1990 = vmul.f32 %v1950, %v1982
    %1991 = vrot.lane.b32.xlu0 %v1505, 96
    %v1992 = vpop.permute.xlu0 %1991
    %1993 = vrot.lane.b32.xlu0 %v1506, 96
    %v1994 = vpop.permute.xlu0 %1993
    %v1998 = vsel %vm691, %v1983, 0
    %v2001 = vsel %vm691, %v1984, 0
    %2003 = vmatprep.subr.mxu0 0.0
    %2004 = vmatpush1.msra.mxu0 %v1992
    %2005 = vmatprep.subr.mxu0 0.0
    %2006 = vmatpush1.msra.mxu0 %v1994
    %2007 = vmatprep.subr.mxu0 0.0
    %2008 = vmatpush1.msra.mxu0 0.0
    %2009 = vmatprep.subr.mxu0 0.0
    %2010 = vmatpush1.msra.mxu0 0.0
    %2011 = vmatprep.subr.mxu0 0.0
    %2012 = vmatpush1.msra.mxu0 0.0
    %2013 = vmatprep.subr.mxu0 0.0
    %2014 = vmatpush1.msra.mxu0 0.0
    %2015 = vmatprep.subr.mxu0 0.0
    %2016 = vmatpush1.msra.mxu0 0.0
    %2017 = vmatprep.subr.mxu0 0.0
    %2018 = vmatpush1.msra.mxu0 0.0
    %2019 = vmatprep.subr.mxu0 0.0
    %2020 = vmatpush1.msra.mxu0 0.0
    %2021 = vmatprep.subr.mxu0 0.0
    %2022 = vmatpush1.msra.mxu0 0.0
    %2023 = vmatprep.subr.mxu0 0.0
    %2024 = vmatpush1.msra.mxu0 0.0
    %2025 = vmatprep.subr.mxu0 0.0
    %2026 = vmatpush1.msra.mxu0 0.0
    %2027 = vmatprep.subr.mxu0 0.0
    %2028 = vmatpush1.msra.mxu0 0.0
    %2029 = vmatprep.subr.mxu0 0.0
    %2030 = vmatpush1.msra.mxu0 0.0
    %2031 = vmatprep.subr.mxu0 0.0
    %2032 = vmatpush1.msra.mxu0 0.0
    %2033 = vmatprep.subr.mxu0 0.0
    %2034 = vmatpush1.msra.mxu0 0.0
    %2035 = vmatprep.subr.mxu0 0.0
    %2036 = vmatpush1.msra.mxu0 0.0
    %2037 = vmatprep.subr.mxu0 0.0
    %2038 = vmatpush1.msra.mxu0 0.0
    %2039 = vmatprep.subr.mxu0 0.0
    %2040 = vmatpush1.msra.mxu0 0.0
    %2041 = vmatprep.subr.mxu0 0.0
    %2042 = vmatpush1.msra.mxu0 0.0
    %2043 = vmatprep.subr.mxu0 0.0
    %2044 = vmatpush1.msra.mxu0 0.0
    %2045 = vmatprep.subr.mxu0 0.0
    %2046 = vmatpush1.msra.mxu0 0.0
    %2047 = vmatprep.subr.mxu0 0.0
    %2048 = vmatpush1.msra.mxu0 0.0
    %2049 = vmatprep.subr.mxu0 0.0
    %2050 = vmatpush1.msra.mxu0 0.0
    %2051 = vmatprep.subr.mxu0 0.0
    %2052 = vmatpush1.msra.mxu0 0.0
    %2053 = vmatprep.subr.mxu0 0.0
    %2054 = vmatpush1.msra.mxu0 0.0
    %2055 = vmatprep.subr.mxu0 0.0
    %2056 = vmatpush1.msra.mxu0 0.0
    %2057 = vmatprep.subr.mxu0 0.0
    %2058 = vmatpush1.msra.mxu0 0.0
    %2059 = vmatprep.subr.mxu0 0.0
    %2060 = vmatpush1.msra.mxu0 0.0
    %2061 = vmatprep.subr.mxu0 0.0
    %2062 = vmatpush1.msra.mxu0 0.0
    %2063 = vmatprep.subr.mxu0 0.0
    %2064 = vmatpush1.msra.mxu0 0.0
    %2065 = vmatprep.subr.mxu0 0.0
    %2066 = vmatpush1.msra.mxu0 0.0
    %2067 = vmatprep.mubr.f32.mxu0 0.0
    %2068 = vmatmul.mubr.f32.gmra.mrb[0].mxu0 %v1998
    %v2069 = vpop.f32.mrb[0].mxu0
    %v2070 = vadd.f32 0.0, %v2069
    %v2071 = vpop.f32.mrb[0].mxu0
    %2072 = vmatprep.mubr.f32.mxu0 0.0
    %2073 = vmatmul.mubr.f32.gmra.mrb[0].mxu0 %v2001
    %v2074 = vpop.f32.mrb[0].mxu0
    %v2075 = vadd.f32 0.0, %v2074
    %v2076 = vpop.f32.mrb[0].mxu0
    %2077 = vdwg.mxu0
    %2078 = vrot.lane.b32.xlu0 %v1552, 96
    %v2079 = vpop.permute.xlu0 %2078
    %2080 = vrot.lane.b32.xlu0 %v1554, 96
    %v2081 = vpop.permute.xlu0 %2080
    %v2085 = vsel %vm691, %v1985, 0
    %v2088 = vsel %vm691, %v1986, 0
    %2090 = vmatprep.subr.mxu0 0.0
    %2091 = vmatpush1.msra.mxu0 %v2079
    %2092 = vmatprep.subr.mxu0 0.0
    %2093 = vmatpush1.msra.mxu0 %v2081
    %2094 = vmatprep.subr.mxu0 0.0
    %2095 = vmatpush1.msra.mxu0 0.0
    %2096 = vmatprep.subr.mxu0 0.0
    %2097 = vmatpush1.msra.mxu0 0.0
    %2098 = vmatprep.subr.mxu0 0.0
    %2099 = vmatpush1.msra.mxu0 0.0
    %2100 = vmatprep.subr.mxu0 0.0
    %2101 = vmatpush1.msra.mxu0 0.0
    %2102 = vmatprep.subr.mxu0 0.0
    %2103 = vmatpush1.msra.mxu0 0.0
    %2104 = vmatprep.subr.mxu0 0.0
    %2105 = vmatpush1.msra.mxu0 0.0
    %2106 = vmatprep.subr.mxu0 0.0
    %2107 = vmatpush1.msra.mxu0 0.0
    %2108 = vmatprep.subr.mxu0 0.0
    %2109 = vmatpush1.msra.mxu0 0.0
    %2110 = vmatprep.subr.mxu0 0.0
    %2111 = vmatpush1.msra.mxu0 0.0
    %2112 = vmatprep.subr.mxu0 0.0
    %2113 = vmatpush1.msra.mxu0 0.0
    %2114 = vmatprep.subr.mxu0 0.0
    %2115 = vmatpush1.msra.mxu0 0.0
    %2116 = vmatprep.subr.mxu0 0.0
    %2117 = vmatpush1.msra.mxu0 0.0
    %2118 = vmatprep.subr.mxu0 0.0
    %2119 = vmatpush1.msra.mxu0 0.0
    %2120 = vmatprep.subr.mxu0 0.0
    %2121 = vmatpush1.msra.mxu0 0.0
    %2122 = vmatprep.subr.mxu0 0.0
    %2123 = vmatpush1.msra.mxu0 0.0
    %2124 = vmatprep.subr.mxu0 0.0
    %2125 = vmatpush1.msra.mxu0 0.0
    %2126 = vmatprep.subr.mxu0 0.0
    %2127 = vmatpush1.msra.mxu0 0.0
    %2128 = vmatprep.subr.mxu0 0.0
    %2129 = vmatpush1.msra.mxu0 0.0
    %2130 = vmatprep.subr.mxu0 0.0
    %2131 = vmatpush1.msra.mxu0 0.0
    %2132 = vmatprep.subr.mxu0 0.0
    %2133 = vmatpush1.msra.mxu0 0.0
    %2134 = vmatprep.subr.mxu0 0.0
    %2135 = vmatpush1.msra.mxu0 0.0
    %2136 = vmatprep.subr.mxu0 0.0
    %2137 = vmatpush1.msra.mxu0 0.0
    %2138 = vmatprep.subr.mxu0 0.0
    %2139 = vmatpush1.msra.mxu0 0.0
    %2140 = vmatprep.subr.mxu0 0.0
    %2141 = vmatpush1.msra.mxu0 0.0
    %2142 = vmatprep.subr.mxu0 0.0
    %2143 = vmatpush1.msra.mxu0 0.0
    %2144 = vmatprep.subr.mxu0 0.0
    %2145 = vmatpush1.msra.mxu0 0.0
    %2146 = vmatprep.subr.mxu0 0.0
    %2147 = vmatpush1.msra.mxu0 0.0
    %2148 = vmatprep.subr.mxu0 0.0
    %2149 = vmatpush1.msra.mxu0 0.0
    %2150 = vmatprep.subr.mxu0 0.0
    %2151 = vmatpush1.msra.mxu0 0.0
    %2152 = vmatprep.subr.mxu0 0.0
    %2153 = vmatpush1.msra.mxu0 0.0
    %2154 = vmatprep.mubr.f32.mxu0 0.0
    %2155 = vmatmul.mubr.f32.gmra.mrb[0].mxu0 %v2085
    %v2156 = vpop.f32.mrb[0].mxu0
    %v2157 = vadd.f32 0.0, %v2156
    %v2158 = vpop.f32.mrb[0].mxu0
    %2159 = vmatprep.mubr.f32.mxu0 0.0
    %2160 = vmatmul.mubr.f32.gmra.mrb[0].mxu0 %v2088
    %v2161 = vpop.f32.mrb[0].mxu0
    %v2162 = vadd.f32 0.0, %v2161
    %v2163 = vpop.f32.mrb[0].mxu0
    %2164 = vdwg.mxu0
    %2165 = vrot.lane.b32.xlu0 %v1556, 96
    %v2166 = vpop.permute.xlu0 %2165
    %2167 = vrot.lane.b32.xlu0 %v1558, 96
    %v2168 = vpop.permute.xlu0 %2167
    %v2172 = vsel %vm691, %v1987, 0
    %v2175 = vsel %vm691, %v1988, 0
    %2177 = vmatprep.subr.mxu0 0.0
    %2178 = vmatpush1.msra.mxu0 %v2166
    %2179 = vmatprep.subr.mxu0 0.0
    %2180 = vmatpush1.msra.mxu0 %v2168
    %2181 = vmatprep.subr.mxu0 0.0
    %2182 = vmatpush1.msra.mxu0 0.0
    %2183 = vmatprep.subr.mxu0 0.0
    %2184 = vmatpush1.msra.mxu0 0.0
    %2185 = vmatprep.subr.mxu0 0.0
    %2186 = vmatpush1.msra.mxu0 0.0
    %2187 = vmatprep.subr.mxu0 0.0
    %2188 = vmatpush1.msra.mxu0 0.0
    %2189 = vmatprep.subr.mxu0 0.0
    %2190 = vmatpush1.msra.mxu0 0.0
    %2191 = vmatprep.subr.mxu0 0.0
    %2192 = vmatpush1.msra.mxu0 0.0
    %2193 = vmatprep.subr.mxu0 0.0
    %2194 = vmatpush1.msra.mxu0 0.0
    %2195 = vmatprep.subr.mxu0 0.0
    %2196 = vmatpush1.msra.mxu0 0.0
    %2197 = vmatprep.subr.mxu0 0.0
    %2198 = vmatpush1.msra.mxu0 0.0
    %2199 = vmatprep.subr.mxu0 0.0
    %2200 = vmatpush1.msra.mxu0 0.0
    %2201 = vmatprep.subr.mxu0 0.0
    %2202 = vmatpush1.msra.mxu0 0.0
    %2203 = vmatprep.subr.mxu0 0.0
    %2204 = vmatpush1.msra.mxu0 0.0
    %2205 = vmatprep.subr.mxu0 0.0
    %2206 = vmatpush1.msra.mxu0 0.0
    %2207 = vmatprep.subr.mxu0 0.0
    %2208 = vmatpush1.msra.mxu0 0.0
    %2209 = vmatprep.subr.mxu0 0.0
    %2210 = vmatpush1.msra.mxu0 0.0
    %2211 = vmatprep.subr.mxu0 0.0
    %2212 = vmatpush1.msra.mxu0 0.0
    %2213 = vmatprep.subr.mxu0 0.0
    %2214 = vmatpush1.msra.mxu0 0.0
    %2215 = vmatprep.subr.mxu0 0.0
    %2216 = vmatpush1.msra.mxu0 0.0
    %2217 = vmatprep.subr.mxu0 0.0
    %2218 = vmatpush1.msra.mxu0 0.0
    %2219 = vmatprep.subr.mxu0 0.0
    %2220 = vmatpush1.msra.mxu0 0.0
    %2221 = vmatprep.subr.mxu0 0.0
    %2222 = vmatpush1.msra.mxu0 0.0
    %2223 = vmatprep.subr.mxu0 0.0
    %2224 = vmatpush1.msra.mxu0 0.0
    %2225 = vmatprep.subr.mxu0 0.0
    %2226 = vmatpush1.msra.mxu0 0.0
    %2227 = vmatprep.subr.mxu0 0.0
    %2228 = vmatpush1.msra.mxu0 0.0
    %2229 = vmatprep.subr.mxu0 0.0
    %2230 = vmatpush1.msra.mxu0 0.0
    %2231 = vmatprep.subr.mxu0 0.0
    %2232 = vmatpush1.msra.mxu0 0.0
    %2233 = vmatprep.subr.mxu0 0.0
    %2234 = vmatpush1.msra.mxu0 0.0
    %2235 = vmatprep.subr.mxu0 0.0
    %2236 = vmatpush1.msra.mxu0 0.0
    %2237 = vmatprep.subr.mxu0 0.0
    %2238 = vmatpush1.msra.mxu0 0.0
    %2239 = vmatprep.subr.mxu0 0.0
    %2240 = vmatpush1.msra.mxu0 0.0
    %2241 = vmatprep.mubr.f32.mxu0 0.0
    %2242 = vmatmul.mubr.f32.gmra.mrb[0].mxu0 %v2172
    %v2243 = vpop.f32.mrb[0].mxu0
    %v2244 = vadd.f32 0.0, %v2243
    %v2245 = vpop.f32.mrb[0].mxu0
    %2246 = vmatprep.mubr.f32.mxu0 0.0
    %2247 = vmatmul.mubr.f32.gmra.mrb[0].mxu0 %v2175
    %v2248 = vpop.f32.mrb[0].mxu0
    %v2249 = vadd.f32 0.0, %v2248
    %v2250 = vpop.f32.mrb[0].mxu0
    %2251 = vdwg.mxu0
    %2252 = vrot.lane.b32.xlu0 %v1560, 96
    %v2253 = vpop.permute.xlu0 %2252
    %2254 = vrot.lane.b32.xlu0 %v1562, 96
    %v2255 = vpop.permute.xlu0 %2254
    %v2259 = vsel %vm691, %v1989, 0
    %v2262 = vsel %vm691, %v1990, 0
    %2264 = vmatprep.subr.mxu0 0.0
    %2265 = vmatpush1.msra.mxu0 %v2253
    %2266 = vmatprep.subr.mxu0 0.0
    %2267 = vmatpush1.msra.mxu0 %v2255
    %2268 = vmatprep.subr.mxu0 0.0
    %2269 = vmatpush1.msra.mxu0 0.0
    %2270 = vmatprep.subr.mxu0 0.0
    %2271 = vmatpush1.msra.mxu0 0.0
    %2272 = vmatprep.subr.mxu0 0.0
    %2273 = vmatpush1.msra.mxu0 0.0
    %2274 = vmatprep.subr.mxu0 0.0
    %2275 = vmatpush1.msra.mxu0 0.0
    %2276 = vmatprep.subr.mxu0 0.0
    %2277 = vmatpush1.msra.mxu0 0.0
    %2278 = vmatprep.subr.mxu0 0.0
    %2279 = vmatpush1.msra.mxu0 0.0
    %2280 = vmatprep.subr.mxu0 0.0
    %2281 = vmatpush1.msra.mxu0 0.0
    %2282 = vmatprep.subr.mxu0 0.0
    %2283 = vmatpush1.msra.mxu0 0.0
    %2284 = vmatprep.subr.mxu0 0.0
    %2285 = vmatpush1.msra.mxu0 0.0
    %2286 = vmatprep.subr.mxu0 0.0
    %2287 = vmatpush1.msra.mxu0 0.0
    %2288 = vmatprep.subr.mxu0 0.0
    %2289 = vmatpush1.msra.mxu0 0.0
    %2290 = vmatprep.subr.mxu0 0.0
    %2291 = vmatpush1.msra.mxu0 0.0
    %2292 = vmatprep.subr.mxu0 0.0
    %2293 = vmatpush1.msra.mxu0 0.0
    %2294 = vmatprep.subr.mxu0 0.0
    %2295 = vmatpush1.msra.mxu0 0.0
    %2296 = vmatprep.subr.mxu0 0.0
    %2297 = vmatpush1.msra.mxu0 0.0
    %2298 = vmatprep.subr.mxu0 0.0
    %2299 = vmatpush1.msra.mxu0 0.0
    %2300 = vmatprep.subr.mxu0 0.0
    %2301 = vmatpush1.msra.mxu0 0.0
    %2302 = vmatprep.subr.mxu0 0.0
    %2303 = vmatpush1.msra.mxu0 0.0
    %2304 = vmatprep.subr.mxu0 0.0
    %2305 = vmatpush1.msra.mxu0 0.0
    %2306 = vmatprep.subr.mxu0 0.0
    %2307 = vmatpush1.msra.mxu0 0.0
    %2308 = vmatprep.subr.mxu0 0.0
    %2309 = vmatpush1.msra.mxu0 0.0
    %2310 = vmatprep.subr.mxu0 0.0
    %2311 = vmatpush1.msra.mxu0 0.0
    %2312 = vmatprep.subr.mxu0 0.0
    %2313 = vmatpush1.msra.mxu0 0.0
    %2314 = vmatprep.subr.mxu0 0.0
    %2315 = vmatpush1.msra.mxu0 0.0
    %2316 = vmatprep.subr.mxu0 0.0
    %2317 = vmatpush1.msra.mxu0 0.0
    %2318 = vmatprep.subr.mxu0 0.0
    %2319 = vmatpush1.msra.mxu0 0.0
    %2320 = vmatprep.subr.mxu0 0.0
    %2321 = vmatpush1.msra.mxu0 0.0
    %2322 = vmatprep.subr.mxu0 0.0
    %2323 = vmatpush1.msra.mxu0 0.0
    %2324 = vmatprep.subr.mxu0 0.0
    %2325 = vmatpush1.msra.mxu0 0.0
    %2326 = vmatprep.subr.mxu0 0.0
    %2327 = vmatpush1.msra.mxu0 0.0
    %2328 = vmatprep.mubr.f32.mxu0 0.0
    %2329 = vmatmul.mubr.f32.gmra.mrb[0].mxu0 %v2259
    %v2330 = vpop.f32.mrb[0].mxu0
    %v2331 = vadd.f32 0.0, %v2330
    %v2332 = vpop.f32.mrb[0].mxu0
    %2333 = vmatprep.mubr.f32.mxu0 0.0
    %2334 = vmatmul.mubr.f32.gmra.mrb[0].mxu0 %v2262
    %v2335 = vpop.f32.mrb[0].mxu0
    %v2336 = vadd.f32 0.0, %v2335
    %v2337 = vpop.f32.mrb[0].mxu0
    %2338 = vdwg.mxu0
    %2341 = vrot.lane.b32.xlu0 %v2157, 8
    %v2342 = vpop.permute.xlu0 %2341
    %2343 = vrot.lane.b32.xlu0 %v2162, 8
    %v2344 = vpop.permute.xlu0 %2343
    %2349 = vrot.lane.b32.xlu0 %v2244, 16
    %v2350 = vpop.permute.xlu0 %2349
    %2351 = vrot.lane.b32.xlu0 %v2249, 16
    %v2352 = vpop.permute.xlu0 %2351
    %2357 = vrot.lane.b32.xlu0 %v2331, 24
    %v2358 = vpop.permute.xlu0 %2357
    %2359 = vrot.lane.b32.xlu0 %v2336, 24
    %v2360 = vpop.permute.xlu0 %2359
    %v2363 = vsel %vm350, %v2070, %v2342
    %v2364 = vsel %vm350, %v2075, %v2344
    %v2365 = vsel %vm691, %v2363, %v2350
    %v2366 = vsel %vm691, %v2364, %v2352
    %v2367 = vsel %vm1156, %v2365, %v2358
    %v2368 = vsel %vm1156, %v2366, %v2360
    %v2369 = vld [vmem:[#allocation7 + $0x8] sm:$0xff]
    %v2370 = vld [vmem:[#allocation7 + $0x20] sm:$0xff]
    %v2371 = vld [vmem:[#allocation7 + $0x38] sm:$0xff]
    %v2372 = vld [vmem:[#allocation7 + $0x50] sm:$0xff]
    %v2373 = vlaneseq
    %v2374 = vshrl.u32 %v2373, 7
    %v2375 = vsub.s32 7, %v2374
    %v2376 = vrot.slane %v77, %v2375
    %2381 = vrot.lane.b32.xlu0 %v2369, 32
    %v2382 = vpop.permute.xlu0 %2381
    %2383 = vrot.lane.b32.xlu0 %v2370, 32
    %v2384 = vpop.permute.xlu0 %2383
    %2385 = vrot.lane.b32.xlu0 %v2371, 32
    %v2386 = vpop.permute.xlu0 %2385
    %2387 = vrot.lane.b32.xlu0 %v2372, 32
    %v2388 = vpop.permute.xlu0 %2387
    %v2394 = vsel %vm105, %v2367, 0
    %v2397 = vsel %vm105, %v2368, 0
    %2399 = vmatprep.subr.mxu0 0.0
    %2400 = vmatpush1.msra.mxu0 %v2382
    %2401 = vmatprep.subr.mxu0 0.0
    %2402 = vmatpush1.msra.mxu0 %v2384
    %2403 = vmatprep.subr.mxu0 0.0
    %2404 = vmatpush1.msra.mxu0 %v2386
    %2405 = vmatprep.subr.mxu0 0.0
    %2406 = vmatpush1.msra.mxu0 %v2388
    %2407 = vmatprep.subr.mxu0 0.0
    %2408 = vmatpush1.msra.mxu0 0.0
    %2409 = vmatprep.subr.mxu0 0.0
    %2410 = vmatpush1.msra.mxu0 0.0
    %2411 = vmatprep.subr.mxu0 0.0
    %2412 = vmatpush1.msra.mxu0 0.0
    %2413 = vmatprep.subr.mxu0 0.0
    %2414 = vmatpush1.msra.mxu0 0.0
    %2415 = vmatprep.subr.mxu0 0.0
    %2416 = vmatpush1.msra.mxu0 0.0
    %2417 = vmatprep.subr.mxu0 0.0
    %2418 = vmatpush1.msra.mxu0 0.0
    %2419 = vmatprep.subr.mxu0 0.0
    %2420 = vmatpush1.msra.mxu0 0.0
    %2421 = vmatprep.subr.mxu0 0.0
    %2422 = vmatpush1.msra.mxu0 0.0
    %2423 = vmatprep.subr.mxu0 0.0
    %2424 = vmatpush1.msra.mxu0 0.0
    %2425 = vmatprep.subr.mxu0 0.0
    %2426 = vmatpush1.msra.mxu0 0.0
    %2427 = vmatprep.subr.mxu0 0.0
    %2428 = vmatpush1.msra.mxu0 0.0
    %2429 = vmatprep.subr.mxu0 0.0
    %2430 = vmatpush1.msra.mxu0 0.0
    %2431 = vmatprep.subr.mxu0 0.0
    %2432 = vmatpush1.msra.mxu0 0.0
    %2433 = vmatprep.subr.mxu0 0.0
    %2434 = vmatpush1.msra.mxu0 0.0
    %2435 = vmatprep.subr.mxu0 0.0
    %2436 = vmatpush1.msra.mxu0 0.0
    %2437 = vmatprep.subr.mxu0 0.0
    %2438 = vmatpush1.msra.mxu0 0.0
    %2439 = vmatprep.subr.mxu0 0.0
    %2440 = vmatpush1.msra.mxu0 0.0
    %2441 = vmatprep.subr.mxu0 0.0
    %2442 = vmatpush1.msra.mxu0 0.0
    %2443 = vmatprep.subr.mxu0 0.0
    %2444 = vmatpush1.msra.mxu0 0.0
    %2445 = vmatprep.subr.mxu0 0.0
    %2446 = vmatpush1.msra.mxu0 0.0
    %2447 = vmatprep.subr.mxu0 0.0
    %2448 = vmatpush1.msra.mxu0 0.0
    %2449 = vmatprep.subr.mxu0 0.0
    %2450 = vmatpush1.msra.mxu0 0.0
    %2451 = vmatprep.subr.mxu0 0.0
    %2452 = vmatpush1.msra.mxu0 0.0
    %2453 = vmatprep.subr.mxu0 0.0
    %2454 = vmatpush1.msra.mxu0 0.0
    %2455 = vmatprep.subr.mxu0 0.0
    %2456 = vmatpush1.msra.mxu0 0.0
    %2457 = vmatprep.subr.mxu0 0.0
    %2458 = vmatpush1.msra.mxu0 0.0
    %2459 = vmatprep.subr.mxu0 0.0
    %2460 = vmatpush1.msra.mxu0 0.0
    %2461 = vmatprep.subr.mxu0 0.0
    %2462 = vmatpush1.msra.mxu0 0.0
    %2463 = vmatprep.mubr.f32.mxu0 0.0
    %2464 = vmatmul.mubr.f32.gmra.mrb[0].mxu0 %v2394
    %v2465 = vpop.f32.mrb[0].mxu0
    %v2466 = vadd.f32 %v2376, %v2465
    %v2467 = vpop.f32.mrb[0].mxu0
    %2468 = vmatprep.mubr.f32.mxu0 0.0
    %2469 = vmatmul.mubr.f32.gmra.mrb[0].mxu0 %v2397
    %v2470 = vpop.f32.mrb[0].mxu0
    %v2471 = vadd.f32 %v2376, %v2470
    %v2472 = vpop.f32.mrb[0].mxu0
    %2473 = vdwg.mxu0
    %v2474 = vadd.f32 %v2466, %v1303
    %v2475 = vadd.f32 %v2471, %v1304
    %v2476 = vsel %vm105, %v2474, 0.0
    %2477 = vadd.xlane.f32.xlu0 %v2476
    %v2478 = vpop.xlane.xlu0 %2477
    %v2479 = vsel %vm105, %v2475, 0.0
    %2480 = vadd.xlane.f32.xlu0 %v2479
    %v2481 = vpop.xlane.xlu0 %2480
    %v2482 = vmul.f32 %v2478, %v1272
    %v2483 = vmul.f32 %v2481, %v1272
    %v2484 = vsub.f32 %v2474, %v2482
    %v2485 = vsub.f32 %v2475, %v2483
    %v2486 = vmul.f32 %v2484, %v2484
    %v2487 = vmul.f32 %v2485, %v2485
    %v2488 = vsel %vm105, %v2486, 0.0
    %2489 = vadd.xlane.f32.xlu0 %v2488
    %v2490 = vpop.xlane.xlu0 %2489
    %v2491 = vsel %vm105, %v2487, 0.0
    %2492 = vadd.xlane.f32.xlu0 %v2491
    %v2493 = vpop.xlane.xlu0 %2492
    %v2494 = vmul.f32 %v2490, %v1272
    %v2495 = vmul.f32 %v2493, %v1272
    %v2496 = vadd.f32 %v2494, 1e-05
    %v2497 = vadd.f32 %v2495, 1e-05
    %v2498 = vrsqrt.pop %v2496
    %v2499 = vrsqrt.pop %v2497
    %v2500 = vmul.f32 %v2484, %v2498
    %v2501 = vmul.f32 %v2485, %v2499
    %v2502 = vlaneseq
    %v2503 = vshrl.u32 %v2502, 7
    %v2504 = vsub.s32 4, %v2503
    %v2505 = vrot.slane %v78, %v2504
    %v2506 = vmul.f32 %v2500, %v2505
    %v2507 = vmul.f32 %v2501, %v2505
    %v2508 = vlaneseq
    %v2509 = vshrl.u32 %v2508, 7
    %v2510 = vsub.s32 5, %v2509
    %v2511 = vrot.slane %v78, %v2510
    %v2512 = vadd.f32 %v2506, %v2511
    %v2513 = vadd.f32 %v2507, %v2511
    %v2514 = vld [vmem:[#allocation7 + $0x10] sm:$0xff]
    %v2515 = vld [vmem:[#allocation7 + $0x28] sm:$0xff]
    %v2516 = vld [vmem:[#allocation7 + $0x40] sm:$0xff]
    %v2517 = vld [vmem:[#allocation7 + $0x58] sm:$0xff]
    %v2518 = vlaneseq
    %v2519 = vshrl.u32 %v2518, 7
    %v2520 = vsub.s32 0, %v2519
    %v2521 = vrot.slane %v78, %v2520
    %v2523 = vsel %vm105, %v2512, 0
    %v2526 = vsel %vm105, %v2513, 0
    %2528 = vmatprep.subr.mxu0 0.0
    %2529 = vmatpush1.msra.mxu0 %v2514
    %2530 = vmatprep.subr.mxu0 0.0
    %2531 = vmatpush1.msra.mxu0 %v2515
    %2532 = vmatprep.subr.mxu0 0.0
    %2533 = vmatpush1.msra.mxu0 %v2516
    %2534 = vmatprep.subr.mxu0 0.0
    %2535 = vmatpush1.msra.mxu0 %v2517
    %2536 = vmatprep.subr.mxu0 0.0
    %2537 = vmatpush1.msra.mxu0 0.0
    %2538 = vmatprep.subr.mxu0 0.0
    %2539 = vmatpush1.msra.mxu0 0.0
    %2540 = vmatprep.subr.mxu0 0.0
    %2541 = vmatpush1.msra.mxu0 0.0
    %2542 = vmatprep.subr.mxu0 0.0
    %2543 = vmatpush1.msra.mxu0 0.0
    %2544 = vmatprep.subr.mxu0 0.0
    %2545 = vmatpush1.msra.mxu0 0.0
    %2546 = vmatprep.subr.mxu0 0.0
    %2547 = vmatpush1.msra.mxu0 0.0
    %2548 = vmatprep.subr.mxu0 0.0
    %2549 = vmatpush1.msra.mxu0 0.0
    %2550 = vmatprep.subr.mxu0 0.0
    %2551 = vmatpush1.msra.mxu0 0.0
    %2552 = vmatprep.subr.mxu0 0.0
    %2553 = vmatpush1.msra.mxu0 0.0
    %2554 = vmatprep.subr.mxu0 0.0
    %2555 = vmatpush1.msra.mxu0 0.0
    %2556 = vmatprep.subr.mxu0 0.0
    %2557 = vmatpush1.msra.mxu0 0.0
    %2558 = vmatprep.subr.mxu0 0.0
    %2559 = vmatpush1.msra.mxu0 0.0
    %2560 = vmatprep.subr.mxu0 0.0
    %2561 = vmatpush1.msra.mxu0 0.0
    %2562 = vmatprep.subr.mxu0 0.0
    %2563 = vmatpush1.msra.mxu0 0.0
    %2564 = vmatprep.subr.mxu0 0.0
    %2565 = vmatpush1.msra.mxu0 0.0
    %2566 = vmatprep.subr.mxu0 0.0
    %2567 = vmatpush1.msra.mxu0 0.0
    %2568 = vmatprep.subr.mxu0 0.0
    %2569 = vmatpush1.msra.mxu0 0.0
    %2570 = vmatprep.subr.mxu0 0.0
    %2571 = vmatpush1.msra.mxu0 0.0
    %2572 = vmatprep.subr.mxu0 0.0
    %2573 = vmatpush1.msra.mxu0 0.0
    %2574 = vmatprep.subr.mxu0 0.0
    %2575 = vmatpush1.msra.mxu0 0.0
    %2576 = vmatprep.subr.mxu0 0.0
    %2577 = vmatpush1.msra.mxu0 0.0
    %2578 = vmatprep.subr.mxu0 0.0
    %2579 = vmatpush1.msra.mxu0 0.0
    %2580 = vmatprep.subr.mxu0 0.0
    %2581 = vmatpush1.msra.mxu0 0.0
    %2582 = vmatprep.subr.mxu0 0.0
    %2583 = vmatpush1.msra.mxu0 0.0
    %2584 = vmatprep.subr.mxu0 0.0
    %2585 = vmatpush1.msra.mxu0 0.0
    %2586 = vmatprep.subr.mxu0 0.0
    %2587 = vmatpush1.msra.mxu0 0.0
    %2588 = vmatprep.subr.mxu0 0.0
    %2589 = vmatpush1.msra.mxu0 0.0
    %2590 = vmatprep.subr.mxu0 0.0
    %2591 = vmatpush1.msra.mxu0 0.0
    %2592 = vmatprep.mubr.f32.mxu0 0.0
    %2593 = vmatmul.mubr.f32.gmra.mrb[0].mxu0 %v2523
    %v2594 = vpop.f32.mrb[0].mxu0
    %v2595 = vadd.f32 %v2521, %v2594
    %v2596 = vpop.f32.mrb[0].mxu0
    %2597 = vmatprep.mubr.f32.mxu0 0.0
    %2598 = vmatmul.mubr.f32.gmra.mrb[0].mxu0 %v2526
    %v2599 = vpop.f32.mrb[0].mxu0
    %v2600 = vadd.f32 %v2521, %v2599
    %v2601 = vpop.f32.mrb[0].mxu0
    %2602 = vdwg.mxu0
    %v2603 = vmax.f32 %v2595, 0.0
    %v2604 = vmax.f32 %v2600, 0.0
    %v2605 = vlaneseq
    %v2606 = vshrl.u32 %v2605, 7
    %v2607 = vsub.s32 1, %v2606
    %v2608 = vrot.slane %v78, %v2607
    %2613 = vrot.lane.b32.xlu0 %v2514, 96
    %v2614 = vpop.permute.xlu0 %2613
    %2615 = vrot.lane.b32.xlu0 %v2515, 96
    %v2616 = vpop.permute.xlu0 %2615
    %2617 = vrot.lane.b32.xlu0 %v2516, 96
    %v2618 = vpop.permute.xlu0 %2617
    %2619 = vrot.lane.b32.xlu0 %v2517, 96
    %v2620 = vpop.permute.xlu0 %2619
    %v2626 = vsel %vm105, %v2603, 0
    %v2629 = vsel %vm105, %v2604, 0
    %2631 = vmatprep.subr.mxu0 0.0
    %2632 = vmatpush1.msra.mxu0 %v2614
    %2633 = vmatprep.subr.mxu0 0.0
    %2634 = vmatpush1.msra.mxu0 %v2616
    %2635 = vmatprep.subr.mxu0 0.0
    %2636 = vmatpush1.msra.mxu0 %v2618
    %2637 = vmatprep.subr.mxu0 0.0
    %2638 = vmatpush1.msra.mxu0 %v2620
    %2639 = vmatprep.subr.mxu0 0.0
    %2640 = vmatpush1.msra.mxu0 0.0
    %2641 = vmatprep.subr.mxu0 0.0
    %2642 = vmatpush1.msra.mxu0 0.0
    %2643 = vmatprep.subr.mxu0 0.0
    %2644 = vmatpush1.msra.mxu0 0.0
    %2645 = vmatprep.subr.mxu0 0.0
    %2646 = vmatpush1.msra.mxu0 0.0
    %2647 = vmatprep.subr.mxu0 0.0
    %2648 = vmatpush1.msra.mxu0 0.0
    %2649 = vmatprep.subr.mxu0 0.0
    %2650 = vmatpush1.msra.mxu0 0.0
    %2651 = vmatprep.subr.mxu0 0.0
    %2652 = vmatpush1.msra.mxu0 0.0
    %2653 = vmatprep.subr.mxu0 0.0
    %2654 = vmatpush1.msra.mxu0 0.0
    %2655 = vmatprep.subr.mxu0 0.0
    %2656 = vmatpush1.msra.mxu0 0.0
    %2657 = vmatprep.subr.mxu0 0.0
    %2658 = vmatpush1.msra.mxu0 0.0
    %2659 = vmatprep.subr.mxu0 0.0
    %2660 = vmatpush1.msra.mxu0 0.0
    %2661 = vmatprep.subr.mxu0 0.0
    %2662 = vmatpush1.msra.mxu0 0.0
    %2663 = vmatprep.subr.mxu0 0.0
    %2664 = vmatpush1.msra.mxu0 0.0
    %2665 = vmatprep.subr.mxu0 0.0
    %2666 = vmatpush1.msra.mxu0 0.0
    %2667 = vmatprep.subr.mxu0 0.0
    %2668 = vmatpush1.msra.mxu0 0.0
    %2669 = vmatprep.subr.mxu0 0.0
    %2670 = vmatpush1.msra.mxu0 0.0
    %2671 = vmatprep.subr.mxu0 0.0
    %2672 = vmatpush1.msra.mxu0 0.0
    %2673 = vmatprep.subr.mxu0 0.0
    %2674 = vmatpush1.msra.mxu0 0.0
    %2675 = vmatprep.subr.mxu0 0.0
    %2676 = vmatpush1.msra.mxu0 0.0
    %2677 = vmatprep.subr.mxu0 0.0
    %2678 = vmatpush1.msra.mxu0 0.0
    %2679 = vmatprep.subr.mxu0 0.0
    %2680 = vmatpush1.msra.mxu0 0.0
    %2681 = vmatprep.subr.mxu0 0.0
    %2682 = vmatpush1.msra.mxu0 0.0
    %2683 = vmatprep.subr.mxu0 0.0
    %2684 = vmatpush1.msra.mxu0 0.0
    %2685 = vmatprep.subr.mxu0 0.0
    %2686 = vmatpush1.msra.mxu0 0.0
    %2687 = vmatprep.subr.mxu0 0.0
    %2688 = vmatpush1.msra.mxu0 0.0
    %2689 = vmatprep.subr.mxu0 0.0
    %2690 = vmatpush1.msra.mxu0 0.0
    %2691 = vmatprep.subr.mxu0 0.0
    %2692 = vmatpush1.msra.mxu0 0.0
    %2693 = vmatprep.subr.mxu0 0.0
    %2694 = vmatpush1.msra.mxu0 0.0
    %2695 = vmatprep.mubr.f32.mxu0 0.0
    %2696 = vmatmul.mubr.f32.gmra.mrb[0].mxu0 %v2626
    %v2697 = vpop.f32.mrb[0].mxu0
    %v2698 = vadd.f32 %v2608, %v2697
    %v2699 = vpop.f32.mrb[0].mxu0
    %2700 = vmatprep.mubr.f32.mxu0 0.0
    %2701 = vmatmul.mubr.f32.gmra.mrb[0].mxu0 %v2629
    %v2702 = vpop.f32.mrb[0].mxu0
    %v2703 = vadd.f32 %v2608, %v2702
    %v2704 = vpop.f32.mrb[0].mxu0
    %2705 = vdwg.mxu0
    %v2706 = vadd.f32 %v2698, %v2512
    %v2707 = vadd.f32 %v2703, %v2513
    %v2708 = vsel %vm105, %v2706, 0.0
    %2709 = vadd.xlane.f32.xlu0 %v2708
    %v2710 = vpop.xlane.xlu0 %2709
    %v2711 = vsel %vm105, %v2707, 0.0
    %2712 = vadd.xlane.f32.xlu0 %v2711
    %v2713 = vpop.xlane.xlu0 %2712
    %v2714 = vmul.f32 %v2710, %v1272
    %v2715 = vmul.f32 %v2713, %v1272
    %v2716 = vsub.f32 %v2706, %v2714
    %v2717 = vsub.f32 %v2707, %v2715
    %v2718 = vmul.f32 %v2716, %v2716
    %v2719 = vmul.f32 %v2717, %v2717
    %v2720 = vsel %vm105, %v2718, 0.0
    %2721 = vadd.xlane.f32.xlu0 %v2720
    %v2722 = vpop.xlane.xlu0 %2721
    %v2723 = vsel %vm105, %v2719, 0.0
    %2724 = vadd.xlane.f32.xlu0 %v2723
    %v2725 = vpop.xlane.xlu0 %2724
    %v2726 = vmul.f32 %v2722, %v1272
    %v2727 = vmul.f32 %v2725, %v1272
    %v2728 = vadd.f32 %v2726, 1e-05
    %v2729 = vadd.f32 %v2727, 1e-05
    %v2730 = vrsqrt.pop %v2728
    %v2731 = vrsqrt.pop %v2729
    %v2732 = vmul.f32 %v2716, %v2730
    %v2733 = vmul.f32 %v2717, %v2731
    %v2734 = vlaneseq
    %v2735 = vshrl.u32 %v2734, 7
    %v2736 = vsub.s32 6, %v2735
    %v2737 = vrot.slane %v78, %v2736
    %v2738 = vmul.f32 %v2732, %v2737
    %v2739 = vmul.f32 %v2733, %v2737
    %v2740 = vlaneseq
    %v2741 = vshrl.u32 %v2740, 7
    %v2742 = vsub.s32 7, %v2741
    %v2743 = vrot.slane %v78, %v2742
    %v2744 = vadd.f32 %v2738, %v2743
    %v2745 = vadd.f32 %v2739, %v2743
    %2746 = vst.msk [vmem:[#allocation10] sm:$0xff] %vm105, %v2744
    %2747 = vst.msk [vmem:[#allocation10 + $0x8] sm:$0xff] %vm105, %v2745
    // Predicated region
    $region34: #{tpu_custom_call.1} parent=1 // pred_check
      _
    $region35: #{tpu_custom_call.1} parent=1 // pred_check_branch
      %2749 = sbr.rel (0) target = $region37
    $region36: #{tpu_custom_call.1} parent=1 // pred_region
      %s2751 = ssub.s32 256, 256
      %2752 = vsyncadd [#allocation4], %s2751
      %s2753 = sshll.u32 [#allocation10], 4
      %s2754 = int_to_ptr.vmem [resolvable:$true] %s2753
      %2759 = dma.vmem_to_hbm [thread:$0]  %s2754, 256, %s4, [#allocation4], 128, 128, 8
    $region37: #{tpu_custom_call.1} parent=1 // pred_fallthru
      _
    // Predicated region
    $region38: #{tpu_custom_call.1} parent=1 // pred_check
      _
    $region39: #{tpu_custom_call.1} parent=1 // pred_check_branch
      %2761 = sbr.rel (0) target = $region41
    $region40: #{tpu_custom_call.1} parent=1 // pred_region
      %2762 = dma.done [#allocation4], 256
    $region41: #{tpu_custom_call.1} parent=1 // pred_fallthru
      _
    %2763 = vsyncpa [#allocation3], 1
    %2764 = vsyncpa [#allocation6], 1
    %2765 = vsyncpa [#allocation9], 1
    %2766 = vsyncpa [#allocation4], 1

</llo_original>
